<compile_context>
chip_gen: v7x
topology: tpu7x:2x2x1
jax: 0.10.0
libtpu: 0.0.40
codegen_flags: <defaults>
</compile_context>

<pallas_src>
import math

import jax
import jax.numpy as jnp
from jax import lax
from jax.experimental import pallas as pl
from jax.experimental.pallas import tpu as pltpu

# ---- small synthetic sizes consistent with the module's forward ----
BATCH = 2
LAT_C, LAT_H, LAT_W = 4, 16, 16     # noisy_latents: [B, 4, 16, 16]
TEXT_SEQ = 8                        # encoder_hidden_states: [B, 8, CROSS_DIM]
CROSS_DIM = 32                      # cross-attention / token dim
EMBED_DIM = 32                      # image_embeds (W+ latent) dim
NUM_TOKENS = 4                      # tokens produced by w_proj_model
MODEL_DIM = 32                      # surrogate-UNet hidden width
TIME_DIM = 32

HW = LAT_H * LAT_W                  # 256 (lane friendly)
C_PAD = 8                           # latent channels padded 4 -> 8 (sublane aligned)
D_PAD = 128                         # feature dims padded 32 -> 128 (lane dense)
S_TOT = TEXT_SEQ + NUM_TOKENS       # 12 real key/value positions per batch element
S_ALL = BATCH * S_TOT               # 24 key rows total (batch folded, no pad rows)

ATTN_SCALE = 1.0 / math.sqrt(MODEL_DIM)   # real head dim, not the padded one
LN_EPS = 1e-5


# ----------------------------- fused Pallas kernel --------------------------

def _fused_kernel(lat_ref, temb_ref, ehs_ref, plhs_ref,
                  projw_ref, projb_ref, lng_ref, lnb_ref,
                  tw1_ref, tb1_ref, tw2_ref, tb2_ref,
                  cinw_ref, cinb_ref, qw_ref, qb_ref,
                  kvw_ref, kvb_ref, ow_ref, ob_ref,
                  outw_ref, outb_ref,
                  out_ref):
    f32 = jnp.float32
    bf16 = jnp.bfloat16

    # ---- w_proj_model: ONE MXU push for all B*T wplus-token rows -------------
    # plhs_ref is the block-structured LHS built in the wrapper (row (b,t) holds
    # image_embeds[b] in lane chunk t); projw_ref is the per-token-stacked
    # Linear weight [T*EMBED, CROSS]. Result: all B*T token rows at once.
    tok = jnp.dot(plhs_ref[...].astype(bf16), projw_ref[...],
                  preferred_element_type=f32) + projb_ref[...]       # [B*T, CROSS]
    mu = jnp.mean(tok, axis=-1, keepdims=True)                       # LN stats in f32
    xc = tok - mu
    var = jnp.mean(xc * xc, axis=-1, keepdims=True)
    tok = xc * lax.rsqrt(var + LN_EPS) * lng_ref[...] + lnb_ref[...]

    # ---- key/value sequence as a register value (no VMEM scratch) ------------
    # Order = [all text rows ; all wplus rows] so the concat is 8-row aligned;
    # softmax / p@v are order-invariant, batch separation comes from the mask.
    seq = jnp.concatenate([ehs_ref[...], tok], axis=0).astype(bf16)  # [S_ALL, CROSS]

    # ---- time-embedding MLP (Linear -> SiLU -> Linear), batched over B -------
    h_t = jnp.dot(temb_ref[...].astype(bf16), tw1_ref[...],
                  preferred_element_type=f32) + tb1_ref[...]         # [B, D_PAD]
    h_t = h_t * jax.nn.sigmoid(h_t)                                  # SiLU in f32
    t_vec = jnp.dot(h_t.astype(bf16), tw2_ref[...],
                    preferred_element_type=f32) + tb2_ref[...]       # [B, D_PAD]
    cond = cinb_ref[...] + t_vec                                     # [B, D_PAD]

    # ---- 1x1 conv_in (bf16 MXU) + time conditioning, batch folded ------------
    cin_w = cinw_ref[...]
    hfeat = jnp.concatenate(
        [lax.dot_general(lat_ref[b].astype(bf16), cin_w,
                         (((0,), (0,)), ((), ())),
                         preferred_element_type=f32) + cond[b:b + 1, :]
         for b in range(BATCH)], axis=0)                             # [B*HW, D_PAD]

    # ---- Q projection (M = B*HW = 512) and fused K/V projection --------------
    q = jnp.dot(hfeat.astype(bf16), qw_ref[...],
                preferred_element_type=f32) + qb_ref[...]            # [B*HW, D_PAD]
    kv = jnp.dot(seq, kvw_ref[...],
                 preferred_element_type=f32) + kvb_ref[...]          # [S_ALL, 2*D_PAD]
    k = kv[:, :D_PAD].astype(bf16)
    v = kv[:, D_PAD:].astype(bf16)

    # ---- cross attention, scores kept transposed & lane-dense [S_ALL, B*HW] --
    sT = lax.dot_general(k, q.astype(bf16), (((1,), (1,)), ((), ())),
                         preferred_element_type=f32) * ATTN_SCALE    # [24, 512]
    # block-diagonal batch mask: key row r is visible only to query columns of
    # the same batch element (text rows are 0..B*TEXT-1, wplus rows follow).
    key_row = lax.broadcasted_iota(jnp.int32, (S_ALL, 1), 0)
    qry_col = lax.broadcasted_iota(jnp.int32, (1, BATCH * HW), 1)
    key_b = jnp.zeros_like(key_row)
    qry_b = jnp.zeros_like(qry_col)
    for b in range(1, BATCH):
        key_b = key_b + ((key_row >= b * TEXT_SEQ) &
                         (key_row < BATCH * TEXT_SEQ)).astype(jnp.int32)
        key_b = key_b + (key_row >= BATCH * TEXT_SEQ
                         + b * NUM_TOKENS).astype(jnp.int32)
        qry_b = qry_b + (qry_col >= b * HW).astype(jnp.int32)
    sT = sT + jnp.where(key_b == qry_b, 0.0, -1e30)
    sT = sT - jnp.max(sT, axis=0, keepdims=True)                     # stats in f32
    p = jnp.exp(sT)
    p = p * pl.reciprocal(jnp.sum(p, axis=0, keepdims=True), approx=True)
    attn = lax.dot_general(p.astype(bf16), v, (((0,), (0,)), ((), ())),
                           preferred_element_type=f32)               # [B*HW, D_PAD]

    # ---- output projection + residual -----------------------------------------
    attn = jnp.dot(attn.astype(bf16), ow_ref[...],
                   preferred_element_type=f32) + ob_ref[...]
    hfeat = hfeat + attn

    # ---- 1x1 conv_out, lane-dense [C_PAD, B*HW]; unmasked (8, HW) stores -------
    out_all = lax.dot_general(outw_ref[...], hfeat.astype(bf16),
                              (((1,), (1,)), ((), ())),
                              preferred_element_type=f32) + outb_ref[...]
    for b in range(BATCH):
        out_ref[b] = out_all[:, b * HW:(b + 1) * HW].astype(out_ref.dtype)


# ------------------------------- parameters --------------------------------

def _pad2(w, rows, cols):
    out = jnp.zeros((rows, cols), jnp.float32)
    return out.at[:w.shape[0], :w.shape[1]].set(w)


def init_params(key):
    ks = jax.random.split(key, 10)
    s = 0.02
    bf16 = jnp.bfloat16

    def rnd(k, shape):
        return jax.random.normal(k, shape, jnp.float32) * s

    # w_proj_model: Linear(EMBED -> T*CROSS) + LayerNorm(CROSS).
    # Stored per-token-stacked as [T*EMBED, CROSS] so one MXU push against the
    # block-structured LHS produces every (batch, token) row.
    proj_w = rnd(ks[0], (EMBED_DIM, NUM_TOKENS * CROSS_DIM))
    proj_w_stacked = jnp.transpose(
        proj_w.reshape(EMBED_DIM, NUM_TOKENS, CROSS_DIM), (1, 0, 2)
    ).reshape(NUM_TOKENS * EMBED_DIM, CROSS_DIM)
    proj_b = jnp.zeros((NUM_TOKENS, CROSS_DIM), jnp.float32)
    proj_b_tiled = jnp.tile(proj_b, (BATCH, 1))                      # [B*T, CROSS]

    k_w = rnd(ks[5], (CROSS_DIM, MODEL_DIM))
    v_w = rnd(ks[6], (CROSS_DIM, MODEL_DIM))
    kv_w = jnp.concatenate([_pad2(k_w, CROSS_DIM, D_PAD),
                            _pad2(v_w, CROSS_DIM, D_PAD)], axis=1)   # [32, 256]

    conv_out_w = rnd(ks[8], (MODEL_DIM, LAT_C))
    out_w_t = _pad2(conv_out_w.T, C_PAD, D_PAD)                      # [8, 128]

    return {
        "proj_w": proj_w_stacked.astype(bf16),                       # (T*E, CROSS)
        "proj_b": proj_b_tiled,                                      # (B*T, CROSS) f32
        "ln_g": jnp.ones((1, CROSS_DIM), jnp.float32),
        "ln_b": jnp.zeros((1, CROSS_DIM), jnp.float32),
        # surrogate UNet (time MLP + 1x1 conv_in + cross-attn block + 1x1 conv_out)
        "time_w1": _pad2(rnd(ks[1], (TIME_DIM, MODEL_DIM)), TIME_DIM, D_PAD).astype(bf16),
        "time_b1": jnp.zeros((1, D_PAD), jnp.float32),
        "time_w2": _pad2(rnd(ks[2], (MODEL_DIM, MODEL_DIM)), D_PAD, D_PAD).astype(bf16),
        "time_b2": jnp.zeros((1, D_PAD), jnp.float32),
        "conv_in_w": _pad2(rnd(ks[3], (LAT_C, MODEL_DIM)), C_PAD, D_PAD).astype(bf16),
        "conv_in_b": jnp.zeros((1, D_PAD), jnp.float32),
        "q_w": _pad2(rnd(ks[4], (MODEL_DIM, MODEL_DIM)), D_PAD, D_PAD).astype(bf16),
        "q_b": jnp.zeros((1, D_PAD), jnp.float32),
        "kv_w": kv_w.astype(bf16),                                   # fused K|V
        "kv_b": jnp.zeros((1, 2 * D_PAD), jnp.float32),
        "o_w": _pad2(rnd(ks[7], (MODEL_DIM, MODEL_DIM)), D_PAD, D_PAD).astype(bf16),
        "o_b": jnp.zeros((1, D_PAD), jnp.float32),
        "out_w_t": out_w_t.astype(bf16),                             # (C_PAD, D_PAD)
        "out_b": jnp.zeros((C_PAD, 1), jnp.float32),
    }


_WEIGHT_ORDER = ("proj_w", "proj_b", "ln_g", "ln_b",
                 "time_w1", "time_b1", "time_w2", "time_b2",
                 "conv_in_w", "conv_in_b", "q_w", "q_b",
                 "kv_w", "kv_b", "o_w", "o_b",
                 "out_w_t", "out_b")


def timestep_embedding(t, dim, max_period=10000.0):
    # sinusoidal timestep embedding (pure glue, 2x32 elements)
    # TODO(synk): diffusers' Timesteps uses [sin, cos] unless flip_sin_to_cos; kept as surrogate.
    half = dim // 2
    freqs = jnp.exp(-jnp.log(max_period) * jnp.arange(half, dtype=jnp.float32) / half)
    args = t.astype(jnp.float32)[:, None] * freqs[None, :]
    return jnp.concatenate([jnp.cos(args), jnp.sin(args)], axis=-1)


# ----------------------------- forward pass --------------------------------

def wplus_adapter_forward(params, noisy_latents, timesteps,
                          encoder_hidden_states, image_embeds):
    b, c, h, w = noisy_latents.shape
    hw = h * w

    # NCHW -> [B, C, HW] is a free reshape; pad channels 4->8 for aligned tiles.
    lat = jnp.pad(noisy_latents.reshape(b, c, hw), ((0, 0), (0, C_PAD - c), (0, 0)))
    t_emb = timestep_embedding(timesteps, TIME_DIM)                  # [B, TIME_DIM]
    ehs = encoder_hidden_states.reshape(b * TEXT_SEQ, CROSS_DIM)     # [B*S_text, CROSS]

    # Block-structured LHS for the w_proj matmul: row (b, t) carries
    # image_embeds[b] in lane chunk t (pure data placement / zero padding; the
    # Linear FLOPs stay in the kernel as ONE MXU push against [T*E, CROSS]).
    eye_t = jnp.eye(NUM_TOKENS, dtype=image_embeds.dtype)
    proj_lhs = jnp.einsum("be,ts->btse", image_embeds, eye_t)
    proj_lhs = proj_lhs.reshape(b * NUM_TOKENS, NUM_TOKENS * EMBED_DIM)  # [B*T, T*E]

    w_args = [params[name] for name in _WEIGHT_ORDER]
    args = [lat, t_emb, ehs, proj_lhs] + w_args

    def full_spec(a):
        nd = a.ndim
        return pl.BlockSpec(a.shape, lambda i: (0,) * nd)

    # noise_pred = self.unet(noisy_latents, timesteps, cat([ehs, wplus_tokens]))
    # TODO(synk): the real module delegates to a full diffusers UNet2DConditionModel;
    # a minimal conditioned denoiser (time MLP + 1x1 conv_in + one cross-attention
    # block + 1x1 conv_out) stands in, fully fused in one Pallas kernel.
    out = pl.pallas_call(
        _fused_kernel,
        out_shape=jax.ShapeDtypeStruct((b, C_PAD, hw), jnp.float32),
        grid=(1,),                                   # batch folded: ONE grid step
        in_specs=[full_spec(a) for a in args],
        out_specs=pl.BlockSpec((b, C_PAD, hw), lambda i: (0, 0, 0)),
        compiler_params=pltpu.CompilerParams(
            dimension_semantics=("arbitrary",),
            vmem_limit_bytes=16 * 1024 * 1024,       # resident working set < 2 MiB
        ),
    )(*args)

    # drop the padded channels, free reshape back to NCHW
    return out[:, :c, :].reshape(b, c, h, w)


if __name__ == "__main__":
    key = jax.random.PRNGKey(0)
    kp, k1, k2, k3, k4 = jax.random.split(key, 5)

    params = init_params(kp)
    noisy_latents = jax.random.normal(k1, (BATCH, LAT_C, LAT_H, LAT_W), jnp.float32)
    timesteps = jax.random.randint(k2, (BATCH,), 0, 1000)
    encoder_hidden_states = jax.random.normal(k3, (BATCH, TEXT_SEQ, CROSS_DIM), jnp.float32)
    image_embeds = jax.random.normal(k4, (BATCH, EMBED_DIM), jnp.float32)

    fwd = jax.jit(wplus_adapter_forward)
    noise_pred = fwd(params, noisy_latents, timesteps, encoder_hidden_states, image_embeds)
    jax.block_until_ready(noise_pred)

    assert noise_pred.shape == noisy_latents.shape, noise_pred.shape
    assert bool(jnp.all(jnp.isfinite(noise_pred)))
    print("KERNEL_OK")
</pallas_src>

<mosaic_0001>
module attributes {stable_mosaic.version = 11 : i64} {
  func.func @_fused_kernel(%arg0: i32, %arg1: memref<2x8x256xf32, #tpu.memory_space<vmem>>, %arg2: memref<2x32xf32, #tpu.memory_space<vmem>>, %arg3: memref<16x32xf32, #tpu.memory_space<vmem>>, %arg4: memref<8x128xf32, #tpu.memory_space<vmem>>, %arg5: memref<128x32xbf16, #tpu.memory_space<vmem>>, %arg6: memref<8x32xf32, #tpu.memory_space<vmem>>, %arg7: memref<1x32xf32, #tpu.memory_space<vmem>>, %arg8: memref<1x32xf32, #tpu.memory_space<vmem>>, %arg9: memref<32x128xbf16, #tpu.memory_space<vmem>>, %arg10: memref<1x128xf32, #tpu.memory_space<vmem>>, %arg11: memref<128x128xbf16, #tpu.memory_space<vmem>>, %arg12: memref<1x128xf32, #tpu.memory_space<vmem>>, %arg13: memref<8x128xbf16, #tpu.memory_space<vmem>>, %arg14: memref<1x128xf32, #tpu.memory_space<vmem>>, %arg15: memref<128x128xbf16, #tpu.memory_space<vmem>>, %arg16: memref<1x128xf32, #tpu.memory_space<vmem>>, %arg17: memref<32x256xbf16, #tpu.memory_space<vmem>>, %arg18: memref<1x256xf32, #tpu.memory_space<vmem>>, %arg19: memref<128x128xbf16, #tpu.memory_space<vmem>>, %arg20: memref<1x128xf32, #tpu.memory_space<vmem>>, %arg21: memref<8x128xbf16, #tpu.memory_space<vmem>>, %arg22: memref<8x1xf32, #tpu.memory_space<vmem>>, %arg23: memref<2x8x256xf32, #tpu.memory_space<vmem>>) attributes {dimension_semantics = [#tpu.dimension_semantics<arbitrary>], iteration_bounds = array<i64: 1>, scalar_prefetch = 0 : i64, scratch_operands = 0 : i64, tpu.core_type = #tpu.core_type<tc>, window_params = [{pipeline_mode = #tpu.pipeline_mode<synchronous>, transform_indices = @transform_0, window_bounds = array<i64: 2, 8, 256>}, {pipeline_mode = #tpu.pipeline_mode<synchronous>, transform_indices = @transform_1, window_bounds = array<i64: 2, 32>}, {pipeline_mode = #tpu.pipeline_mode<synchronous>, transform_indices = @transform_2, window_bounds = array<i64: 16, 32>}, {pipeline_mode = #tpu.pipeline_mode<synchronous>, transform_indices = @transform_3, window_bounds = array<i64: 8, 128>}, {pipeline_mode = #tpu.pipeline_mode<synchronous>, transform_indices = @transform_4, window_bounds = array<i64: 128, 32>}, {pipeline_mode = #tpu.pipeline_mode<synchronous>, transform_indices = @transform_5, window_bounds = array<i64: 8, 32>}, {pipeline_mode = #tpu.pipeline_mode<synchronous>, transform_indices = @transform_6, window_bounds = array<i64: 1, 32>}, {pipeline_mode = #tpu.pipeline_mode<synchronous>, transform_indices = @transform_7, window_bounds = array<i64: 1, 32>}, {pipeline_mode = #tpu.pipeline_mode<synchronous>, transform_indices = @transform_8, window_bounds = array<i64: 32, 128>}, {pipeline_mode = #tpu.pipeline_mode<synchronous>, transform_indices = @transform_9, window_bounds = array<i64: 1, 128>}, {pipeline_mode = #tpu.pipeline_mode<synchronous>, transform_indices = @transform_10, window_bounds = array<i64: 128, 128>}, {pipeline_mode = #tpu.pipeline_mode<synchronous>, transform_indices = @transform_11, window_bounds = array<i64: 1, 128>}, {pipeline_mode = #tpu.pipeline_mode<synchronous>, transform_indices = @transform_12, window_bounds = array<i64: 8, 128>}, {pipeline_mode = #tpu.pipeline_mode<synchronous>, transform_indices = @transform_13, window_bounds = array<i64: 1, 128>}, {pipeline_mode = #tpu.pipeline_mode<synchronous>, transform_indices = @transform_14, window_bounds = array<i64: 128, 128>}, {pipeline_mode = #tpu.pipeline_mode<synchronous>, transform_indices = @transform_15, window_bounds = array<i64: 1, 128>}, {pipeline_mode = #tpu.pipeline_mode<synchronous>, transform_indices = @transform_16, window_bounds = array<i64: 32, 256>}, {pipeline_mode = #tpu.pipeline_mode<synchronous>, transform_indices = @transform_17, window_bounds = array<i64: 1, 256>}, {pipeline_mode = #tpu.pipeline_mode<synchronous>, transform_indices = @transform_18, window_bounds = array<i64: 128, 128>}, {pipeline_mode = #tpu.pipeline_mode<synchronous>, transform_indices = @transform_19, window_bounds = array<i64: 1, 128>}, {pipeline_mode = #tpu.pipeline_mode<synchronous>, transform_indices = @transform_20, window_bounds = array<i64: 8, 128>}, {pipeline_mode = #tpu.pipeline_mode<synchronous>, transform_indices = @transform_21, window_bounds = array<i64: 8, 1>}, {pipeline_mode = #tpu.pipeline_mode<synchronous>, transform_indices = @transform_22, window_bounds = array<i64: 2, 8, 256>}]} {
    %c0 = arith.constant 0 : index
    %c0_0 = arith.constant 0 : index
    %0 = vector.load %arg4[%c0, %c0_0] : memref<8x128xf32, #tpu.memory_space<vmem>>, vector<8x128xf32>
    %1 = arith.truncf %0 : vector<8x128xf32> to vector<8x128xbf16>
    %c0_1 = arith.constant 0 : index
    %c0_2 = arith.constant 0 : index
    %2 = vector.load %arg5[%c0_1, %c0_2] : memref<128x32xbf16, #tpu.memory_space<vmem>>, vector<128x32xbf16>
    %cst = arith.constant dense<0.000000e+00> : vector<8x32xf32>
    %3 = tpu.matmul %1, %2, %cst {dimension_numbers = #tpu.dot_dimension_numbers<[1], [0], [0], [1], [0, 0, 1, 1], [], []>} : vector<8x128xbf16>, vector<128x32xbf16>, vector<8x32xf32> -> vector<8x32xf32>
    %c0_3 = arith.constant 0 : index
    %c0_4 = arith.constant 0 : index
    %4 = vector.load %arg6[%c0_3, %c0_4] : memref<8x32xf32, #tpu.memory_space<vmem>>, vector<8x32xf32>
    %5 = arith.addf %3, %4 : vector<8x32xf32>
    %cst_5 = arith.constant dense<0.000000e+00> : vector<8xf32>
    %6 = vector.multi_reduction <add>, %5, %cst_5 [1] : vector<8x32xf32> to vector<8xf32>
    %7 = vector.shape_cast %6 : vector<8xf32> to vector<8x1xf32>
    %cst_6 = arith.constant 3.200000e+01 : f32
    %8 = vector.broadcast %cst_6 : f32 to vector<8x1xf32>
    %9 = arith.divf %7, %8 : vector<8x1xf32>
    %10 = vector.broadcast %9 : vector<8x1xf32> to vector<8x32xf32>
    %11 = arith.subf %5, %10 : vector<8x32xf32>
    %12 = arith.mulf %11, %11 : vector<8x32xf32>
    %cst_7 = arith.constant dense<0.000000e+00> : vector<8xf32>
    %13 = vector.multi_reduction <add>, %12, %cst_7 [1] : vector<8x32xf32> to vector<8xf32>
    %14 = vector.shape_cast %13 : vector<8xf32> to vector<8x1xf32>
    %cst_8 = arith.constant 3.200000e+01 : f32
    %15 = vector.broadcast %cst_8 : f32 to vector<8x1xf32>
    %16 = arith.divf %14, %15 : vector<8x1xf32>
    %cst_9 = arith.constant 9.99999974E-6 : f32
    %17 = vector.broadcast %cst_9 : f32 to vector<8x1xf32>
    %18 = arith.addf %16, %17 : vector<8x1xf32>
    %19 = math.rsqrt %18 : vector<8x1xf32>
    %20 = vector.broadcast %19 : vector<8x1xf32> to vector<8x32xf32>
    %21 = arith.mulf %11, %20 : vector<8x32xf32>
    %c0_10 = arith.constant 0 : index
    %c0_11 = arith.constant 0 : index
    %22 = vector.load %arg7[%c0_10, %c0_11] : memref<1x32xf32, #tpu.memory_space<vmem>>, vector<1x32xf32>
    %23 = vector.broadcast %22 : vector<1x32xf32> to vector<8x32xf32>
    %24 = arith.mulf %21, %23 : vector<8x32xf32>
    %c0_12 = arith.constant 0 : index
    %c0_13 = arith.constant 0 : index
    %25 = vector.load %arg8[%c0_12, %c0_13] : memref<1x32xf32, #tpu.memory_space<vmem>>, vector<1x32xf32>
    %26 = vector.broadcast %25 : vector<1x32xf32> to vector<8x32xf32>
    %27 = arith.addf %24, %26 : vector<8x32xf32>
    %c0_14 = arith.constant 0 : index
    %c0_15 = arith.constant 0 : index
    %28 = vector.load %arg3[%c0_14, %c0_15] : memref<16x32xf32, #tpu.memory_space<vmem>>, vector<16x32xf32>
    %29 = tpu.concatenate %28, %27 in 0 : vector<16x32xf32>, vector<8x32xf32> -> vector<24x32xf32>
    %30 = arith.truncf %29 : vector<24x32xf32> to vector<24x32xbf16>
    %c0_16 = arith.constant 0 : index
    %c0_17 = arith.constant 0 : index
    %31 = vector.load %arg2[%c0_16, %c0_17] : memref<2x32xf32, #tpu.memory_space<vmem>>, vector<2x32xf32>
    %32 = arith.truncf %31 : vector<2x32xf32> to vector<2x32xbf16>
    %c0_18 = arith.constant 0 : index
    %c0_19 = arith.constant 0 : index
    %33 = vector.load %arg9[%c0_18, %c0_19] : memref<32x128xbf16, #tpu.memory_space<vmem>>, vector<32x128xbf16>
    %cst_20 = arith.constant dense<0.000000e+00> : vector<2x128xf32>
    %34 = tpu.matmul %32, %33, %cst_20 {dimension_numbers = #tpu.dot_dimension_numbers<[1], [0], [0], [1], [0, 0, 1, 1], [], []>} : vector<2x32xbf16>, vector<32x128xbf16>, vector<2x128xf32> -> vector<2x128xf32>
    %c0_21 = arith.constant 0 : index
    %c0_22 = arith.constant 0 : index
    %35 = vector.load %arg10[%c0_21, %c0_22] : memref<1x128xf32, #tpu.memory_space<vmem>>, vector<1x128xf32>
    %36 = vector.broadcast %35 : vector<1x128xf32> to vector<2x128xf32>
    %37 = arith.addf %34, %36 : vector<2x128xf32>
    %38 = arith.negf %37 : vector<2x128xf32>
    %39 = math.exp %38 : vector<2x128xf32>
    %cst_23 = arith.constant 1.000000e+00 : f32
    %40 = vector.broadcast %cst_23 : f32 to vector<2x128xf32>
    %41 = arith.addf %40, %39 : vector<2x128xf32>
    %42 = arith.divf %40, %41 : vector<2x128xf32>
    %43 = arith.mulf %37, %42 : vector<2x128xf32>
    %44 = arith.truncf %43 : vector<2x128xf32> to vector<2x128xbf16>
    %c0_24 = arith.constant 0 : index
    %c0_25 = arith.constant 0 : index
    %45 = vector.load %arg11[%c0_24, %c0_25] : memref<128x128xbf16, #tpu.memory_space<vmem>>, vector<128x128xbf16>
    %cst_26 = arith.constant dense<0.000000e+00> : vector<2x128xf32>
    %46 = tpu.matmul %44, %45, %cst_26 {dimension_numbers = #tpu.dot_dimension_numbers<[1], [0], [0], [1], [0, 0, 1, 1], [], []>} : vector<2x128xbf16>, vector<128x128xbf16>, vector<2x128xf32> -> vector<2x128xf32>
    %c0_27 = arith.constant 0 : index
    %c0_28 = arith.constant 0 : index
    %47 = vector.load %arg12[%c0_27, %c0_28] : memref<1x128xf32, #tpu.memory_space<vmem>>, vector<1x128xf32>
    %48 = vector.broadcast %47 : vector<1x128xf32> to vector<2x128xf32>
    %49 = arith.addf %46, %48 : vector<2x128xf32>
    %c0_29 = arith.constant 0 : index
    %c0_30 = arith.constant 0 : index
    %50 = vector.load %arg14[%c0_29, %c0_30] : memref<1x128xf32, #tpu.memory_space<vmem>>, vector<1x128xf32>
    %51 = vector.broadcast %50 : vector<1x128xf32> to vector<2x128xf32>
    %52 = arith.addf %51, %49 : vector<2x128xf32>
    %c0_31 = arith.constant 0 : index
    %c0_32 = arith.constant 0 : index
    %53 = vector.load %arg13[%c0_31, %c0_32] : memref<8x128xbf16, #tpu.memory_space<vmem>>, vector<8x128xbf16>
    %c0_33 = arith.constant 0 : index
    %c0_34 = arith.constant 0 : index
    %c0_35 = arith.constant 0 : index
    %54 = vector.load %arg1[%c0_33, %c0_34, %c0_35] : memref<2x8x256xf32, #tpu.memory_space<vmem>>, vector<1x8x256xf32>
    %55 = vector.shape_cast %54 : vector<1x8x256xf32> to vector<8x256xf32>
    %56 = arith.truncf %55 : vector<8x256xf32> to vector<8x256xbf16>
    %cst_36 = arith.constant dense<0.000000e+00> : vector<256x128xf32>
    %57 = tpu.matmul %56, %53, %cst_36 {dimension_numbers = #tpu.dot_dimension_numbers<[0], [0], [1], [1], [0, 1, 1, 1], [], []>} : vector<8x256xbf16>, vector<8x128xbf16>, vector<256x128xf32> -> vector<256x128xf32>
    %58 = vector.extract_strided_slice %52 {offsets = [0, 0], sizes = [1, 128], strides = [1, 1]} : vector<2x128xf32> to vector<1x128xf32>
    %59 = vector.broadcast %58 : vector<1x128xf32> to vector<256x128xf32>
    %60 = arith.addf %57, %59 : vector<256x128xf32>
    %c1 = arith.constant 1 : index
    %c0_37 = arith.constant 0 : index
    %c0_38 = arith.constant 0 : index
    %61 = vector.load %arg1[%c1, %c0_37, %c0_38] : memref<2x8x256xf32, #tpu.memory_space<vmem>>, vector<1x8x256xf32>
    %62 = vector.shape_cast %61 : vector<1x8x256xf32> to vector<8x256xf32>
    %63 = arith.truncf %62 : vector<8x256xf32> to vector<8x256xbf16>
    %cst_39 = arith.constant dense<0.000000e+00> : vector<256x128xf32>
    %64 = tpu.matmul %63, %53, %cst_39 {dimension_numbers = #tpu.dot_dimension_numbers<[0], [0], [1], [1], [0, 1, 1, 1], [], []>} : vector<8x256xbf16>, vector<8x128xbf16>, vector<256x128xf32> -> vector<256x128xf32>
    %65 = vector.extract_strided_slice %52 {offsets = [1, 0], sizes = [1, 128], strides = [1, 1]} : vector<2x128xf32> to vector<1x128xf32>
    %66 = vector.broadcast %65 : vector<1x128xf32> to vector<256x128xf32>
    %67 = arith.addf %64, %66 : vector<256x128xf32>
    %68 = tpu.concatenate %60, %67 in 0 : vector<256x128xf32>, vector<256x128xf32> -> vector<512x128xf32>
    %69 = arith.truncf %68 : vector<512x128xf32> to vector<512x128xbf16>
    %c0_40 = arith.constant 0 : index
    %c0_41 = arith.constant 0 : index
    %70 = vector.load %arg15[%c0_40, %c0_41] : memref<128x128xbf16, #tpu.memory_space<vmem>>, vector<128x128xbf16>
    %cst_42 = arith.constant dense<0.000000e+00> : vector<512x128xf32>
    %71 = tpu.matmul %69, %70, %cst_42 {dimension_numbers = #tpu.dot_dimension_numbers<[1], [0], [0], [1], [0, 0, 1, 1], [], []>} : vector<512x128xbf16>, vector<128x128xbf16>, vector<512x128xf32> -> vector<512x128xf32>
    %c0_43 = arith.constant 0 : index
    %c0_44 = arith.constant 0 : index
    %72 = vector.load %arg16[%c0_43, %c0_44] : memref<1x128xf32, #tpu.memory_space<vmem>>, vector<1x128xf32>
    %73 = vector.broadcast %72 : vector<1x128xf32> to vector<512x128xf32>
    %74 = arith.addf %71, %73 : vector<512x128xf32>
    %c0_45 = arith.constant 0 : index
    %c0_46 = arith.constant 0 : index
    %75 = vector.load %arg17[%c0_45, %c0_46] : memref<32x256xbf16, #tpu.memory_space<vmem>>, vector<32x256xbf16>
    %cst_47 = arith.constant dense<0.000000e+00> : vector<24x256xf32>
    %76 = tpu.matmul %30, %75, %cst_47 {dimension_numbers = #tpu.dot_dimension_numbers<[1], [0], [0], [1], [0, 0, 1, 1], [], []>} : vector<24x32xbf16>, vector<32x256xbf16>, vector<24x256xf32> -> vector<24x256xf32>
    %c0_48 = arith.constant 0 : index
    %c0_49 = arith.constant 0 : index
    %77 = vector.load %arg18[%c0_48, %c0_49] : memref<1x256xf32, #tpu.memory_space<vmem>>, vector<1x256xf32>
    %78 = vector.broadcast %77 : vector<1x256xf32> to vector<24x256xf32>
    %79 = arith.addf %76, %78 : vector<24x256xf32>
    %80 = vector.extract_strided_slice %79 {offsets = [0, 0], sizes = [24, 128], strides = [1, 1]} : vector<24x256xf32> to vector<24x128xf32>
    %81 = arith.truncf %80 : vector<24x128xf32> to vector<24x128xbf16>
    %82 = vector.extract_strided_slice %79 {offsets = [0, 128], sizes = [24, 128], strides = [1, 1]} : vector<24x256xf32> to vector<24x128xf32>
    %83 = arith.truncf %82 : vector<24x128xf32> to vector<24x128xbf16>
    %84 = arith.truncf %74 : vector<512x128xf32> to vector<512x128xbf16>
    %cst_50 = arith.constant dense<0.000000e+00> : vector<24x512xf32>
    %85 = tpu.matmul %81, %84, %cst_50 {dimension_numbers = #tpu.dot_dimension_numbers<[1], [1], [0], [0], [0, 0, 1, 0], [], []>} : vector<24x128xbf16>, vector<512x128xbf16>, vector<24x512xf32> -> vector<24x512xf32>
    %cst_51 = arith.constant 0.176776692 : f32
    %86 = vector.broadcast %cst_51 : f32 to vector<24x512xf32>
    %87 = arith.mulf %85, %86 : vector<24x512xf32>
    %88 = tpu.iota {dimensions = array<i32: 0>} : vector<24x1xi32>
    %89 = tpu.iota {dimensions = array<i32: 1>} : vector<1x512xi32>
    %c0_i32 = arith.constant 0 : i32
    %90 = vector.broadcast %c0_i32 : i32 to vector<24x1xi32>
    %c0_i32_52 = arith.constant 0 : i32
    %91 = vector.broadcast %c0_i32_52 : i32 to vector<1x512xi32>
    %c8_i32 = arith.constant 8 : i32
    %92 = vector.broadcast %c8_i32 : i32 to vector<24x1xi32>
    %93 = arith.cmpi sge, %88, %92 : vector<24x1xi32>
    %c16_i32 = arith.constant 16 : i32
    %94 = vector.broadcast %c16_i32 : i32 to vector<24x1xi32>
    %95 = arith.cmpi slt, %88, %94 : vector<24x1xi32>
    %96 = arith.andi %93, %95 : vector<24x1xi1>
    %97 = arith.extui %96 : vector<24x1xi1> to vector<24x1xi32>
    %98 = arith.addi %90, %97 : vector<24x1xi32>
    %c20_i32 = arith.constant 20 : i32
    %99 = vector.broadcast %c20_i32 : i32 to vector<24x1xi32>
    %100 = arith.cmpi sge, %88, %99 : vector<24x1xi32>
    %101 = arith.extui %100 : vector<24x1xi1> to vector<24x1xi32>
    %102 = arith.addi %98, %101 : vector<24x1xi32>
    %c256_i32 = arith.constant 256 : i32
    %103 = vector.broadcast %c256_i32 : i32 to vector<1x512xi32>
    %104 = arith.cmpi sge, %89, %103 : vector<1x512xi32>
    %105 = arith.extui %104 : vector<1x512xi1> to vector<1x512xi32>
    %106 = arith.addi %91, %105 : vector<1x512xi32>
    %107 = vector.broadcast %102 : vector<24x1xi32> to vector<24x512xi32>
    %108 = vector.broadcast %106 : vector<1x512xi32> to vector<24x512xi32>
    %109 = arith.cmpi eq, %107, %108 : vector<24x512xi32>
    %cst_53 = arith.constant 0.000000e+00 : f32
    %cst_54 = arith.constant -1.000000e+30 : f32
    %110 = vector.broadcast %cst_53 : f32 to vector<24x512xf32>
    %111 = vector.broadcast %cst_54 : f32 to vector<24x512xf32>
    %112 = arith.select %109, %110, %111 : vector<24x512xi1>, vector<24x512xf32>
    %113 = arith.addf %87, %112 : vector<24x512xf32>
    %cst_55 = arith.constant dense<0xFF800000> : vector<512xf32>
    %114 = vector.multi_reduction <maximumf>, %113, %cst_55 [0] : vector<24x512xf32> to vector<512xf32>
    %115 = vector.shape_cast %114 : vector<512xf32> to vector<1x512xf32>
    %116 = vector.broadcast %115 : vector<1x512xf32> to vector<24x512xf32>
    %117 = arith.subf %113, %116 : vector<24x512xf32>
    %118 = math.exp %117 : vector<24x512xf32>
    %cst_56 = arith.constant dense<0.000000e+00> : vector<512xf32>
    %119 = vector.multi_reduction <add>, %118, %cst_56 [0] : vector<24x512xf32> to vector<512xf32>
    %120 = vector.shape_cast %119 : vector<512xf32> to vector<1x512xf32>
    %121 = tpu.reciprocal %120 {approx = true} : vector<1x512xf32> -> vector<1x512xf32>
    %122 = vector.broadcast %121 : vector<1x512xf32> to vector<24x512xf32>
    %123 = arith.mulf %118, %122 : vector<24x512xf32>
    %124 = arith.truncf %123 : vector<24x512xf32> to vector<24x512xbf16>
    %cst_57 = arith.constant dense<0.000000e+00> : vector<512x128xf32>
    %125 = tpu.matmul %124, %83, %cst_57 {dimension_numbers = #tpu.dot_dimension_numbers<[0], [0], [1], [1], [0, 1, 1, 1], [], []>} : vector<24x512xbf16>, vector<24x128xbf16>, vector<512x128xf32> -> vector<512x128xf32>
    %126 = arith.truncf %125 : vector<512x128xf32> to vector<512x128xbf16>
    %c0_58 = arith.constant 0 : index
    %c0_59 = arith.constant 0 : index
    %127 = vector.load %arg19[%c0_58, %c0_59] : memref<128x128xbf16, #tpu.memory_space<vmem>>, vector<128x128xbf16>
    %cst_60 = arith.constant dense<0.000000e+00> : vector<512x128xf32>
    %128 = tpu.matmul %126, %127, %cst_60 {dimension_numbers = #tpu.dot_dimension_numbers<[1], [0], [0], [1], [0, 0, 1, 1], [], []>} : vector<512x128xbf16>, vector<128x128xbf16>, vector<512x128xf32> -> vector<512x128xf32>
    %c0_61 = arith.constant 0 : index
    %c0_62 = arith.constant 0 : index
    %129 = vector.load %arg20[%c0_61, %c0_62] : memref<1x128xf32, #tpu.memory_space<vmem>>, vector<1x128xf32>
    %130 = vector.broadcast %129 : vector<1x128xf32> to vector<512x128xf32>
    %131 = arith.addf %128, %130 : vector<512x128xf32>
    %132 = arith.addf %68, %131 : vector<512x128xf32>
    %c0_63 = arith.constant 0 : index
    %c0_64 = arith.constant 0 : index
    %133 = vector.load %arg21[%c0_63, %c0_64] : memref<8x128xbf16, #tpu.memory_space<vmem>>, vector<8x128xbf16>
    %134 = arith.truncf %132 : vector<512x128xf32> to vector<512x128xbf16>
    %cst_65 = arith.constant dense<0.000000e+00> : vector<8x512xf32>
    %135 = tpu.matmul %133, %134, %cst_65 {dimension_numbers = #tpu.dot_dimension_numbers<[1], [1], [0], [0], [0, 0, 1, 0], [], []>} : vector<8x128xbf16>, vector<512x128xbf16>, vector<8x512xf32> -> vector<8x512xf32>
    %c0_66 = arith.constant 0 : index
    %c0_67 = arith.constant 0 : index
    %136 = vector.load %arg22[%c0_66, %c0_67] : memref<8x1xf32, #tpu.memory_space<vmem>>, vector<8x1xf32>
    %137 = vector.broadcast %136 : vector<8x1xf32> to vector<8x512xf32>
    %138 = arith.addf %135, %137 : vector<8x512xf32>
    %139 = vector.extract_strided_slice %138 {offsets = [0, 0], sizes = [8, 256], strides = [1, 1]} : vector<8x512xf32> to vector<8x256xf32>
    %c0_68 = arith.constant 0 : index
    %c0_69 = arith.constant 0 : index
    %c0_70 = arith.constant 0 : index
    %140 = vector.load %arg23[%c0_68, %c0_69, %c0_70] : memref<2x8x256xf32, #tpu.memory_space<vmem>>, vector<1x8x256xf32>
    %141 = vector.shape_cast %140 : vector<1x8x256xf32> to vector<8x256xf32>
    %142 = vector.shape_cast %139 : vector<8x256xf32> to vector<1x8x256xf32>
    tpu.vector_store %arg23[%c0_68, %c0_69, %c0_70], %142 {strides = array<i32>} : memref<2x8x256xf32, #tpu.memory_space<vmem>>, vector<1x8x256xf32>,
    %143 = vector.extract_strided_slice %138 {offsets = [0, 256], sizes = [8, 256], strides = [1, 1]} : vector<8x512xf32> to vector<8x256xf32>
    %c1_71 = arith.constant 1 : index
    %c0_72 = arith.constant 0 : index
    %c0_73 = arith.constant 0 : index
    %144 = vector.load %arg23[%c1_71, %c0_72, %c0_73] : memref<2x8x256xf32, #tpu.memory_space<vmem>>, vector<1x8x256xf32>
    %145 = vector.shape_cast %144 : vector<1x8x256xf32> to vector<8x256xf32>
    %146 = vector.shape_cast %143 : vector<8x256xf32> to vector<1x8x256xf32>
    tpu.vector_store %arg23[%c1_71, %c0_72, %c0_73], %146 {strides = array<i32>} : memref<2x8x256xf32, #tpu.memory_space<vmem>>, vector<1x8x256xf32>,
    return
  }
  func.func @transform_0(%arg0: i32) -> (i32, i32, i32) {
    %c0_i32 = arith.constant 0 : i32
    %c0_i32_0 = arith.constant 0 : i32
    %c0_i32_1 = arith.constant 0 : i32
    %c0_i32_2 = arith.constant 0 : i32
    return %c0_i32, %c0_i32_0, %c0_i32_1 : i32, i32, i32
  }
  func.func @transform_1(%arg0: i32) -> (i32, i32) {
    %c0_i32 = arith.constant 0 : i32
    %c0_i32_0 = arith.constant 0 : i32
    %c0_i32_1 = arith.constant 0 : i32
    return %c0_i32, %c0_i32_0 : i32, i32
  }
  func.func @transform_2(%arg0: i32) -> (i32, i32) {
    %c0_i32 = arith.constant 0 : i32
    %c0_i32_0 = arith.constant 0 : i32
    %c0_i32_1 = arith.constant 0 : i32
    return %c0_i32, %c0_i32_0 : i32, i32
  }
  func.func @transform_3(%arg0: i32) -> (i32, i32) {
    %c0_i32 = arith.constant 0 : i32
    %c0_i32_0 = arith.constant 0 : i32
    %c0_i32_1 = arith.constant 0 : i32
    return %c0_i32, %c0_i32_0 : i32, i32
  }
  func.func @transform_4(%arg0: i32) -> (i32, i32) {
    %c0_i32 = arith.constant 0 : i32
    %c0_i32_0 = arith.constant 0 : i32
    %c0_i32_1 = arith.constant 0 : i32
    return %c0_i32, %c0_i32_0 : i32, i32
  }
  func.func @transform_5(%arg0: i32) -> (i32, i32) {
    %c0_i32 = arith.constant 0 : i32
    %c0_i32_0 = arith.constant 0 : i32
    %c0_i32_1 = arith.constant 0 : i32
    return %c0_i32, %c0_i32_0 : i32, i32
  }
  func.func @transform_6(%arg0: i32) -> (i32, i32) {
    %c0_i32 = arith.constant 0 : i32
    %c0_i32_0 = arith.constant 0 : i32
    %c0_i32_1 = arith.constant 0 : i32
    return %c0_i32, %c0_i32_0 : i32, i32
  }
  func.func @transform_7(%arg0: i32) -> (i32, i32) {
    %c0_i32 = arith.constant 0 : i32
    %c0_i32_0 = arith.constant 0 : i32
    %c0_i32_1 = arith.constant 0 : i32
    return %c0_i32, %c0_i32_0 : i32, i32
  }
  func.func @transform_8(%arg0: i32) -> (i32, i32) {
    %c0_i32 = arith.constant 0 : i32
    %c0_i32_0 = arith.constant 0 : i32
    %c0_i32_1 = arith.constant 0 : i32
    return %c0_i32, %c0_i32_0 : i32, i32
  }
  func.func @transform_9(%arg0: i32) -> (i32, i32) {
    %c0_i32 = arith.constant 0 : i32
    %c0_i32_0 = arith.constant 0 : i32
    %c0_i32_1 = arith.constant 0 : i32
    return %c0_i32, %c0_i32_0 : i32, i32
  }
  func.func @transform_10(%arg0: i32) -> (i32, i32) {
    %c0_i32 = arith.constant 0 : i32
    %c0_i32_0 = arith.constant 0 : i32
    %c0_i32_1 = arith.constant 0 : i32
    return %c0_i32, %c0_i32_0 : i32, i32
  }
  func.func @transform_11(%arg0: i32) -> (i32, i32) {
    %c0_i32 = arith.constant 0 : i32
    %c0_i32_0 = arith.constant 0 : i32
    %c0_i32_1 = arith.constant 0 : i32
    return %c0_i32, %c0_i32_0 : i32, i32
  }
  func.func @transform_12(%arg0: i32) -> (i32, i32) {
    %c0_i32 = arith.constant 0 : i32
    %c0_i32_0 = arith.constant 0 : i32
    %c0_i32_1 = arith.constant 0 : i32
    return %c0_i32, %c0_i32_0 : i32, i32
  }
  func.func @transform_13(%arg0: i32) -> (i32, i32) {
    %c0_i32 = arith.constant 0 : i32
    %c0_i32_0 = arith.constant 0 : i32
    %c0_i32_1 = arith.constant 0 : i32
    return %c0_i32, %c0_i32_0 : i32, i32
  }
  func.func @transform_14(%arg0: i32) -> (i32, i32) {
    %c0_i32 = arith.constant 0 : i32
    %c0_i32_0 = arith.constant 0 : i32
    %c0_i32_1 = arith.constant 0 : i32
    return %c0_i32, %c0_i32_0 : i32, i32
  }
  func.func @transform_15(%arg0: i32) -> (i32, i32) {
    %c0_i32 = arith.constant 0 : i32
    %c0_i32_0 = arith.constant 0 : i32
    %c0_i32_1 = arith.constant 0 : i32
    return %c0_i32, %c0_i32_0 : i32, i32
  }
  func.func @transform_16(%arg0: i32) -> (i32, i32) {
    %c0_i32 = arith.constant 0 : i32
    %c0_i32_0 = arith.constant 0 : i32
    %c0_i32_1 = arith.constant 0 : i32
    return %c0_i32, %c0_i32_0 : i32, i32
  }
  func.func @transform_17(%arg0: i32) -> (i32, i32) {
    %c0_i32 = arith.constant 0 : i32
    %c0_i32_0 = arith.constant 0 : i32
    %c0_i32_1 = arith.constant 0 : i32
    return %c0_i32, %c0_i32_0 : i32, i32
  }
  func.func @transform_18(%arg0: i32) -> (i32, i32) {
    %c0_i32 = arith.constant 0 : i32
    %c0_i32_0 = arith.constant 0 : i32
    %c0_i32_1 = arith.constant 0 : i32
    return %c0_i32, %c0_i32_0 : i32, i32
  }
  func.func @transform_19(%arg0: i32) -> (i32, i32) {
    %c0_i32 = arith.constant 0 : i32
    %c0_i32_0 = arith.constant 0 : i32
    %c0_i32_1 = arith.constant 0 : i32
    return %c0_i32, %c0_i32_0 : i32, i32
  }
  func.func @transform_20(%arg0: i32) -> (i32, i32) {
    %c0_i32 = arith.constant 0 : i32
    %c0_i32_0 = arith.constant 0 : i32
    %c0_i32_1 = arith.constant 0 : i32
    return %c0_i32, %c0_i32_0 : i32, i32
  }
  func.func @transform_21(%arg0: i32) -> (i32, i32) {
    %c0_i32 = arith.constant 0 : i32
    %c0_i32_0 = arith.constant 0 : i32
    %c0_i32_1 = arith.constant 0 : i32
    return %c0_i32, %c0_i32_0 : i32, i32
  }
  func.func @transform_22(%arg0: i32) -> (i32, i32, i32) {
    %c0_i32 = arith.constant 0 : i32
    %c0_i32_0 = arith.constant 0 : i32
    %c0_i32_1 = arith.constant 0 : i32
    %c0_i32_2 = arith.constant 0 : i32
    return %c0_i32, %c0_i32_0, %c0_i32_1 : i32, i32, i32
  }
}

</mosaic_0001>

<llo_original>
// kernel: wplus_adapter_forward.1
$region0: #{wplus_adapter_forward.1}
  #allocation0 [shape = 'u32[]', space=smem, size = 0x4, offset = 0x4, fixed_abs, tag = 'smem constant byte address 0x4 - core index']
  #allocation1 [shape = 'u32[144,128]{1,0:T(1,128)}', space=vmem, size = 0x12000, scoped, tag = 'internal scratch']
  %s0 = inlined_call_operand.vmem [shape: f32[2,8,256], index: 0, kind: input, shape index: {}]
  %s1 = inlined_call_operand.vmem [shape: f32[2,32], index: 1, kind: input, shape index: {}]
  %s2 = inlined_call_operand.vmem [shape: f32[16,32], index: 2, kind: input, shape index: {}]
  %s3 = inlined_call_operand.vmem [shape: f32[8,128], index: 3, kind: input, shape index: {}]
  %s4 = inlined_call_operand.vmem [shape: bf16[128,32], index: 4, kind: input, shape index: {}]
  %s5 = inlined_call_operand.vmem [shape: f32[8,32], index: 5, kind: input, shape index: {}]
  %s6 = inlined_call_operand.vmem [shape: f32[1,32], index: 6, kind: input, shape index: {}]
  %s7 = inlined_call_operand.vmem [shape: f32[1,32], index: 7, kind: input, shape index: {}]
  %s8 = inlined_call_operand.vmem [shape: bf16[32,128], index: 8, kind: input, shape index: {}]
  %s9 = inlined_call_operand.vmem [shape: f32[1,128], index: 9, kind: input, shape index: {}]
  %s10 = inlined_call_operand.vmem [shape: bf16[128,128], index: 10, kind: input, shape index: {}]
  %s11 = inlined_call_operand.vmem [shape: f32[1,128], index: 11, kind: input, shape index: {}]
  %s12 = inlined_call_operand.vmem [shape: bf16[8,128], index: 12, kind: input, shape index: {}]
  %s13 = inlined_call_operand.vmem [shape: f32[1,128], index: 13, kind: input, shape index: {}]
  %s14 = inlined_call_operand.vmem [shape: bf16[128,128], index: 14, kind: input, shape index: {}]
  %s15 = inlined_call_operand.vmem [shape: f32[1,128], index: 15, kind: input, shape index: {}]
  %s16 = inlined_call_operand.vmem [shape: bf16[32,256], index: 16, kind: input, shape index: {}]
  %s17 = inlined_call_operand.vmem [shape: f32[1,256], index: 17, kind: input, shape index: {}]
  %s18 = inlined_call_operand.vmem [shape: bf16[128,128], index: 18, kind: input, shape index: {}]
  %s19 = inlined_call_operand.vmem [shape: f32[1,128], index: 19, kind: input, shape index: {}]
  %s20 = inlined_call_operand.vmem [shape: bf16[8,128], index: 20, kind: input, shape index: {}]
  %s21 = inlined_call_operand.vmem [shape: f32[8,1], index: 21, kind: input, shape index: {}]
  %s22 = inlined_call_operand.vmem [shape: f32[2,8,256], index: 22, kind: output, shape index: {}]
  %s23 = sld [smem:[#allocation0]]
  $region98: #{wplus_adapter_forward.1} parent=0
    _
  %s25 = ssub.s32 1, %s23
  %s26 = scalar_select 0, %s25, %s23
  // Predicated region
  $region2: #{wplus_adapter_forward.1} parent=0 // pred_check
    _
  $region3: #{wplus_adapter_forward.1} parent=0 // pred_check_branch
    %28 = sbr.rel (0) target = $region5
  $region4: #{wplus_adapter_forward.1} parent=0 // pred_region
    _
  $region5: #{wplus_adapter_forward.1} parent=0 // pred_fallthru
    _
  // Predicated region
  $region6: #{wplus_adapter_forward.1} parent=0 // pred_check
    _
  $region7: #{wplus_adapter_forward.1} parent=0 // pred_check_branch
    %30 = sbr.rel (0) target = $region9
  $region8: #{wplus_adapter_forward.1} parent=0 // pred_region
    _
  $region9: #{wplus_adapter_forward.1} parent=0 // pred_fallthru
    _
  // Predicated region
  $region10: #{wplus_adapter_forward.1} parent=0 // pred_check
    _
  $region11: #{wplus_adapter_forward.1} parent=0 // pred_check_branch
    %32 = sbr.rel (0) target = $region13
  $region12: #{wplus_adapter_forward.1} parent=0 // pred_region
    _
  $region13: #{wplus_adapter_forward.1} parent=0 // pred_fallthru
    _
  // Predicated region
  $region14: #{wplus_adapter_forward.1} parent=0 // pred_check
    _
  $region15: #{wplus_adapter_forward.1} parent=0 // pred_check_branch
    %34 = sbr.rel (0) target = $region17
  $region16: #{wplus_adapter_forward.1} parent=0 // pred_region
    _
  $region17: #{wplus_adapter_forward.1} parent=0 // pred_fallthru
    _
  // Predicated region
  $region18: #{wplus_adapter_forward.1} parent=0 // pred_check
    _
  $region19: #{wplus_adapter_forward.1} parent=0 // pred_check_branch
    %36 = sbr.rel (0) target = $region21
  $region20: #{wplus_adapter_forward.1} parent=0 // pred_region
    _
  $region21: #{wplus_adapter_forward.1} parent=0 // pred_fallthru
    _
  // Predicated region
  $region22: #{wplus_adapter_forward.1} parent=0 // pred_check
    _
  $region23: #{wplus_adapter_forward.1} parent=0 // pred_check_branch
    %38 = sbr.rel (0) target = $region25
  $region24: #{wplus_adapter_forward.1} parent=0 // pred_region
    _
  $region25: #{wplus_adapter_forward.1} parent=0 // pred_fallthru
    _
  // Predicated region
  $region26: #{wplus_adapter_forward.1} parent=0 // pred_check
    _
  $region27: #{wplus_adapter_forward.1} parent=0 // pred_check_branch
    %40 = sbr.rel (0) target = $region29
  $region28: #{wplus_adapter_forward.1} parent=0 // pred_region
    _
  $region29: #{wplus_adapter_forward.1} parent=0 // pred_fallthru
    _
  // Predicated region
  $region30: #{wplus_adapter_forward.1} parent=0 // pred_check
    _
  $region31: #{wplus_adapter_forward.1} parent=0 // pred_check_branch
    %42 = sbr.rel (0) target = $region33
  $region32: #{wplus_adapter_forward.1} parent=0 // pred_region
    _
  $region33: #{wplus_adapter_forward.1} parent=0 // pred_fallthru
    _
  // Predicated region
  $region34: #{wplus_adapter_forward.1} parent=0 // pred_check
    _
  $region35: #{wplus_adapter_forward.1} parent=0 // pred_check_branch
    %44 = sbr.rel (0) target = $region37
  $region36: #{wplus_adapter_forward.1} parent=0 // pred_region
    _
  $region37: #{wplus_adapter_forward.1} parent=0 // pred_fallthru
    _
  // Predicated region
  $region38: #{wplus_adapter_forward.1} parent=0 // pred_check
    _
  $region39: #{wplus_adapter_forward.1} parent=0 // pred_check_branch
    %46 = sbr.rel (0) target = $region41
  $region40: #{wplus_adapter_forward.1} parent=0 // pred_region
    _
  $region41: #{wplus_adapter_forward.1} parent=0 // pred_fallthru
    _
  // Predicated region
  $region42: #{wplus_adapter_forward.1} parent=0 // pred_check
    _
  $region43: #{wplus_adapter_forward.1} parent=0 // pred_check_branch
    %48 = sbr.rel (0) target = $region45
  $region44: #{wplus_adapter_forward.1} parent=0 // pred_region
    _
  $region45: #{wplus_adapter_forward.1} parent=0 // pred_fallthru
    _
  // Predicated region
  $region46: #{wplus_adapter_forward.1} parent=0 // pred_check
    _
  $region47: #{wplus_adapter_forward.1} parent=0 // pred_check_branch
    %50 = sbr.rel (0) target = $region49
  $region48: #{wplus_adapter_forward.1} parent=0 // pred_region
    _
  $region49: #{wplus_adapter_forward.1} parent=0 // pred_fallthru
    _
  // Predicated region
  $region50: #{wplus_adapter_forward.1} parent=0 // pred_check
    _
  $region51: #{wplus_adapter_forward.1} parent=0 // pred_check_branch
    %52 = sbr.rel (0) target = $region53
  $region52: #{wplus_adapter_forward.1} parent=0 // pred_region
    _
  $region53: #{wplus_adapter_forward.1} parent=0 // pred_fallthru
    _
  // Predicated region
  $region54: #{wplus_adapter_forward.1} parent=0 // pred_check
    _
  $region55: #{wplus_adapter_forward.1} parent=0 // pred_check_branch
    %54 = sbr.rel (0) target = $region57
  $region56: #{wplus_adapter_forward.1} parent=0 // pred_region
    _
  $region57: #{wplus_adapter_forward.1} parent=0 // pred_fallthru
    _
  // Predicated region
  $region58: #{wplus_adapter_forward.1} parent=0 // pred_check
    _
  $region59: #{wplus_adapter_forward.1} parent=0 // pred_check_branch
    %56 = sbr.rel (0) target = $region61
  $region60: #{wplus_adapter_forward.1} parent=0 // pred_region
    _
  $region61: #{wplus_adapter_forward.1} parent=0 // pred_fallthru
    _
  // Predicated region
  $region62: #{wplus_adapter_forward.1} parent=0 // pred_check
    _
  $region63: #{wplus_adapter_forward.1} parent=0 // pred_check_branch
    %58 = sbr.rel (0) target = $region65
  $region64: #{wplus_adapter_forward.1} parent=0 // pred_region
    _
  $region65: #{wplus_adapter_forward.1} parent=0 // pred_fallthru
    _
  // Predicated region
  $region66: #{wplus_adapter_forward.1} parent=0 // pred_check
    _
  $region67: #{wplus_adapter_forward.1} parent=0 // pred_check_branch
    %60 = sbr.rel (0) target = $region69
  $region68: #{wplus_adapter_forward.1} parent=0 // pred_region
    _
  $region69: #{wplus_adapter_forward.1} parent=0 // pred_fallthru
    _
  // Predicated region
  $region70: #{wplus_adapter_forward.1} parent=0 // pred_check
    _
  $region71: #{wplus_adapter_forward.1} parent=0 // pred_check_branch
    %62 = sbr.rel (0) target = $region73
  $region72: #{wplus_adapter_forward.1} parent=0 // pred_region
    _
  $region73: #{wplus_adapter_forward.1} parent=0 // pred_fallthru
    _
  // Predicated region
  $region74: #{wplus_adapter_forward.1} parent=0 // pred_check
    _
  $region75: #{wplus_adapter_forward.1} parent=0 // pred_check_branch
    %64 = sbr.rel (0) target = $region77
  $region76: #{wplus_adapter_forward.1} parent=0 // pred_region
    _
  $region77: #{wplus_adapter_forward.1} parent=0 // pred_fallthru
    _
  // Predicated region
  $region78: #{wplus_adapter_forward.1} parent=0 // pred_check
    _
  $region79: #{wplus_adapter_forward.1} parent=0 // pred_check_branch
    %66 = sbr.rel (0) target = $region81
  $region80: #{wplus_adapter_forward.1} parent=0 // pred_region
    _
  $region81: #{wplus_adapter_forward.1} parent=0 // pred_fallthru
    _
  // Predicated region
  $region82: #{wplus_adapter_forward.1} parent=0 // pred_check
    _
  $region83: #{wplus_adapter_forward.1} parent=0 // pred_check_branch
    %68 = sbr.rel (0) target = $region85
  $region84: #{wplus_adapter_forward.1} parent=0 // pred_region
    _
  $region85: #{wplus_adapter_forward.1} parent=0 // pred_fallthru
    _
  // Predicated region
  $region86: #{wplus_adapter_forward.1} parent=0 // pred_check
    _
  $region87: #{wplus_adapter_forward.1} parent=0 // pred_check_branch
    %70 = sbr.rel (0) target = $region89
  $region88: #{wplus_adapter_forward.1} parent=0 // pred_region
    _
  $region89: #{wplus_adapter_forward.1} parent=0 // pred_fallthru
    _
  %v72 = vld [vmem:[%s3] sm:$0xff]
  %v73 = vpack.c.bf16 %v72, %v72
  %v74 = vld [vmem:[%s4] sm:$0xf]
  %v75 = vld [vmem:[%s4 + $0x4] sm:$0xf]
  %v76 = vld [vmem:[%s4 + $0x8] sm:$0xf]
  %v77 = vld [vmem:[%s4 + $0xc] sm:$0xf]
  %v78 = vld [vmem:[%s4 + $0x10] sm:$0xf]
  %v79 = vld [vmem:[%s4 + $0x14] sm:$0xf]
  %v80 = vld [vmem:[%s4 + $0x18] sm:$0xf]
  %v81 = vld [vmem:[%s4 + $0x1c] sm:$0xf]
  %v82 = vld [vmem:[%s4 + $0x20] sm:$0xf]
  %v83 = vld [vmem:[%s4 + $0x24] sm:$0xf]
  %v84 = vld [vmem:[%s4 + $0x28] sm:$0xf]
  %v85 = vld [vmem:[%s4 + $0x2c] sm:$0xf]
  %v86 = vld [vmem:[%s4 + $0x30] sm:$0xf]
  %v87 = vld [vmem:[%s4 + $0x34] sm:$0xf]
  %v88 = vld [vmem:[%s4 + $0x38] sm:$0xf]
  %v89 = vld [vmem:[%s4 + $0x3c] sm:$0xf]
  %v90 = vld [vmem:[%s5] sm:$0xff]
  %v107 = vunpack.c.l.b16 %v74
  %v108 = vunpack.c.l.b16 %v75
  %v109 = vunpack.c.l.b16 %v76
  %v110 = vunpack.c.l.b16 %v77
  %v111 = vunpack.c.l.b16 %v78
  %v112 = vunpack.c.l.b16 %v79
  %v113 = vunpack.c.l.b16 %v80
  %v114 = vunpack.c.l.b16 %v81
  %v115 = vunpack.c.l.b16 %v82
  %v116 = vunpack.c.l.b16 %v83
  %v117 = vunpack.c.l.b16 %v84
  %v118 = vunpack.c.l.b16 %v85
  %v119 = vunpack.c.l.b16 %v86
  %v120 = vunpack.c.l.b16 %v87
  %v121 = vunpack.c.l.b16 %v88
  %v122 = vunpack.c.l.b16 %v89
  %v123 = vpack.c.b16 %v108, %v107
  %v124 = vpack.c.b16 %v110, %v109
  %v125 = vpack.c.b16 %v112, %v111
  %v126 = vpack.c.b16 %v114, %v113
  %v127 = vpack.c.b16 %v116, %v115
  %v128 = vpack.c.b16 %v118, %v117
  %v129 = vpack.c.b16 %v120, %v119
  %v130 = vpack.c.b16 %v122, %v121
  %139 = vmatprep.subr.bf16.mxu0 0
  %140 = vmatpush1.bf16.msra.mxu0 %v123
  %141 = vmatprep.subr.bf16.mxu0 0
  %142 = vmatpush1.bf16.msra.mxu0 %v124
  %143 = vmatprep.subr.bf16.mxu0 0
  %144 = vmatpush1.bf16.msra.mxu0 %v125
  %145 = vmatprep.subr.bf16.mxu0 0
  %146 = vmatpush1.bf16.msra.mxu0 %v126
  %147 = vmatprep.subr.bf16.mxu0 0
  %148 = vmatpush1.bf16.msra.mxu0 %v127
  %149 = vmatprep.subr.bf16.mxu0 0
  %150 = vmatpush1.bf16.msra.mxu0 %v128
  %151 = vmatprep.subr.bf16.mxu0 0
  %152 = vmatpush1.bf16.msra.mxu0 %v129
  %153 = vmatprep.subr.bf16.mxu0 0
  %154 = vmatpush1.bf16.msra.mxu0 %v130
  %155 = vmatprep.subr.bf16.mxu0 0
  %156 = vmatpush1.bf16.msra.mxu0 0
  %157 = vmatprep.subr.bf16.mxu0 0
  %158 = vmatpush1.bf16.msra.mxu0 0
  %159 = vmatprep.subr.bf16.mxu0 0
  %160 = vmatpush1.bf16.msra.mxu0 0
  %161 = vmatprep.subr.bf16.mxu0 0
  %162 = vmatpush1.bf16.msra.mxu0 0
  %163 = vmatprep.subr.bf16.mxu0 0
  %164 = vmatpush1.bf16.msra.mxu0 0
  %165 = vmatprep.subr.bf16.mxu0 0
  %166 = vmatpush1.bf16.msra.mxu0 0
  %167 = vmatprep.subr.bf16.mxu0 0
  %168 = vmatpush1.bf16.msra.mxu0 0
  %169 = vmatprep.subr.bf16.mxu0 0
  %170 = vmatpush1.bf16.msra.mxu0 0
  %171 = vmatprep.mubr.bf16.mxu0 0
  %172 = vmatmul.mubr.bf16.gmra.mrb[0].mxu0 %v73
  %v173 = vpop.f32.mrb[0].mxu0
  %v174 = vadd.f32 %v90, %v173
  %v175 = vpop.f32.mrb[0].mxu0
  %v176 = vpop.f32.mrb[0].mxu0
  %v177 = vpop.f32.mrb[0].mxu0
  %178 = vdwg.mxu0
  %vm179 = vcmask 261120
  %v180 = vsel %vm179, %v174, 0.0
  %181 = vadd.xlane.f32.xlu0 %v180
  %v182 = vpop.xlane.xlu0 %181
  %v183 = vrcp.pop 32.0
  %v184 = vmul.f32 %v182, %v183
  %v185 = vsub.f32 %v174, %v184
  %v186 = vmul.f32 %v185, %v185
  %v187 = vsel %vm179, %v186, 0.0
  %188 = vadd.xlane.f32.xlu0 %v187
  %v189 = vpop.xlane.xlu0 %188
  %v190 = vmul.f32 %v189, %v183
  %v191 = vadd.f32 %v190, 1e-05
  %v192 = vrsqrt.pop %v191
  %v193 = vmul.f32 %v185, %v192
  %v194 = vld [vmem:[%s6] sm:$0x1]
  %v196 = vlaneseq
  %v197 = vshrl.u32 %v196, 7
  %v198 = vsub.s32 0, %v197
  %v199 = vrot.slane %v194, %v198
  %v201 = vmul.f32 %v193, %v199
  %v202 = vld [vmem:[%s7] sm:$0x1]
  %v204 = vlaneseq
  %v205 = vshrl.u32 %v204, 7
  %v206 = vsub.s32 0, %v205
  %v207 = vrot.slane %v202, %v206
  %v209 = vadd.f32 %v201, %v207
  %v210 = vld [vmem:[%s2] sm:$0xff]
  %v211 = vld [vmem:[%s2 + $0x8] sm:$0xff]
  %v212 = vpack.c.bf16 %v211, %v210
  %v213 = vpack.c.bf16 %v209, %v209
  %v214 = vld [vmem:[%s1] sm:$0x3]
  %v215 = vpack.c.bf16 %v214, %v214
  %v216 = vld [vmem:[%s8] sm:$0xf]
  %v217 = vld [vmem:[%s8 + $0x4] sm:$0xf]
  %v218 = vld [vmem:[%s8 + $0x8] sm:$0xf]
  %v219 = vld [vmem:[%s8 + $0xc] sm:$0xf]
  %v220 = vld [vmem:[%s9] sm:$0x1]
  %v222 = vlaneseq
  %v223 = vshrl.u32 %v222, 7
  %v224 = vsub.s32 0, %v223
  %v225 = vrot.slane %v220, %v224
  %v231 = vunpack.c.l.b16 %v216
  %v232 = vunpack.c.l.b16 %v217
  %v233 = vunpack.c.l.b16 %v218
  %v234 = vunpack.c.l.b16 %v219
  %v235 = vpack.c.b16 %v232, %v231
  %v236 = vpack.c.b16 %v234, %v233
  %v240 = vsel %vm179, %v215, 0
  %242 = vmatprep.subr.bf16.mxu0 0
  %243 = vmatpush1.bf16.msra.mxu0 %v235
  %244 = vmatprep.subr.bf16.mxu0 0
  %245 = vmatpush1.bf16.msra.mxu0 %v236
  %246 = vmatprep.subr.bf16.mxu0 0
  %247 = vmatpush1.bf16.msra.mxu0 0
  %248 = vmatprep.subr.bf16.mxu0 0
  %249 = vmatpush1.bf16.msra.mxu0 0
  %250 = vmatprep.subr.bf16.mxu0 0
  %251 = vmatpush1.bf16.msra.mxu0 0
  %252 = vmatprep.subr.bf16.mxu0 0
  %253 = vmatpush1.bf16.msra.mxu0 0
  %254 = vmatprep.subr.bf16.mxu0 0
  %255 = vmatpush1.bf16.msra.mxu0 0
  %256 = vmatprep.subr.bf16.mxu0 0
  %257 = vmatpush1.bf16.msra.mxu0 0
  %258 = vmatprep.subr.bf16.mxu0 0
  %259 = vmatpush1.bf16.msra.mxu0 0
  %260 = vmatprep.subr.bf16.mxu0 0
  %261 = vmatpush1.bf16.msra.mxu0 0
  %262 = vmatprep.subr.bf16.mxu0 0
  %263 = vmatpush1.bf16.msra.mxu0 0
  %264 = vmatprep.subr.bf16.mxu0 0
  %265 = vmatpush1.bf16.msra.mxu0 0
  %266 = vmatprep.subr.bf16.mxu0 0
  %267 = vmatpush1.bf16.msra.mxu0 0
  %268 = vmatprep.subr.bf16.mxu0 0
  %269 = vmatpush1.bf16.msra.mxu0 0
  %270 = vmatprep.subr.bf16.mxu0 0
  %271 = vmatpush1.bf16.msra.mxu0 0
  %272 = vmatprep.subr.bf16.mxu0 0
  %273 = vmatpush1.bf16.msra.mxu0 0
  %274 = vmatprep.mubr.bf16.mxu0 0
  %275 = vmatmul.mubr.bf16.gmra.mrb[0].mxu0 %v240
  %v276 = vpop.f32.mrb[0].mxu0
  %v277 = vadd.f32 %v225, %v276
  %v278 = vpop.f32.mrb[0].mxu0
  %v279 = vpop.f32.mrb[0].mxu0
  %v280 = vpop.f32.mrb[0].mxu0
  %281 = vdwg.mxu0
  %v282 = vxor.u32 %v277, 2147483648
  %v283 = vmul.f32 %v282, 1.442695
  %v284 = vpow.pop %v283
  %v285 = vadd.f32 %v284, 1.0
  %v286 = vrcp.pop %v285
  %v287 = vmul.f32 1.0, %v286
  %v288 = vmul.f32 %v277, %v287
  %v289 = vpack.c.bf16 %v288, %v288
  %v290 = vld [vmem:[%s10] sm:$0xf]
  %v291 = vld [vmem:[%s10 + $0x4] sm:$0xf]
  %v292 = vld [vmem:[%s10 + $0x8] sm:$0xf]
  %v293 = vld [vmem:[%s10 + $0xc] sm:$0xf]
  %v294 = vld [vmem:[%s10 + $0x10] sm:$0xf]
  %v295 = vld [vmem:[%s10 + $0x14] sm:$0xf]
  %v296 = vld [vmem:[%s10 + $0x18] sm:$0xf]
  %v297 = vld [vmem:[%s10 + $0x1c] sm:$0xf]
  %v298 = vld [vmem:[%s10 + $0x20] sm:$0xf]
  %v299 = vld [vmem:[%s10 + $0x24] sm:$0xf]
  %v300 = vld [vmem:[%s10 + $0x28] sm:$0xf]
  %v301 = vld [vmem:[%s10 + $0x2c] sm:$0xf]
  %v302 = vld [vmem:[%s10 + $0x30] sm:$0xf]
  %v303 = vld [vmem:[%s10 + $0x34] sm:$0xf]
  %v304 = vld [vmem:[%s10 + $0x38] sm:$0xf]
  %v305 = vld [vmem:[%s10 + $0x3c] sm:$0xf]
  %v306 = vld [vmem:[%s11] sm:$0x1]
  %v308 = vlaneseq
  %v309 = vshrl.u32 %v308, 7
  %v310 = vsub.s32 0, %v309
  %v311 = vrot.slane %v306, %v310
  %v329 = vunpack.c.l.b16 %v290
  %v330 = vunpack.c.l.b16 %v291
  %v331 = vunpack.c.l.b16 %v292
  %v332 = vunpack.c.l.b16 %v293
  %v333 = vunpack.c.l.b16 %v294
  %v334 = vunpack.c.l.b16 %v295
  %v335 = vunpack.c.l.b16 %v296
  %v336 = vunpack.c.l.b16 %v297
  %v337 = vunpack.c.l.b16 %v298
  %v338 = vunpack.c.l.b16 %v299
  %v339 = vunpack.c.l.b16 %v300
  %v340 = vunpack.c.l.b16 %v301
  %v341 = vunpack.c.l.b16 %v302
  %v342 = vunpack.c.l.b16 %v303
  %v343 = vunpack.c.l.b16 %v304
  %v344 = vunpack.c.l.b16 %v305
  %v345 = vpack.c.b16 %v330, %v329
  %v346 = vpack.c.b16 %v332, %v331
  %v347 = vpack.c.b16 %v334, %v333
  %v348 = vpack.c.b16 %v336, %v335
  %v349 = vpack.c.b16 %v338, %v337
  %v350 = vpack.c.b16 %v340, %v339
  %v351 = vpack.c.b16 %v342, %v341
  %v352 = vpack.c.b16 %v344, %v343
  %361 = vmatprep.subr.bf16.mxu0 0
  %362 = vmatpush1.bf16.msra.mxu0 %v345
  %363 = vmatprep.subr.bf16.mxu0 0
  %364 = vmatpush1.bf16.msra.mxu0 %v346
  %365 = vmatprep.subr.bf16.mxu0 0
  %366 = vmatpush1.bf16.msra.mxu0 %v347
  %367 = vmatprep.subr.bf16.mxu0 0
  %368 = vmatpush1.bf16.msra.mxu0 %v348
  %369 = vmatprep.subr.bf16.mxu0 0
  %370 = vmatpush1.bf16.msra.mxu0 %v349
  %371 = vmatprep.subr.bf16.mxu0 0
  %372 = vmatpush1.bf16.msra.mxu0 %v350
  %373 = vmatprep.subr.bf16.mxu0 0
  %374 = vmatpush1.bf16.msra.mxu0 %v351
  %375 = vmatprep.subr.bf16.mxu0 0
  %376 = vmatpush1.bf16.msra.mxu0 %v352
  %377 = vmatprep.subr.bf16.mxu0 0
  %378 = vmatpush1.bf16.msra.mxu0 0
  %379 = vmatprep.subr.bf16.mxu0 0
  %380 = vmatpush1.bf16.msra.mxu0 0
  %381 = vmatprep.subr.bf16.mxu0 0
  %382 = vmatpush1.bf16.msra.mxu0 0
  %383 = vmatprep.subr.bf16.mxu0 0
  %384 = vmatpush1.bf16.msra.mxu0 0
  %385 = vmatprep.subr.bf16.mxu0 0
  %386 = vmatpush1.bf16.msra.mxu0 0
  %387 = vmatprep.subr.bf16.mxu0 0
  %388 = vmatpush1.bf16.msra.mxu0 0
  %389 = vmatprep.subr.bf16.mxu0 0
  %390 = vmatpush1.bf16.msra.mxu0 0
  %391 = vmatprep.subr.bf16.mxu0 0
  %392 = vmatpush1.bf16.msra.mxu0 0
  %393 = vmatprep.mubr.bf16.mxu0 0
  %394 = vmatmul.mubr.bf16.gmra.mrb[0].mxu0 %v289
  %v395 = vpop.f32.mrb[0].mxu0
  %v396 = vadd.f32 %v311, %v395
  %v397 = vpop.f32.mrb[0].mxu0
  %v398 = vpop.f32.mrb[0].mxu0
  %v399 = vpop.f32.mrb[0].mxu0
  %400 = vdwg.mxu0
  %v401 = vld [vmem:[%s13] sm:$0x1]
  %v403 = vlaneseq
  %v404 = vshrl.u32 %v403, 7
  %v405 = vsub.s32 0, %v404
  %v406 = vrot.slane %v401, %v405
  %v408 = vadd.f32 %v406, %v396
  %v409 = vld [vmem:[%s12] sm:$0xf]
  %v410 = vld [vmem:[%s0] sm:$0xff]
  %v411 = vld [vmem:[%s0 + $0x8] sm:$0xff]
  %v412 = vpack.c.bf16 %v410, %v410
  %v413 = vpack.c.bf16 %v411, %v411
  %v414 = vlaneseq
  %v415 = vshrl.u32 %v414, 7
  %v416 = vsub.s32 0, %v415
  %v417 = vrot.slane %v408, %v416
  %418 = vxpose.xlu0.c.b16.start [1/8] %v412, 128
  %419 = vxpose.xlu0.c.b16.cont [2/8] 0, 128
  %420 = vxpose.xlu0.c.b16.cont [3/8] 0, 128
  %421 = vxpose.xlu0.c.b16.cont [4/8] 0, 128
  %422 = vxpose.xlu0.c.b16.cont [5/8] 0, 128
  %423 = vxpose.xlu0.c.b16.cont [6/8] 0, 128
  %424 = vxpose.xlu0.c.b16.cont [7/8] 0, 128
  %425 = vxpose.xlu0.c.b16.end [8/8] 0, 128
  %v426 = vpop.trf.xlu0
  %v427 = vpop.trf.xlu0
  %v428 = vpop.trf.xlu0
  %v429 = vpop.trf.xlu0
  %v430 = vpop.trf.xlu0
  %v431 = vpop.trf.xlu0
  %v432 = vpop.trf.xlu0
  %v433 = vpop.trf.xlu0
  %434 = vxpose.xlu0.c.b16.start [1/8] %v413, 128
  %435 = vxpose.xlu0.c.b16.cont [2/8] 0, 128
  %436 = vxpose.xlu0.c.b16.cont [3/8] 0, 128
  %437 = vxpose.xlu0.c.b16.cont [4/8] 0, 128
  %438 = vxpose.xlu0.c.b16.cont [5/8] 0, 128
  %439 = vxpose.xlu0.c.b16.cont [6/8] 0, 128
  %440 = vxpose.xlu0.c.b16.cont [7/8] 0, 128
  %441 = vxpose.xlu0.c.b16.end [8/8] 0, 128
  %v442 = vpop.trf.xlu0
  %v443 = vpop.trf.xlu0
  %v444 = vpop.trf.xlu0
  %v445 = vpop.trf.xlu0
  %v446 = vpop.trf.xlu0
  %v447 = vpop.trf.xlu0
  %v448 = vpop.trf.xlu0
  %v449 = vpop.trf.xlu0
  %vm450 = vcmask 64512
  %v452 = vsel %vm450, %v426, 0
  %v455 = vsel %vm450, %v427, 0
  %v458 = vsel %vm450, %v428, 0
  %v461 = vsel %vm450, %v429, 0
  %v464 = vsel %vm450, %v430, 0
  %v467 = vsel %vm450, %v431, 0
  %v470 = vsel %vm450, %v432, 0
  %v473 = vsel %vm450, %v433, 0
  %v476 = vsel %vm450, %v442, 0
  %v479 = vsel %vm450, %v443, 0
  %v482 = vsel %vm450, %v444, 0
  %v485 = vsel %vm450, %v445, 0
  %v488 = vsel %vm450, %v446, 0
  %v491 = vsel %vm450, %v447, 0
  %v494 = vsel %vm450, %v448, 0
  %v497 = vsel %vm450, %v449, 0
  %vm499 = vcmask 1043456
  %v501 = vsel %vm499, %v409, 0
  %503 = vmatprep.subr.bf16.mxu0 0
  %504 = vmatpush1.bf16.msra.mxu0 %v501
  %505 = vmatprep.subr.bf16.mxu0 0
  %506 = vmatpush1.bf16.msra.mxu0 0
  %507 = vmatprep.subr.bf16.mxu0 0
  %508 = vmatpush1.bf16.msra.mxu0 0
  %509 = vmatprep.subr.bf16.mxu0 0
  %510 = vmatpush1.bf16.msra.mxu0 0
  %511 = vmatprep.subr.bf16.mxu0 0
  %512 = vmatpush1.bf16.msra.mxu0 0
  %513 = vmatprep.subr.bf16.mxu0 0
  %514 = vmatpush1.bf16.msra.mxu0 0
  %515 = vmatprep.subr.bf16.mxu0 0
  %516 = vmatpush1.bf16.msra.mxu0 0
  %517 = vmatprep.subr.bf16.mxu0 0
  %518 = vmatpush1.bf16.msra.mxu0 0
  %519 = vmatprep.subr.bf16.mxu0 0
  %520 = vmatpush1.bf16.msra.mxu0 0
  %521 = vmatprep.subr.bf16.mxu0 0
  %522 = vmatpush1.bf16.msra.mxu0 0
  %523 = vmatprep.subr.bf16.mxu0 0
  %524 = vmatpush1.bf16.msra.mxu0 0
  %525 = vmatprep.subr.bf16.mxu0 0
  %526 = vmatpush1.bf16.msra.mxu0 0
  %527 = vmatprep.subr.bf16.mxu0 0
  %528 = vmatpush1.bf16.msra.mxu0 0
  %529 = vmatprep.subr.bf16.mxu0 0
  %530 = vmatpush1.bf16.msra.mxu0 0
  %531 = vmatprep.subr.bf16.mxu0 0
  %532 = vmatpush1.bf16.msra.mxu0 0
  %533 = vmatprep.subr.bf16.mxu0 0
  %534 = vmatpush1.bf16.msra.mxu0 0
  %535 = vmatprep.mubr.bf16.mxu0 0
  %536 = vmatmul.mubr.bf16.gmra.mrb[0].mxu0 %v452
  %v537 = vpop.f32.mrb[0].mxu0
  %v538 = vadd.f32 %v417, %v537
  %v539 = vpop.f32.mrb[0].mxu0
  %v540 = vpop.f32.mrb[0].mxu0
  %v541 = vadd.f32 %v417, %v540
  %v542 = vpop.f32.mrb[0].mxu0
  %543 = vmatprep.mubr.bf16.mxu0 0
  %544 = vmatmul.mubr.bf16.gmra.mrb[0].mxu0 %v455
  %v545 = vpop.f32.mrb[0].mxu0
  %v546 = vadd.f32 %v417, %v545
  %v547 = vpop.f32.mrb[0].mxu0
  %v548 = vpop.f32.mrb[0].mxu0
  %v549 = vadd.f32 %v417, %v548
  %v550 = vpop.f32.mrb[0].mxu0
  %551 = vmatprep.mubr.bf16.mxu0 0
  %552 = vmatmul.mubr.bf16.gmra.mrb[0].mxu0 %v458
  %v553 = vpop.f32.mrb[0].mxu0
  %v554 = vadd.f32 %v417, %v553
  %v555 = vpop.f32.mrb[0].mxu0
  %v556 = vpop.f32.mrb[0].mxu0
  %v557 = vadd.f32 %v417, %v556
  %v558 = vpop.f32.mrb[0].mxu0
  %559 = vmatprep.mubr.bf16.mxu0 0
  %560 = vmatmul.mubr.bf16.gmra.mrb[0].mxu0 %v461
  %v561 = vpop.f32.mrb[0].mxu0
  %v562 = vadd.f32 %v417, %v561
  %v563 = vpop.f32.mrb[0].mxu0
  %v564 = vpop.f32.mrb[0].mxu0
  %v565 = vadd.f32 %v417, %v564
  %v566 = vpop.f32.mrb[0].mxu0
  %567 = vmatprep.mubr.bf16.mxu0 0
  %568 = vmatmul.mubr.bf16.gmra.mrb[0].mxu0 %v464
  %v569 = vpop.f32.mrb[0].mxu0
  %v570 = vadd.f32 %v417, %v569
  %v571 = vpop.f32.mrb[0].mxu0
  %v572 = vpop.f32.mrb[0].mxu0
  %v573 = vadd.f32 %v417, %v572
  %v574 = vpop.f32.mrb[0].mxu0
  %575 = vmatprep.mubr.bf16.mxu0 0
  %576 = vmatmul.mubr.bf16.gmra.mrb[0].mxu0 %v467
  %v577 = vpop.f32.mrb[0].mxu0
  %v578 = vadd.f32 %v417, %v577
  %v579 = vpop.f32.mrb[0].mxu0
  %v580 = vpop.f32.mrb[0].mxu0
  %v581 = vadd.f32 %v417, %v580
  %v582 = vpop.f32.mrb[0].mxu0
  %583 = vmatprep.mubr.bf16.mxu0 0
  %584 = vmatmul.mubr.bf16.gmra.mrb[0].mxu0 %v470
  %v585 = vpop.f32.mrb[0].mxu0
  %v586 = vadd.f32 %v417, %v585
  %v587 = vpop.f32.mrb[0].mxu0
  %v588 = vpop.f32.mrb[0].mxu0
  %v589 = vadd.f32 %v417, %v588
  %v590 = vpop.f32.mrb[0].mxu0
  %591 = vmatprep.mubr.bf16.mxu0 0
  %592 = vmatmul.mubr.bf16.gmra.mrb[0].mxu0 %v473
  %v593 = vpop.f32.mrb[0].mxu0
  %v594 = vadd.f32 %v417, %v593
  %v595 = vpop.f32.mrb[0].mxu0
  %v596 = vpop.f32.mrb[0].mxu0
  %v597 = vadd.f32 %v417, %v596
  %v598 = vpop.f32.mrb[0].mxu0
  %599 = vmatprep.mubr.bf16.mxu0 0
  %600 = vmatmul.mubr.bf16.gmra.mrb[0].mxu0 %v476
  %v601 = vpop.f32.mrb[0].mxu0
  %v602 = vadd.f32 %v417, %v601
  %v603 = vpop.f32.mrb[0].mxu0
  %v604 = vpop.f32.mrb[0].mxu0
  %v605 = vadd.f32 %v417, %v604
  %v606 = vpop.f32.mrb[0].mxu0
  %607 = vmatprep.mubr.bf16.mxu0 0
  %608 = vmatmul.mubr.bf16.gmra.mrb[0].mxu0 %v479
  %v609 = vpop.f32.mrb[0].mxu0
  %v610 = vadd.f32 %v417, %v609
  %v611 = vpop.f32.mrb[0].mxu0
  %v612 = vpop.f32.mrb[0].mxu0
  %v613 = vadd.f32 %v417, %v612
  %v614 = vpop.f32.mrb[0].mxu0
  %615 = vmatprep.mubr.bf16.mxu0 0
  %616 = vmatmul.mubr.bf16.gmra.mrb[0].mxu0 %v482
  %v617 = vpop.f32.mrb[0].mxu0
  %v618 = vadd.f32 %v417, %v617
  %v619 = vpop.f32.mrb[0].mxu0
  %v620 = vpop.f32.mrb[0].mxu0
  %v621 = vadd.f32 %v417, %v620
  %v622 = vpop.f32.mrb[0].mxu0
  %623 = vmatprep.mubr.bf16.mxu0 0
  %624 = vmatmul.mubr.bf16.gmra.mrb[0].mxu0 %v485
  %v625 = vpop.f32.mrb[0].mxu0
  %v626 = vadd.f32 %v417, %v625
  %v627 = vpop.f32.mrb[0].mxu0
  %v628 = vpop.f32.mrb[0].mxu0
  %v629 = vadd.f32 %v417, %v628
  %v630 = vpop.f32.mrb[0].mxu0
  %631 = vmatprep.mubr.bf16.mxu0 0
  %632 = vmatmul.mubr.bf16.gmra.mrb[0].mxu0 %v488
  %v633 = vpop.f32.mrb[0].mxu0
  %v634 = vadd.f32 %v417, %v633
  %v635 = vpop.f32.mrb[0].mxu0
  %v636 = vpop.f32.mrb[0].mxu0
  %v637 = vadd.f32 %v417, %v636
  %v638 = vpop.f32.mrb[0].mxu0
  %639 = vmatprep.mubr.bf16.mxu0 0
  %640 = vmatmul.mubr.bf16.gmra.mrb[0].mxu0 %v491
  %v641 = vpop.f32.mrb[0].mxu0
  %v642 = vadd.f32 %v417, %v641
  %v643 = vpop.f32.mrb[0].mxu0
  %v644 = vpop.f32.mrb[0].mxu0
  %v645 = vadd.f32 %v417, %v644
  %v646 = vpop.f32.mrb[0].mxu0
  %647 = vmatprep.mubr.bf16.mxu0 0
  %648 = vmatmul.mubr.bf16.gmra.mrb[0].mxu0 %v494
  %v649 = vpop.f32.mrb[0].mxu0
  %v650 = vadd.f32 %v417, %v649
  %v651 = vpop.f32.mrb[0].mxu0
  %v652 = vpop.f32.mrb[0].mxu0
  %v653 = vadd.f32 %v417, %v652
  %v654 = vpop.f32.mrb[0].mxu0
  %655 = vmatprep.mubr.bf16.mxu0 0
  %656 = vmatmul.mubr.bf16.gmra.mrb[0].mxu0 %v497
  %v657 = vpop.f32.mrb[0].mxu0
  %v658 = vadd.f32 %v417, %v657
  %v659 = vpop.f32.mrb[0].mxu0
  %v660 = vpop.f32.mrb[0].mxu0
  %v661 = vadd.f32 %v417, %v660
  %v662 = vpop.f32.mrb[0].mxu0
  %663 = vdwg.mxu0
  %s664 = scalar_lea.vmem %s0, 16
  %v665 = vld [vmem:[%s664] sm:$0xff]
  %v666 = vld [vmem:[%s664 + $0x8] sm:$0xff]
  %v667 = vpack.c.bf16 %v665, %v665
  %v668 = vpack.c.bf16 %v666, %v666
  %v669 = vlaneseq
  %v670 = vshrl.u32 %v669, 7
  %v671 = vsub.s32 1, %v670
  %v672 = vrot.slane %v408, %v671
  %673 = vxpose.xlu0.c.b16.start [1/8] %v667, 128
  %674 = vxpose.xlu0.c.b16.cont [2/8] 0, 128
  %675 = vxpose.xlu0.c.b16.cont [3/8] 0, 128
  %676 = vxpose.xlu0.c.b16.cont [4/8] 0, 128
  %677 = vxpose.xlu0.c.b16.cont [5/8] 0, 128
  %678 = vxpose.xlu0.c.b16.cont [6/8] 0, 128
  %679 = vxpose.xlu0.c.b16.cont [7/8] 0, 128
  %680 = vxpose.xlu0.c.b16.end [8/8] 0, 128
  %v681 = vpop.trf.xlu0
  %v682 = vpop.trf.xlu0
  %v683 = vpop.trf.xlu0
  %v684 = vpop.trf.xlu0
  %v685 = vpop.trf.xlu0
  %v686 = vpop.trf.xlu0
  %v687 = vpop.trf.xlu0
  %v688 = vpop.trf.xlu0
  %689 = vxpose.xlu0.c.b16.start [1/8] %v668, 128
  %690 = vxpose.xlu0.c.b16.cont [2/8] 0, 128
  %691 = vxpose.xlu0.c.b16.cont [3/8] 0, 128
  %692 = vxpose.xlu0.c.b16.cont [4/8] 0, 128
  %693 = vxpose.xlu0.c.b16.cont [5/8] 0, 128
  %694 = vxpose.xlu0.c.b16.cont [6/8] 0, 128
  %695 = vxpose.xlu0.c.b16.cont [7/8] 0, 128
  %696 = vxpose.xlu0.c.b16.end [8/8] 0, 128
  %v697 = vpop.trf.xlu0
  %v698 = vpop.trf.xlu0
  %v699 = vpop.trf.xlu0
  %v700 = vpop.trf.xlu0
  %v701 = vpop.trf.xlu0
  %v702 = vpop.trf.xlu0
  %v703 = vpop.trf.xlu0
  %v704 = vpop.trf.xlu0
  %v706 = vsel %vm450, %v681, 0
  %v709 = vsel %vm450, %v682, 0
  %v712 = vsel %vm450, %v683, 0
  %v715 = vsel %vm450, %v684, 0
  %v718 = vsel %vm450, %v685, 0
  %v721 = vsel %vm450, %v686, 0
  %v724 = vsel %vm450, %v687, 0
  %v727 = vsel %vm450, %v688, 0
  %v730 = vsel %vm450, %v697, 0
  %v733 = vsel %vm450, %v698, 0
  %v736 = vsel %vm450, %v699, 0
  %v739 = vsel %vm450, %v700, 0
  %v742 = vsel %vm450, %v701, 0
  %v745 = vsel %vm450, %v702, 0
  %v748 = vsel %vm450, %v703, 0
  %v751 = vsel %vm450, %v704, 0
  %753 = vmatprep.subr.bf16.mxu0 0
  %754 = vmatpush1.bf16.msra.mxu0 %v501
  %755 = vmatprep.subr.bf16.mxu0 0
  %756 = vmatpush1.bf16.msra.mxu0 0
  %757 = vmatprep.subr.bf16.mxu0 0
  %758 = vmatpush1.bf16.msra.mxu0 0
  %759 = vmatprep.subr.bf16.mxu0 0
  %760 = vmatpush1.bf16.msra.mxu0 0
  %761 = vmatprep.subr.bf16.mxu0 0
  %762 = vmatpush1.bf16.msra.mxu0 0
  %763 = vmatprep.subr.bf16.mxu0 0
  %764 = vmatpush1.bf16.msra.mxu0 0
  %765 = vmatprep.subr.bf16.mxu0 0
  %766 = vmatpush1.bf16.msra.mxu0 0
  %767 = vmatprep.subr.bf16.mxu0 0
  %768 = vmatpush1.bf16.msra.mxu0 0
  %769 = vmatprep.subr.bf16.mxu0 0
  %770 = vmatpush1.bf16.msra.mxu0 0
  %771 = vmatprep.subr.bf16.mxu0 0
  %772 = vmatpush1.bf16.msra.mxu0 0
  %773 = vmatprep.subr.bf16.mxu0 0
  %774 = vmatpush1.bf16.msra.mxu0 0
  %775 = vmatprep.subr.bf16.mxu0 0
  %776 = vmatpush1.bf16.msra.mxu0 0
  %777 = vmatprep.subr.bf16.mxu0 0
  %778 = vmatpush1.bf16.msra.mxu0 0
  %779 = vmatprep.subr.bf16.mxu0 0
  %780 = vmatpush1.bf16.msra.mxu0 0
  %781 = vmatprep.subr.bf16.mxu0 0
  %782 = vmatpush1.bf16.msra.mxu0 0
  %783 = vmatprep.subr.bf16.mxu0 0
  %784 = vmatpush1.bf16.msra.mxu0 0
  %785 = vmatprep.mubr.bf16.mxu0 0
  %786 = vmatmul.mubr.bf16.gmra.mrb[0].mxu0 %v706
  %v787 = vpop.f32.mrb[0].mxu0
  %v788 = vadd.f32 %v672, %v787
  %v789 = vpop.f32.mrb[0].mxu0
  %v790 = vpop.f32.mrb[0].mxu0
  %v791 = vadd.f32 %v672, %v790
  %v792 = vpop.f32.mrb[0].mxu0
  %793 = vmatprep.mubr.bf16.mxu0 0
  %794 = vmatmul.mubr.bf16.gmra.mrb[0].mxu0 %v709
  %v795 = vpop.f32.mrb[0].mxu0
  %v796 = vadd.f32 %v672, %v795
  %v797 = vpop.f32.mrb[0].mxu0
  %v798 = vpop.f32.mrb[0].mxu0
  %v799 = vadd.f32 %v672, %v798
  %v800 = vpop.f32.mrb[0].mxu0
  %801 = vmatprep.mubr.bf16.mxu0 0
  %802 = vmatmul.mubr.bf16.gmra.mrb[0].mxu0 %v712
  %v803 = vpop.f32.mrb[0].mxu0
  %v804 = vadd.f32 %v672, %v803
  %v805 = vpop.f32.mrb[0].mxu0
  %v806 = vpop.f32.mrb[0].mxu0
  %v807 = vadd.f32 %v672, %v806
  %v808 = vpop.f32.mrb[0].mxu0
  %809 = vmatprep.mubr.bf16.mxu0 0
  %810 = vmatmul.mubr.bf16.gmra.mrb[0].mxu0 %v715
  %v811 = vpop.f32.mrb[0].mxu0
  %v812 = vadd.f32 %v672, %v811
  %v813 = vpop.f32.mrb[0].mxu0
  %v814 = vpop.f32.mrb[0].mxu0
  %v815 = vadd.f32 %v672, %v814
  %v816 = vpop.f32.mrb[0].mxu0
  %817 = vmatprep.mubr.bf16.mxu0 0
  %818 = vmatmul.mubr.bf16.gmra.mrb[0].mxu0 %v718
  %v819 = vpop.f32.mrb[0].mxu0
  %v820 = vadd.f32 %v672, %v819
  %v821 = vpop.f32.mrb[0].mxu0
  %v822 = vpop.f32.mrb[0].mxu0
  %v823 = vadd.f32 %v672, %v822
  %v824 = vpop.f32.mrb[0].mxu0
  %825 = vmatprep.mubr.bf16.mxu0 0
  %826 = vmatmul.mubr.bf16.gmra.mrb[0].mxu0 %v721
  %v827 = vpop.f32.mrb[0].mxu0
  %v828 = vadd.f32 %v672, %v827
  %v829 = vpop.f32.mrb[0].mxu0
  %v830 = vpop.f32.mrb[0].mxu0
  %v831 = vadd.f32 %v672, %v830
  %v832 = vpop.f32.mrb[0].mxu0
  %833 = vmatprep.mubr.bf16.mxu0 0
  %834 = vmatmul.mubr.bf16.gmra.mrb[0].mxu0 %v724
  %v835 = vpop.f32.mrb[0].mxu0
  %v836 = vadd.f32 %v672, %v835
  %v837 = vpop.f32.mrb[0].mxu0
  %v838 = vpop.f32.mrb[0].mxu0
  %v839 = vadd.f32 %v672, %v838
  %v840 = vpop.f32.mrb[0].mxu0
  %841 = vmatprep.mubr.bf16.mxu0 0
  %842 = vmatmul.mubr.bf16.gmra.mrb[0].mxu0 %v727
  %v843 = vpop.f32.mrb[0].mxu0
  %v844 = vadd.f32 %v672, %v843
  %v845 = vpop.f32.mrb[0].mxu0
  %v846 = vpop.f32.mrb[0].mxu0
  %v847 = vadd.f32 %v672, %v846
  %v848 = vpop.f32.mrb[0].mxu0
  %849 = vmatprep.mubr.bf16.mxu0 0
  %850 = vmatmul.mubr.bf16.gmra.mrb[0].mxu0 %v730
  %v851 = vpop.f32.mrb[0].mxu0
  %v852 = vadd.f32 %v672, %v851
  %v853 = vpop.f32.mrb[0].mxu0
  %v854 = vpop.f32.mrb[0].mxu0
  %v855 = vadd.f32 %v672, %v854
  %v856 = vpop.f32.mrb[0].mxu0
  %857 = vmatprep.mubr.bf16.mxu0 0
  %858 = vmatmul.mubr.bf16.gmra.mrb[0].mxu0 %v733
  %v859 = vpop.f32.mrb[0].mxu0
  %v860 = vadd.f32 %v672, %v859
  %v861 = vpop.f32.mrb[0].mxu0
  %v862 = vpop.f32.mrb[0].mxu0
  %v863 = vadd.f32 %v672, %v862
  %v864 = vpop.f32.mrb[0].mxu0
  %865 = vmatprep.mubr.bf16.mxu0 0
  %866 = vmatmul.mubr.bf16.gmra.mrb[0].mxu0 %v736
  %v867 = vpop.f32.mrb[0].mxu0
  %v868 = vadd.f32 %v672, %v867
  %v869 = vpop.f32.mrb[0].mxu0
  %v870 = vpop.f32.mrb[0].mxu0
  %v871 = vadd.f32 %v672, %v870
  %v872 = vpop.f32.mrb[0].mxu0
  %873 = vmatprep.mubr.bf16.mxu0 0
  %874 = vmatmul.mubr.bf16.gmra.mrb[0].mxu0 %v739
  %v875 = vpop.f32.mrb[0].mxu0
  %v876 = vadd.f32 %v672, %v875
  %v877 = vpop.f32.mrb[0].mxu0
  %v878 = vpop.f32.mrb[0].mxu0
  %v879 = vadd.f32 %v672, %v878
  %v880 = vpop.f32.mrb[0].mxu0
  %881 = vmatprep.mubr.bf16.mxu0 0
  %882 = vmatmul.mubr.bf16.gmra.mrb[0].mxu0 %v742
  %v883 = vpop.f32.mrb[0].mxu0
  %v884 = vadd.f32 %v672, %v883
  %v885 = vpop.f32.mrb[0].mxu0
  %v886 = vpop.f32.mrb[0].mxu0
  %v887 = vadd.f32 %v672, %v886
  %v888 = vpop.f32.mrb[0].mxu0
  %889 = vmatprep.mubr.bf16.mxu0 0
  %890 = vmatmul.mubr.bf16.gmra.mrb[0].mxu0 %v745
  %v891 = vpop.f32.mrb[0].mxu0
  %v892 = vadd.f32 %v672, %v891
  %v893 = vpop.f32.mrb[0].mxu0
  %v894 = vpop.f32.mrb[0].mxu0
  %v895 = vadd.f32 %v672, %v894
  %v896 = vpop.f32.mrb[0].mxu0
  %897 = vmatprep.mubr.bf16.mxu0 0
  %898 = vmatmul.mubr.bf16.gmra.mrb[0].mxu0 %v748
  %v899 = vpop.f32.mrb[0].mxu0
  %v900 = vadd.f32 %v672, %v899
  %v901 = vpop.f32.mrb[0].mxu0
  %v902 = vpop.f32.mrb[0].mxu0
  %v903 = vadd.f32 %v672, %v902
  %v904 = vpop.f32.mrb[0].mxu0
  %905 = vmatprep.mubr.bf16.mxu0 0
  %906 = vmatmul.mubr.bf16.gmra.mrb[0].mxu0 %v751
  %v907 = vpop.f32.mrb[0].mxu0
  %v908 = vadd.f32 %v672, %v907
  %v909 = vpop.f32.mrb[0].mxu0
  %v910 = vpop.f32.mrb[0].mxu0
  %v911 = vadd.f32 %v672, %v910
  %v912 = vpop.f32.mrb[0].mxu0
  %913 = vdwg.mxu0
  %v914 = vpack.c.bf16 %v541, %v538
  %v915 = vpack.c.bf16 %v549, %v546
  %v916 = vpack.c.bf16 %v557, %v554
  %v917 = vpack.c.bf16 %v565, %v562
  %v918 = vpack.c.bf16 %v573, %v570
  %v919 = vpack.c.bf16 %v581, %v578
  %v920 = vpack.c.bf16 %v589, %v586
  %v921 = vpack.c.bf16 %v597, %v594
  %v922 = vpack.c.bf16 %v605, %v602
  %v923 = vpack.c.bf16 %v613, %v610
  %v924 = vpack.c.bf16 %v621, %v618
  %v925 = vpack.c.bf16 %v629, %v626
  %v926 = vpack.c.bf16 %v637, %v634
  %v927 = vpack.c.bf16 %v645, %v642
  %v928 = vpack.c.bf16 %v653, %v650
  %v929 = vpack.c.bf16 %v661, %v658
  %v930 = vpack.c.bf16 %v791, %v788
  %v931 = vpack.c.bf16 %v799, %v796
  %v932 = vpack.c.bf16 %v807, %v804
  %v933 = vpack.c.bf16 %v815, %v812
  %v934 = vpack.c.bf16 %v823, %v820
  %v935 = vpack.c.bf16 %v831, %v828
  %v936 = vpack.c.bf16 %v839, %v836
  %v937 = vpack.c.bf16 %v847, %v844
  %v938 = vpack.c.bf16 %v855, %v852
  %v939 = vpack.c.bf16 %v863, %v860
  %v940 = vpack.c.bf16 %v871, %v868
  %v941 = vpack.c.bf16 %v879, %v876
  %v942 = vpack.c.bf16 %v887, %v884
  %v943 = vpack.c.bf16 %v895, %v892
  %v944 = vpack.c.bf16 %v903, %v900
  %v945 = vpack.c.bf16 %v911, %v908
  %v946 = vld [vmem:[%s14] sm:$0xf]
  %v947 = vld [vmem:[%s14 + $0x4] sm:$0xf]
  %v948 = vld [vmem:[%s14 + $0x8] sm:$0xf]
  %v949 = vld [vmem:[%s14 + $0xc] sm:$0xf]
  %v950 = vld [vmem:[%s14 + $0x10] sm:$0xf]
  %v951 = vld [vmem:[%s14 + $0x14] sm:$0xf]
  %v952 = vld [vmem:[%s14 + $0x18] sm:$0xf]
  %v953 = vld [vmem:[%s14 + $0x1c] sm:$0xf]
  %v954 = vld [vmem:[%s14 + $0x20] sm:$0xf]
  %v955 = vld [vmem:[%s14 + $0x24] sm:$0xf]
  %v956 = vld [vmem:[%s14 + $0x28] sm:$0xf]
  %v957 = vld [vmem:[%s14 + $0x2c] sm:$0xf]
  %v958 = vld [vmem:[%s14 + $0x30] sm:$0xf]
  %v959 = vld [vmem:[%s14 + $0x34] sm:$0xf]
  %v960 = vld [vmem:[%s14 + $0x38] sm:$0xf]
  %v961 = vld [vmem:[%s14 + $0x3c] sm:$0xf]
  %v962 = vld [vmem:[%s15] sm:$0x1]
  %v964 = vlaneseq
  %v965 = vshrl.u32 %v964, 7
  %v966 = vsub.s32 0, %v965
  %v967 = vrot.slane %v962, %v966
  %v985 = vunpack.c.l.b16 %v946
  %v986 = vunpack.c.l.b16 %v947
  %v987 = vunpack.c.l.b16 %v948
  %v988 = vunpack.c.l.b16 %v949
  %v989 = vunpack.c.l.b16 %v950
  %v990 = vunpack.c.l.b16 %v951
  %v991 = vunpack.c.l.b16 %v952
  %v992 = vunpack.c.l.b16 %v953
  %v993 = vunpack.c.l.b16 %v954
  %v994 = vunpack.c.l.b16 %v955
  %v995 = vunpack.c.l.b16 %v956
  %v996 = vunpack.c.l.b16 %v957
  %v997 = vunpack.c.l.b16 %v958
  %v998 = vunpack.c.l.b16 %v959
  %v999 = vunpack.c.l.b16 %v960
  %v1000 = vunpack.c.l.b16 %v961
  %v1001 = vpack.c.b16 %v986, %v985
  %v1002 = vpack.c.b16 %v988, %v987
  %v1003 = vpack.c.b16 %v990, %v989
  %v1004 = vpack.c.b16 %v992, %v991
  %v1005 = vpack.c.b16 %v994, %v993
  %v1006 = vpack.c.b16 %v996, %v995
  %v1007 = vpack.c.b16 %v998, %v997
  %v1008 = vpack.c.b16 %v1000, %v999
  %1017 = vmatprep.subr.bf16.mxu0 0
  %1018 = vmatpush1.bf16.msra.mxu0 %v1001
  %1019 = vmatprep.subr.bf16.mxu0 0
  %1020 = vmatpush1.bf16.msra.mxu0 %v1002
  %1021 = vmatprep.subr.bf16.mxu0 0
  %1022 = vmatpush1.bf16.msra.mxu0 %v1003
  %1023 = vmatprep.subr.bf16.mxu0 0
  %1024 = vmatpush1.bf16.msra.mxu0 %v1004
  %1025 = vmatprep.subr.bf16.mxu0 0
  %1026 = vmatpush1.bf16.msra.mxu0 %v1005
  %1027 = vmatprep.subr.bf16.mxu0 0
  %1028 = vmatpush1.bf16.msra.mxu0 %v1006
  %1029 = vmatprep.subr.bf16.mxu0 0
  %1030 = vmatpush1.bf16.msra.mxu0 %v1007
  %1031 = vmatprep.subr.bf16.mxu0 0
  %1032 = vmatpush1.bf16.msra.mxu0 %v1008
  %1033 = vmatprep.subr.bf16.mxu0 0
  %1034 = vmatpush1.bf16.msra.mxu0 0
  %1035 = vmatprep.subr.bf16.mxu0 0
  %1036 = vmatpush1.bf16.msra.mxu0 0
  %1037 = vmatprep.subr.bf16.mxu0 0
  %1038 = vmatpush1.bf16.msra.mxu0 0
  %1039 = vmatprep.subr.bf16.mxu0 0
  %1040 = vmatpush1.bf16.msra.mxu0 0
  %1041 = vmatprep.subr.bf16.mxu0 0
  %1042 = vmatpush1.bf16.msra.mxu0 0
  %1043 = vmatprep.subr.bf16.mxu0 0
  %1044 = vmatpush1.bf16.msra.mxu0 0
  %1045 = vmatprep.subr.bf16.mxu0 0
  %1046 = vmatpush1.bf16.msra.mxu0 0
  %1047 = vmatprep.subr.bf16.mxu0 0
  %1048 = vmatpush1.bf16.msra.mxu0 0
  %1049 = vmatprep.mubr.bf16.mxu0 0
  %1050 = vmatmul.mubr.bf16.gmra.mrb[0].mxu0 %v914
  %v1051 = vpop.f32.mrb[0].mxu0
  %v1052 = vadd.f32 %v967, %v1051
  %v1053 = vpop.f32.mrb[0].mxu0
  %v1054 = vpop.f32.mrb[0].mxu0
  %v1055 = vadd.f32 %v967, %v1054
  %v1056 = vpop.f32.mrb[0].mxu0
  %1057 = vmatprep.mubr.bf16.mxu0 0
  %1058 = vmatmul.mubr.bf16.gmra.mrb[0].mxu0 %v915
  %v1059 = vpop.f32.mrb[0].mxu0
  %v1060 = vadd.f32 %v967, %v1059
  %v1061 = vpop.f32.mrb[0].mxu0
  %v1062 = vpop.f32.mrb[0].mxu0
  %v1063 = vadd.f32 %v967, %v1062
  %v1064 = vpop.f32.mrb[0].mxu0
  %1065 = vmatprep.mubr.bf16.mxu0 0
  %1066 = vmatmul.mubr.bf16.gmra.mrb[0].mxu0 %v916
  %v1067 = vpop.f32.mrb[0].mxu0
  %v1068 = vadd.f32 %v967, %v1067
  %v1069 = vpop.f32.mrb[0].mxu0
  %v1070 = vpop.f32.mrb[0].mxu0
  %v1071 = vadd.f32 %v967, %v1070
  %v1072 = vpop.f32.mrb[0].mxu0
  %1073 = vmatprep.mubr.bf16.mxu0 0
  %1074 = vmatmul.mubr.bf16.gmra.mrb[0].mxu0 %v917
  %v1075 = vpop.f32.mrb[0].mxu0
  %v1076 = vadd.f32 %v967, %v1075
  %v1077 = vpop.f32.mrb[0].mxu0
  %v1078 = vpop.f32.mrb[0].mxu0
  %v1079 = vadd.f32 %v967, %v1078
  %v1080 = vpop.f32.mrb[0].mxu0
  %1081 = vmatprep.mubr.bf16.mxu0 0
  %1082 = vmatmul.mubr.bf16.gmra.mrb[0].mxu0 %v918
  %v1083 = vpop.f32.mrb[0].mxu0
  %v1084 = vadd.f32 %v967, %v1083
  %v1085 = vpop.f32.mrb[0].mxu0
  %v1086 = vpop.f32.mrb[0].mxu0
  %v1087 = vadd.f32 %v967, %v1086
  %v1088 = vpop.f32.mrb[0].mxu0
  %1089 = vmatprep.mubr.bf16.mxu0 0
  %1090 = vmatmul.mubr.bf16.gmra.mrb[0].mxu0 %v919
  %v1091 = vpop.f32.mrb[0].mxu0
  %v1092 = vadd.f32 %v967, %v1091
  %v1093 = vpop.f32.mrb[0].mxu0
  %v1094 = vpop.f32.mrb[0].mxu0
  %v1095 = vadd.f32 %v967, %v1094
  %v1096 = vpop.f32.mrb[0].mxu0
  %1097 = vmatprep.mubr.bf16.mxu0 0
  %1098 = vmatmul.mubr.bf16.gmra.mrb[0].mxu0 %v920
  %v1099 = vpop.f32.mrb[0].mxu0
  %v1100 = vadd.f32 %v967, %v1099
  %v1101 = vpop.f32.mrb[0].mxu0
  %v1102 = vpop.f32.mrb[0].mxu0
  %v1103 = vadd.f32 %v967, %v1102
  %v1104 = vpop.f32.mrb[0].mxu0
  %1105 = vmatprep.mubr.bf16.mxu0 0
  %1106 = vmatmul.mubr.bf16.gmra.mrb[0].mxu0 %v921
  %v1107 = vpop.f32.mrb[0].mxu0
  %v1108 = vadd.f32 %v967, %v1107
  %v1109 = vpop.f32.mrb[0].mxu0
  %v1110 = vpop.f32.mrb[0].mxu0
  %v1111 = vadd.f32 %v967, %v1110
  %v1112 = vpop.f32.mrb[0].mxu0
  %1113 = vmatprep.mubr.bf16.mxu0 0
  %1114 = vmatmul.mubr.bf16.gmra.mrb[0].mxu0 %v922
  %v1115 = vpop.f32.mrb[0].mxu0
  %v1116 = vadd.f32 %v967, %v1115
  %v1117 = vpop.f32.mrb[0].mxu0
  %v1118 = vpop.f32.mrb[0].mxu0
  %v1119 = vadd.f32 %v967, %v1118
  %v1120 = vpop.f32.mrb[0].mxu0
  %1121 = vmatprep.mubr.bf16.mxu0 0
  %1122 = vmatmul.mubr.bf16.gmra.mrb[0].mxu0 %v923
  %v1123 = vpop.f32.mrb[0].mxu0
  %v1124 = vadd.f32 %v967, %v1123
  %v1125 = vpop.f32.mrb[0].mxu0
  %v1126 = vpop.f32.mrb[0].mxu0
  %v1127 = vadd.f32 %v967, %v1126
  %v1128 = vpop.f32.mrb[0].mxu0
  %1129 = vmatprep.mubr.bf16.mxu0 0
  %1130 = vmatmul.mubr.bf16.gmra.mrb[0].mxu0 %v924
  %v1131 = vpop.f32.mrb[0].mxu0
  %v1132 = vadd.f32 %v967, %v1131
  %v1133 = vpop.f32.mrb[0].mxu0
  %v1134 = vpop.f32.mrb[0].mxu0
  %v1135 = vadd.f32 %v967, %v1134
  %v1136 = vpop.f32.mrb[0].mxu0
  %1137 = vmatprep.mubr.bf16.mxu0 0
  %1138 = vmatmul.mubr.bf16.gmra.mrb[0].mxu0 %v925
  %v1139 = vpop.f32.mrb[0].mxu0
  %v1140 = vadd.f32 %v967, %v1139
  %v1141 = vpop.f32.mrb[0].mxu0
  %v1142 = vpop.f32.mrb[0].mxu0
  %v1143 = vadd.f32 %v967, %v1142
  %v1144 = vpop.f32.mrb[0].mxu0
  %1145 = vmatprep.mubr.bf16.mxu0 0
  %1146 = vmatmul.mubr.bf16.gmra.mrb[0].mxu0 %v926
  %v1147 = vpop.f32.mrb[0].mxu0
  %v1148 = vadd.f32 %v967, %v1147
  %v1149 = vpop.f32.mrb[0].mxu0
  %v1150 = vpop.f32.mrb[0].mxu0
  %v1151 = vadd.f32 %v967, %v1150
  %v1152 = vpop.f32.mrb[0].mxu0
  %1153 = vmatprep.mubr.bf16.mxu0 0
  %1154 = vmatmul.mubr.bf16.gmra.mrb[0].mxu0 %v927
  %v1155 = vpop.f32.mrb[0].mxu0
  %v1156 = vadd.f32 %v967, %v1155
  %v1157 = vpop.f32.mrb[0].mxu0
  %v1158 = vpop.f32.mrb[0].mxu0
  %v1159 = vadd.f32 %v967, %v1158
  %v1160 = vpop.f32.mrb[0].mxu0
  %1161 = vmatprep.mubr.bf16.mxu0 0
  %1162 = vmatmul.mubr.bf16.gmra.mrb[0].mxu0 %v928
  %v1163 = vpop.f32.mrb[0].mxu0
  %v1164 = vadd.f32 %v967, %v1163
  %v1165 = vpop.f32.mrb[0].mxu0
  %v1166 = vpop.f32.mrb[0].mxu0
  %v1167 = vadd.f32 %v967, %v1166
  %v1168 = vpop.f32.mrb[0].mxu0
  %1169 = vmatprep.mubr.bf16.mxu0 0
  %1170 = vmatmul.mubr.bf16.gmra.mrb[0].mxu0 %v929
  %v1171 = vpop.f32.mrb[0].mxu0
  %v1172 = vadd.f32 %v967, %v1171
  %v1173 = vpop.f32.mrb[0].mxu0
  %v1174 = vpop.f32.mrb[0].mxu0
  %v1175 = vadd.f32 %v967, %v1174
  %v1176 = vpop.f32.mrb[0].mxu0
  %1177 = vmatprep.mubr.bf16.mxu0 0
  %1178 = vmatmul.mubr.bf16.gmra.mrb[0].mxu0 %v930
  %v1179 = vpop.f32.mrb[0].mxu0
  %v1180 = vadd.f32 %v967, %v1179
  %v1181 = vpop.f32.mrb[0].mxu0
  %v1182 = vpop.f32.mrb[0].mxu0
  %v1183 = vadd.f32 %v967, %v1182
  %v1184 = vpop.f32.mrb[0].mxu0
  %1185 = vmatprep.mubr.bf16.mxu0 0
  %1186 = vmatmul.mubr.bf16.gmra.mrb[0].mxu0 %v931
  %v1187 = vpop.f32.mrb[0].mxu0
  %v1188 = vadd.f32 %v967, %v1187
  %v1189 = vpop.f32.mrb[0].mxu0
  %v1190 = vpop.f32.mrb[0].mxu0
  %v1191 = vadd.f32 %v967, %v1190
  %v1192 = vpop.f32.mrb[0].mxu0
  %1193 = vmatprep.mubr.bf16.mxu0 0
  %1194 = vmatmul.mubr.bf16.gmra.mrb[0].mxu0 %v932
  %v1195 = vpop.f32.mrb[0].mxu0
  %v1196 = vadd.f32 %v967, %v1195
  %v1197 = vpop.f32.mrb[0].mxu0
  %v1198 = vpop.f32.mrb[0].mxu0
  %v1199 = vadd.f32 %v967, %v1198
  %v1200 = vpop.f32.mrb[0].mxu0
  %1201 = vmatprep.mubr.bf16.mxu0 0
  %1202 = vmatmul.mubr.bf16.gmra.mrb[0].mxu0 %v933
  %v1203 = vpop.f32.mrb[0].mxu0
  %v1204 = vadd.f32 %v967, %v1203
  %v1205 = vpop.f32.mrb[0].mxu0
  %v1206 = vpop.f32.mrb[0].mxu0
  %v1207 = vadd.f32 %v967, %v1206
  %v1208 = vpop.f32.mrb[0].mxu0
  %1209 = vmatprep.mubr.bf16.mxu0 0
  %1210 = vmatmul.mubr.bf16.gmra.mrb[0].mxu0 %v934
  %v1211 = vpop.f32.mrb[0].mxu0
  %v1212 = vadd.f32 %v967, %v1211
  %v1213 = vpop.f32.mrb[0].mxu0
  %v1214 = vpop.f32.mrb[0].mxu0
  %v1215 = vadd.f32 %v967, %v1214
  %v1216 = vpop.f32.mrb[0].mxu0
  %1217 = vmatprep.mubr.bf16.mxu0 0
  %1218 = vmatmul.mubr.bf16.gmra.mrb[0].mxu0 %v935
  %v1219 = vpop.f32.mrb[0].mxu0
  %v1220 = vadd.f32 %v967, %v1219
  %v1221 = vpop.f32.mrb[0].mxu0
  %v1222 = vpop.f32.mrb[0].mxu0
  %v1223 = vadd.f32 %v967, %v1222
  %v1224 = vpop.f32.mrb[0].mxu0
  %1225 = vmatprep.mubr.bf16.mxu0 0
  %1226 = vmatmul.mubr.bf16.gmra.mrb[0].mxu0 %v936
  %v1227 = vpop.f32.mrb[0].mxu0
  %v1228 = vadd.f32 %v967, %v1227
  %v1229 = vpop.f32.mrb[0].mxu0
  %v1230 = vpop.f32.mrb[0].mxu0
  %v1231 = vadd.f32 %v967, %v1230
  %v1232 = vpop.f32.mrb[0].mxu0
  %1233 = vmatprep.mubr.bf16.mxu0 0
  %1234 = vmatmul.mubr.bf16.gmra.mrb[0].mxu0 %v937
  %v1235 = vpop.f32.mrb[0].mxu0
  %v1236 = vadd.f32 %v967, %v1235
  %v1237 = vpop.f32.mrb[0].mxu0
  %v1238 = vpop.f32.mrb[0].mxu0
  %v1239 = vadd.f32 %v967, %v1238
  %v1240 = vpop.f32.mrb[0].mxu0
  %1241 = vmatprep.mubr.bf16.mxu0 0
  %1242 = vmatmul.mubr.bf16.gmra.mrb[0].mxu0 %v938
  %v1243 = vpop.f32.mrb[0].mxu0
  %v1244 = vadd.f32 %v967, %v1243
  %v1245 = vpop.f32.mrb[0].mxu0
  %v1246 = vpop.f32.mrb[0].mxu0
  %v1247 = vadd.f32 %v967, %v1246
  %v1248 = vpop.f32.mrb[0].mxu0
  %1249 = vmatprep.mubr.bf16.mxu0 0
  %1250 = vmatmul.mubr.bf16.gmra.mrb[0].mxu0 %v939
  %v1251 = vpop.f32.mrb[0].mxu0
  %v1252 = vadd.f32 %v967, %v1251
  %v1253 = vpop.f32.mrb[0].mxu0
  %v1254 = vpop.f32.mrb[0].mxu0
  %v1255 = vadd.f32 %v967, %v1254
  %v1256 = vpop.f32.mrb[0].mxu0
  %1257 = vmatprep.mubr.bf16.mxu0 0
  %1258 = vmatmul.mubr.bf16.gmra.mrb[0].mxu0 %v940
  %v1259 = vpop.f32.mrb[0].mxu0
  %v1260 = vadd.f32 %v967, %v1259
  %v1261 = vpop.f32.mrb[0].mxu0
  %v1262 = vpop.f32.mrb[0].mxu0
  %v1263 = vadd.f32 %v967, %v1262
  %v1264 = vpop.f32.mrb[0].mxu0
  %1265 = vmatprep.mubr.bf16.mxu0 0
  %1266 = vmatmul.mubr.bf16.gmra.mrb[0].mxu0 %v941
  %v1267 = vpop.f32.mrb[0].mxu0
  %v1268 = vadd.f32 %v967, %v1267
  %v1269 = vpop.f32.mrb[0].mxu0
  %v1270 = vpop.f32.mrb[0].mxu0
  %v1271 = vadd.f32 %v967, %v1270
  %v1272 = vpop.f32.mrb[0].mxu0
  %1273 = vmatprep.mubr.bf16.mxu0 0
  %1274 = vmatmul.mubr.bf16.gmra.mrb[0].mxu0 %v942
  %v1275 = vpop.f32.mrb[0].mxu0
  %v1276 = vadd.f32 %v967, %v1275
  %v1277 = vpop.f32.mrb[0].mxu0
  %v1278 = vpop.f32.mrb[0].mxu0
  %v1279 = vadd.f32 %v967, %v1278
  %v1280 = vpop.f32.mrb[0].mxu0
  %1281 = vmatprep.mubr.bf16.mxu0 0
  %1282 = vmatmul.mubr.bf16.gmra.mrb[0].mxu0 %v943
  %v1283 = vpop.f32.mrb[0].mxu0
  %v1284 = vadd.f32 %v967, %v1283
  %v1285 = vpop.f32.mrb[0].mxu0
  %v1286 = vpop.f32.mrb[0].mxu0
  %v1287 = vadd.f32 %v967, %v1286
  %v1288 = vpop.f32.mrb[0].mxu0
  %1289 = vmatprep.mubr.bf16.mxu0 0
  %1290 = vmatmul.mubr.bf16.gmra.mrb[0].mxu0 %v944
  %v1291 = vpop.f32.mrb[0].mxu0
  %v1292 = vadd.f32 %v967, %v1291
  %v1293 = vpop.f32.mrb[0].mxu0
  %v1294 = vpop.f32.mrb[0].mxu0
  %v1295 = vadd.f32 %v967, %v1294
  %v1296 = vpop.f32.mrb[0].mxu0
  %1297 = vmatprep.mubr.bf16.mxu0 0
  %1298 = vmatmul.mubr.bf16.gmra.mrb[0].mxu0 %v945
  %v1299 = vpop.f32.mrb[0].mxu0
  %v1300 = vadd.f32 %v967, %v1299
  %v1301 = vpop.f32.mrb[0].mxu0
  %v1302 = vpop.f32.mrb[0].mxu0
  %v1303 = vadd.f32 %v967, %v1302
  %v1304 = vpop.f32.mrb[0].mxu0
  %1305 = vdwg.mxu0
  %v1306 = vld [vmem:[%s16] sm:$0xff]
  %v1307 = vld [vmem:[%s16 + $0x8] sm:$0xff]
  %v1308 = vld [vmem:[%s16 + $0x10] sm:$0xff]
  %v1309 = vld [vmem:[%s16 + $0x18] sm:$0xff]
  %v1310 = vld [vmem:[%s17] sm:$0x3]
  %v1312 = vlaneseq
  %v1313 = vshrl.u32 %v1312, 7
  %v1314 = vsub.s32 0, %v1313
  %v1315 = vrot.slane %v1310, %v1314
  %v1316 = vlaneseq
  %v1317 = vshrl.u32 %v1316, 7
  %v1318 = vsub.s32 1, %v1317
  %v1319 = vrot.slane %v1310, %v1318
  %v1326 = vunpack.c.l.b16 %v1306
  %v1327 = vunpack.c.h.b16 %v1306
  %v1328 = vunpack.c.l.b16 %v1307
  %v1329 = vunpack.c.h.b16 %v1307
  %v1330 = vunpack.c.l.b16 %v1308
  %v1331 = vunpack.c.h.b16 %v1308
  %v1332 = vunpack.c.l.b16 %v1309
  %v1333 = vunpack.c.h.b16 %v1309
  %v1334 = vpack.c.b16 %v1328, %v1326
  %v1335 = vpack.c.b16 %v1329, %v1327
  %v1336 = vpack.c.b16 %v1332, %v1330
  %v1337 = vpack.c.b16 %v1333, %v1331
  %v1343 = vsel %vm179, %v212, 0
  %v1346 = vsel %vm179, %v213, 0
  %1348 = vmatprep.subr.bf16.mxu0 %v1335
  %1349 = vmatpush1.bf16.msra.mxu0 %v1334
  %1350 = vmatprep.subr.bf16.mxu0 %v1337
  %1351 = vmatpush1.bf16.msra.mxu0 %v1336
  %1352 = vmatprep.subr.bf16.mxu0 0
  %1353 = vmatpush1.bf16.msra.mxu0 0
  %1354 = vmatprep.subr.bf16.mxu0 0
  %1355 = vmatpush1.bf16.msra.mxu0 0
  %1356 = vmatprep.subr.bf16.mxu0 0
  %1357 = vmatpush1.bf16.msra.mxu0 0
  %1358 = vmatprep.subr.bf16.mxu0 0
  %1359 = vmatpush1.bf16.msra.mxu0 0
  %1360 = vmatprep.subr.bf16.mxu0 0
  %1361 = vmatpush1.bf16.msra.mxu0 0
  %1362 = vmatprep.subr.bf16.mxu0 0
  %1363 = vmatpush1.bf16.msra.mxu0 0
  %1364 = vmatprep.subr.bf16.mxu0 0
  %1365 = vmatpush1.bf16.msra.mxu0 0
  %1366 = vmatprep.subr.bf16.mxu0 0
  %1367 = vmatpush1.bf16.msra.mxu0 0
  %1368 = vmatprep.subr.bf16.mxu0 0
  %1369 = vmatpush1.bf16.msra.mxu0 0
  %1370 = vmatprep.subr.bf16.mxu0 0
  %1371 = vmatpush1.bf16.msra.mxu0 0
  %1372 = vmatprep.subr.bf16.mxu0 0
  %1373 = vmatpush1.bf16.msra.mxu0 0
  %1374 = vmatprep.subr.bf16.mxu0 0
  %1375 = vmatpush1.bf16.msra.mxu0 0
  %1376 = vmatprep.subr.bf16.mxu0 0
  %1377 = vmatpush1.bf16.msra.mxu0 0
  %1378 = vmatprep.subr.bf16.mxu0 0
  %1379 = vmatpush1.bf16.msra.mxu0 0
  %1380 = vmatprep.mubr.bf16.mxu0 0
  %1381 = vmatmul.mubr.bf16.gmra.mrb[0].mxu0 %v1343
  %v1382 = vpop.f32.mrb[0].mxu0
  %v1383 = vadd.f32 %v1315, %v1382
  %v1384 = vpop.f32.mrb[0].mxu0
  %v1385 = vadd.f32 %v1319, %v1384
  %v1386 = vpop.f32.mrb[0].mxu0
  %v1387 = vadd.f32 %v1315, %v1386
  %v1388 = vpop.f32.mrb[0].mxu0
  %v1389 = vadd.f32 %v1319, %v1388
  %1390 = vmatprep.mubr.bf16.mxu0 0
  %1391 = vmatmul.mubr.bf16.gmra.mrb[0].mxu0 %v1346
  %v1392 = vpop.f32.mrb[0].mxu0
  %v1393 = vadd.f32 %v1315, %v1392
  %v1394 = vpop.f32.mrb[0].mxu0
  %v1395 = vadd.f32 %v1319, %v1394
  %v1396 = vpop.f32.mrb[0].mxu0
  %v1397 = vpop.f32.mrb[0].mxu0
  %1398 = vdwg.mxu0
  %v1399 = vpack.c.bf16 %v1387, %v1383
  %v1400 = vpack.c.bf16 %v1393, %v1393
  %v1401 = vpack.c.bf16 %v1389, %v1385
  %v1402 = vpack.c.bf16 %v1395, %v1395
  %v1403 = vpack.c.bf16 %v1055, %v1052
  %v1404 = vpack.c.bf16 %v1063, %v1060
  %v1405 = vpack.c.bf16 %v1071, %v1068
  %v1406 = vpack.c.bf16 %v1079, %v1076
  %v1407 = vpack.c.bf16 %v1087, %v1084
  %v1408 = vpack.c.bf16 %v1095, %v1092
  %v1409 = vpack.c.bf16 %v1103, %v1100
  %v1410 = vpack.c.bf16 %v1111, %v1108
  %v1411 = vpack.c.bf16 %v1119, %v1116
  %v1412 = vpack.c.bf16 %v1127, %v1124
  %v1413 = vpack.c.bf16 %v1135, %v1132
  %v1414 = vpack.c.bf16 %v1143, %v1140
  %v1415 = vpack.c.bf16 %v1151, %v1148
  %v1416 = vpack.c.bf16 %v1159, %v1156
  %v1417 = vpack.c.bf16 %v1167, %v1164
  %v1418 = vpack.c.bf16 %v1175, %v1172
  %v1419 = vpack.c.bf16 %v1183, %v1180
  %v1420 = vpack.c.bf16 %v1191, %v1188
  %v1421 = vpack.c.bf16 %v1199, %v1196
  %v1422 = vpack.c.bf16 %v1207, %v1204
  %v1423 = vpack.c.bf16 %v1215, %v1212
  %v1424 = vpack.c.bf16 %v1223, %v1220
  %v1425 = vpack.c.bf16 %v1231, %v1228
  %v1426 = vpack.c.bf16 %v1239, %v1236
  %v1427 = vpack.c.bf16 %v1247, %v1244
  %v1428 = vpack.c.bf16 %v1255, %v1252
  %v1429 = vpack.c.bf16 %v1263, %v1260
  %v1430 = vpack.c.bf16 %v1271, %v1268
  %v1431 = vpack.c.bf16 %v1279, %v1276
  %v1432 = vpack.c.bf16 %v1287, %v1284
  %v1433 = vpack.c.bf16 %v1295, %v1292
  %v1434 = vpack.c.bf16 %v1303, %v1300
  %1435 = vmatprep.subr.bf16.mxu0 0
  %1436 = vmatpush1.bf16.xpose.msra.mxu0 %v1403
  %1437 = vmatprep.subr.bf16.mxu0 0
  %1438 = vmatpush1.bf16.xpose.msra.mxu0 %v1404
  %1439 = vmatprep.subr.bf16.mxu0 0
  %1440 = vmatpush1.bf16.xpose.msra.mxu0 %v1405
  %1441 = vmatprep.subr.bf16.mxu0 0
  %1442 = vmatpush1.bf16.xpose.msra.mxu0 %v1406
  %1443 = vmatprep.subr.bf16.mxu0 0
  %1444 = vmatpush1.bf16.xpose.msra.mxu0 %v1407
  %1445 = vmatprep.subr.bf16.mxu0 0
  %1446 = vmatpush1.bf16.xpose.msra.mxu0 %v1408
  %1447 = vmatprep.subr.bf16.mxu0 0
  %1448 = vmatpush1.bf16.xpose.msra.mxu0 %v1409
  %1449 = vmatprep.subr.bf16.mxu0 0
  %1450 = vmatpush1.bf16.xpose.msra.mxu0 %v1410
  %1451 = vmatprep.subr.bf16.mxu0 0
  %1452 = vmatpush1.bf16.xpose.msra.mxu0 %v1411
  %1453 = vmatprep.subr.bf16.mxu0 0
  %1454 = vmatpush1.bf16.xpose.msra.mxu0 %v1412
  %1455 = vmatprep.subr.bf16.mxu0 0
  %1456 = vmatpush1.bf16.xpose.msra.mxu0 %v1413
  %1457 = vmatprep.subr.bf16.mxu0 0
  %1458 = vmatpush1.bf16.xpose.msra.mxu0 %v1414
  %1459 = vmatprep.subr.bf16.mxu0 0
  %1460 = vmatpush1.bf16.xpose.msra.mxu0 %v1415
  %1461 = vmatprep.subr.bf16.mxu0 0
  %1462 = vmatpush1.bf16.xpose.msra.mxu0 %v1416
  %1463 = vmatprep.subr.bf16.mxu0 0
  %1464 = vmatpush1.bf16.xpose.msra.mxu0 %v1417
  %1465 = vmatprep.subr.bf16.mxu0 0
  %1466 = vmatpush1.bf16.xpose.msra.mxu0 %v1418
  %1467 = vmatprep.mubr.bf16.mxu0 0
  %1468 = vmatmul.mubr.bf16.gmra.mrb[0].mxu0 %v1399
  %v1469 = vpop.f32.mrb[0].mxu0
  %v1470 = vadd.f32 0.0, %v1469
  %v1471 = vpop.f32.mrb[0].mxu0
  %v1472 = vadd.f32 0.0, %v1471
  %v1473 = vpop.f32.mrb[0].mxu0
  %v1474 = vadd.f32 0.0, %v1473
  %v1475 = vpop.f32.mrb[0].mxu0
  %v1476 = vadd.f32 0.0, %v1475
  %1477 = vmatprep.mubr.bf16.mxu0 0
  %1478 = vmatmul.mubr.bf16.gmra.mrb[0].mxu0 %v1400
  %v1479 = vpop.f32.mrb[0].mxu0
  %v1480 = vadd.f32 0.0, %v1479
  %v1481 = vpop.f32.mrb[0].mxu0
  %v1482 = vadd.f32 0.0, %v1481
  %v1483 = vpop.f32.mrb[0].mxu0
  %v1484 = vpop.f32.mrb[0].mxu0
  %1485 = vdwg.mxu0
  %1486 = vmatprep.subr.bf16.mxu0 0
  %1487 = vmatpush1.bf16.xpose.msra.mxu0 %v1419
  %1488 = vmatprep.subr.bf16.mxu0 0
  %1489 = vmatpush1.bf16.xpose.msra.mxu0 %v1420
  %1490 = vmatprep.subr.bf16.mxu0 0
  %1491 = vmatpush1.bf16.xpose.msra.mxu0 %v1421
  %1492 = vmatprep.subr.bf16.mxu0 0
  %1493 = vmatpush1.bf16.xpose.msra.mxu0 %v1422
  %1494 = vmatprep.subr.bf16.mxu0 0
  %1495 = vmatpush1.bf16.xpose.msra.mxu0 %v1423
  %1496 = vmatprep.subr.bf16.mxu0 0
  %1497 = vmatpush1.bf16.xpose.msra.mxu0 %v1424
  %1498 = vmatprep.subr.bf16.mxu0 0
  %1499 = vmatpush1.bf16.xpose.msra.mxu0 %v1425
  %1500 = vmatprep.subr.bf16.mxu0 0
  %1501 = vmatpush1.bf16.xpose.msra.mxu0 %v1426
  %1502 = vmatprep.subr.bf16.mxu0 0
  %1503 = vmatpush1.bf16.xpose.msra.mxu0 %v1427
  %1504 = vmatprep.subr.bf16.mxu0 0
  %1505 = vmatpush1.bf16.xpose.msra.mxu0 %v1428
  %1506 = vmatprep.subr.bf16.mxu0 0
  %1507 = vmatpush1.bf16.xpose.msra.mxu0 %v1429
  %1508 = vmatprep.subr.bf16.mxu0 0
  %1509 = vmatpush1.bf16.xpose.msra.mxu0 %v1430
  %1510 = vmatprep.subr.bf16.mxu0 0
  %1511 = vmatpush1.bf16.xpose.msra.mxu0 %v1431
  %1512 = vmatprep.subr.bf16.mxu0 0
  %1513 = vmatpush1.bf16.xpose.msra.mxu0 %v1432
  %1514 = vmatprep.subr.bf16.mxu0 0
  %1515 = vmatpush1.bf16.xpose.msra.mxu0 %v1433
  %1516 = vmatprep.subr.bf16.mxu0 0
  %1517 = vmatpush1.bf16.xpose.msra.mxu0 %v1434
  %1518 = vmatprep.mubr.bf16.mxu0 0
  %1519 = vmatmul.mubr.bf16.gmra.mrb[0].mxu0 %v1399
  %v1520 = vpop.f32.mrb[0].mxu0
  %v1521 = vadd.f32 0.0, %v1520
  %v1522 = vpop.f32.mrb[0].mxu0
  %v1523 = vadd.f32 0.0, %v1522
  %v1524 = vpop.f32.mrb[0].mxu0
  %v1525 = vadd.f32 0.0, %v1524
  %v1526 = vpop.f32.mrb[0].mxu0
  %v1527 = vadd.f32 0.0, %v1526
  %1528 = vmatprep.mubr.bf16.mxu0 0
  %1529 = vmatmul.mubr.bf16.gmra.mrb[0].mxu0 %v1400
  %v1530 = vpop.f32.mrb[0].mxu0
  %v1531 = vadd.f32 0.0, %v1530
  %v1532 = vpop.f32.mrb[0].mxu0
  %v1533 = vadd.f32 0.0, %v1532
  %v1534 = vpop.f32.mrb[0].mxu0
  %v1535 = vpop.f32.mrb[0].mxu0
  %1536 = vdwg.mxu0
  %v1537 = vmul.f32 %v1470, 0.17677669
  %v1538 = vmul.f32 %v1472, 0.17677669
  %v1539 = vmul.f32 %v1521, 0.17677669
  %v1540 = vmul.f32 %v1523, 0.17677669
  %v1541 = vmul.f32 %v1474, 0.17677669
  %v1542 = vmul.f32 %v1476, 0.17677669
  %v1543 = vmul.f32 %v1525, 0.17677669
  %v1544 = vmul.f32 %v1527, 0.17677669
  %v1545 = vmul.f32 %v1480, 0.17677669
  %v1546 = vmul.f32 %v1482, 0.17677669
  %v1547 = vmul.f32 %v1531, 0.17677669
  %v1548 = vmul.f32 %v1533, 0.17677669
  %v1549 = vlaneseq
  %v1550 = vshrl.u32 %v1549, 7
  %v1551 = vadd.s32 %v1550, 8
  %v1552 = vadd.s32 %v1550, 16
  %v1553 = vlaneseq
  %v1554 = vand.u32 %v1553, 127
  %v1555 = vadd.s32 %v1554, 128
  %v1556 = vadd.s32 %v1554, 256
  %v1557 = vadd.s32 %v1554, 384
  %vm1558 = vcmp.ge.s32.totalorder %v1550, 8
  %vm1559 = vcmp.ge.s32.totalorder %v1551, 8
  %vm1560 = vcmp.ge.s32.totalorder %v1552, 8
  %vm1561 = vcmp.lt.s32.totalorder %v1550, 16
  %vm1562 = vcmp.lt.s32.totalorder %v1551, 16
  %vm1563 = vcmp.lt.s32.totalorder %v1552, 16
  %vm1564 = vmand %vm1558, %vm1561
  %vm1565 = vmand %vm1559, %vm1562
  %vm1566 = vmand %vm1560, %vm1563
  %v1567 = vsel %vm1564, 1, 0
  %v1568 = vsel %vm1565, 1, 0
  %v1569 = vsel %vm1566, 1, 0
  %vm1570 = vcmp.ge.s32.totalorder %v1550, 20
  %vm1571 = vcmp.ge.s32.totalorder %v1551, 20
  %vm1572 = vcmp.ge.s32.totalorder %v1552, 20
  %v1573 = vsel %vm1570, 1, 0
  %v1574 = vsel %vm1571, 1, 0
  %v1575 = vsel %vm1572, 1, 0
  %v1576 = vadd.s32 %v1567, %v1573
  %v1577 = vadd.s32 %v1568, %v1574
  %v1578 = vadd.s32 %v1569, %v1575
  %vm1579 = vcmp.ge.s32.totalorder %v1554, 256
  %vm1580 = vcmp.ge.s32.totalorder %v1555, 256
  %vm1581 = vcmp.ge.s32.totalorder %v1556, 256
  %vm1582 = vcmp.ge.s32.totalorder %v1557, 256
  %v1583 = vsel %vm1579, 1, 0
  %v1584 = vsel %vm1580, 1, 0
  %v1585 = vsel %vm1581, 1, 0
  %v1586 = vsel %vm1582, 1, 0
  %vm1587 = vcmp.eq.s32.totalorder %v1576, %v1583
  %vm1588 = vcmp.eq.s32.totalorder %v1576, %v1584
  %vm1589 = vcmp.eq.s32.totalorder %v1576, %v1585
  %vm1590 = vcmp.eq.s32.totalorder %v1576, %v1586
  %vm1591 = vcmp.eq.s32.totalorder %v1577, %v1583
  %vm1592 = vcmp.eq.s32.totalorder %v1577, %v1584
  %vm1593 = vcmp.eq.s32.totalorder %v1577, %v1585
  %vm1594 = vcmp.eq.s32.totalorder %v1577, %v1586
  %vm1595 = vcmp.eq.s32.totalorder %v1578, %v1583
  %vm1596 = vcmp.eq.s32.totalorder %v1578, %v1584
  %vm1597 = vcmp.eq.s32.totalorder %v1578, %v1585
  %vm1598 = vcmp.eq.s32.totalorder %v1578, %v1586
  %v1599 = vsel %vm1587, 0.0, -1e+30
  %v1600 = vsel %vm1588, 0.0, -1e+30
  %v1601 = vsel %vm1589, 0.0, -1e+30
  %v1602 = vsel %vm1590, 0.0, -1e+30
  %v1603 = vsel %vm1591, 0.0, -1e+30
  %v1604 = vsel %vm1592, 0.0, -1e+30
  %v1605 = vsel %vm1593, 0.0, -1e+30
  %v1606 = vsel %vm1594, 0.0, -1e+30
  %v1607 = vsel %vm1595, 0.0, -1e+30
  %v1608 = vsel %vm1596, 0.0, -1e+30
  %v1609 = vsel %vm1597, 0.0, -1e+30
  %v1610 = vsel %vm1598, 0.0, -1e+30
  %v1611 = vadd.f32 %v1537, %v1599
  %v1612 = vadd.f32 %v1538, %v1600
  %v1613 = vadd.f32 %v1539, %v1601
  %v1614 = vadd.f32 %v1540, %v1602
  %v1615 = vadd.f32 %v1541, %v1603
  %v1616 = vadd.f32 %v1542, %v1604
  %v1617 = vadd.f32 %v1543, %v1605
  %v1618 = vadd.f32 %v1544, %v1606
  %v1619 = vadd.f32 %v1545, %v1607
  %v1620 = vadd.f32 %v1546, %v1608
  %v1621 = vadd.f32 %v1547, %v1609
  %v1622 = vadd.f32 %v1548, %v1610
  %v1623 = vmax.f32 %v1611, %v1615
  %v1624 = vmax.f32 %v1623, %v1619
  %v1625 = vrot.slane %v1624, 4
  %v1626 = vmax.f32 %v1624, %v1625
  %v1627 = vrot.slane %v1626, 2
  %v1628 = vmax.f32 %v1626, %v1627
  %v1629 = vrot.slane %v1628, 1
  %v1630 = vmax.f32 %v1628, %v1629
  %v1631 = vmax.f32 %v1612, %v1616
  %v1632 = vmax.f32 %v1631, %v1620
  %v1633 = vrot.slane %v1632, 4
  %v1634 = vmax.f32 %v1632, %v1633
  %v1635 = vrot.slane %v1634, 2
  %v1636 = vmax.f32 %v1634, %v1635
  %v1637 = vrot.slane %v1636, 1
  %v1638 = vmax.f32 %v1636, %v1637
  %v1639 = vmax.f32 %v1613, %v1617
  %v1640 = vmax.f32 %v1639, %v1621
  %v1641 = vrot.slane %v1640, 4
  %v1642 = vmax.f32 %v1640, %v1641
  %v1643 = vrot.slane %v1642, 2
  %v1644 = vmax.f32 %v1642, %v1643
  %v1645 = vrot.slane %v1644, 1
  %v1646 = vmax.f32 %v1644, %v1645
  %v1647 = vmax.f32 %v1614, %v1618
  %v1648 = vmax.f32 %v1647, %v1622
  %v1649 = vrot.slane %v1648, 4
  %v1650 = vmax.f32 %v1648, %v1649
  %v1651 = vrot.slane %v1650, 2
  %v1652 = vmax.f32 %v1650, %v1651
  %v1653 = vrot.slane %v1652, 1
  %v1654 = vmax.f32 %v1652, %v1653
  %v1655 = vsub.f32 %v1611, %v1630
  %v1656 = vsub.f32 %v1612, %v1638
  %v1657 = vsub.f32 %v1613, %v1646
  %v1658 = vsub.f32 %v1614, %v1654
  %v1659 = vsub.f32 %v1615, %v1630
  %v1660 = vsub.f32 %v1616, %v1638
  %v1661 = vsub.f32 %v1617, %v1646
  %v1662 = vsub.f32 %v1618, %v1654
  %v1663 = vsub.f32 %v1619, %v1630
  %v1664 = vsub.f32 %v1620, %v1638
  %v1665 = vsub.f32 %v1621, %v1646
  %v1666 = vsub.f32 %v1622, %v1654
  %v1667 = vmul.f32 %v1655, 1.442695
  %v1668 = vpow.pop %v1667
  %v1669 = vmul.f32 %v1656, 1.442695
  %v1670 = vpow.pop %v1669
  %v1671 = vmul.f32 %v1657, 1.442695
  %v1672 = vpow.pop %v1671
  %v1673 = vmul.f32 %v1658, 1.442695
  %v1674 = vpow.pop %v1673
  %v1675 = vmul.f32 %v1659, 1.442695
  %v1676 = vpow.pop %v1675
  %v1677 = vmul.f32 %v1660, 1.442695
  %v1678 = vpow.pop %v1677
  %v1679 = vmul.f32 %v1661, 1.442695
  %v1680 = vpow.pop %v1679
  %v1681 = vmul.f32 %v1662, 1.442695
  %v1682 = vpow.pop %v1681
  %v1683 = vmul.f32 %v1663, 1.442695
  %v1684 = vpow.pop %v1683
  %v1685 = vmul.f32 %v1664, 1.442695
  %v1686 = vpow.pop %v1685
  %v1687 = vmul.f32 %v1665, 1.442695
  %v1688 = vpow.pop %v1687
  %v1689 = vmul.f32 %v1666, 1.442695
  %v1690 = vpow.pop %v1689
  %v1691 = vadd.f32 %v1668, %v1676
  %v1692 = vadd.f32 %v1691, %v1684
  %v1693 = vrot.slane %v1692, 4
  %v1694 = vadd.f32 %v1692, %v1693
  %v1695 = vrot.slane %v1694, 2
  %v1696 = vadd.f32 %v1694, %v1695
  %v1697 = vrot.slane %v1696, 1
  %v1698 = vadd.f32 %v1696, %v1697
  %v1699 = vadd.f32 %v1670, %v1678
  %v1700 = vadd.f32 %v1699, %v1686
  %v1701 = vrot.slane %v1700, 4
  %v1702 = vadd.f32 %v1700, %v1701
  %v1703 = vrot.slane %v1702, 2
  %v1704 = vadd.f32 %v1702, %v1703
  %v1705 = vrot.slane %v1704, 1
  %v1706 = vadd.f32 %v1704, %v1705
  %v1707 = vadd.f32 %v1672, %v1680
  %v1708 = vadd.f32 %v1707, %v1688
  %v1709 = vrot.slane %v1708, 4
  %v1710 = vadd.f32 %v1708, %v1709
  %v1711 = vrot.slane %v1710, 2
  %v1712 = vadd.f32 %v1710, %v1711
  %v1713 = vrot.slane %v1712, 1
  %v1714 = vadd.f32 %v1712, %v1713
  %v1715 = vadd.f32 %v1674, %v1682
  %v1716 = vadd.f32 %v1715, %v1690
  %v1717 = vrot.slane %v1716, 4
  %v1718 = vadd.f32 %v1716, %v1717
  %v1719 = vrot.slane %v1718, 2
  %v1720 = vadd.f32 %v1718, %v1719
  %v1721 = vrot.slane %v1720, 1
  %v1722 = vadd.f32 %v1720, %v1721
  %v1723 = vrcp.pop %v1698
  %v1724 = vrcp.pop %v1706
  %v1725 = vrcp.pop %v1714
  %v1726 = vrcp.pop %v1722
  %v1727 = vmul.f32 %v1668, %v1723
  %v1728 = vmul.f32 %v1670, %v1724
  %v1729 = vmul.f32 %v1672, %v1725
  %v1730 = vmul.f32 %v1674, %v1726
  %v1731 = vmul.f32 %v1676, %v1723
  %v1732 = vmul.f32 %v1678, %v1724
  %v1733 = vmul.f32 %v1680, %v1725
  %v1734 = vmul.f32 %v1682, %v1726
  %v1735 = vmul.f32 %v1684, %v1723
  %v1736 = vmul.f32 %v1686, %v1724
  %v1737 = vmul.f32 %v1688, %v1725
  %v1738 = vmul.f32 %v1690, %v1726
  %v1739 = vpack.c.bf16 %v1731, %v1727
  %v1740 = vpack.c.bf16 %v1732, %v1728
  %v1741 = vpack.c.bf16 %v1733, %v1729
  %v1742 = vpack.c.bf16 %v1734, %v1730
  %v1743 = vpack.c.bf16 %v1735, %v1735
  %v1744 = vpack.c.bf16 %v1736, %v1736
  %v1745 = vpack.c.bf16 %v1737, %v1737
  %v1746 = vpack.c.bf16 %v1738, %v1738
  %1747 = vxpose.xlu0.c.b16.start [1/8] %v1739, 128
  %1748 = vxpose.xlu0.c.b16.cont [2/8] %v1743, 128
  %1749 = vxpose.xlu0.c.b16.cont [3/8] 0, 128
  %1750 = vxpose.xlu0.c.b16.cont [4/8] 0, 128
  %1751 = vxpose.xlu0.c.b16.cont [5/8] 0, 128
  %1752 = vxpose.xlu0.c.b16.cont [6/8] 0, 128
  %1753 = vxpose.xlu0.c.b16.cont [7/8] 0, 128
  %1754 = vxpose.xlu0.c.b16.end [8/8] 0, 128
  %v1755 = vpop.trf.xlu0
  %v1756 = vpop.trf.xlu0
  %v1757 = vpop.trf.xlu0
  %v1758 = vpop.trf.xlu0
  %v1759 = vpop.trf.xlu0
  %v1760 = vpop.trf.xlu0
  %v1761 = vpop.trf.xlu0
  %v1762 = vpop.trf.xlu0
  %1763 = vxpose.xlu0.c.b16.start [1/8] %v1740, 128
  %1764 = vxpose.xlu0.c.b16.cont [2/8] %v1744, 128
  %1765 = vxpose.xlu0.c.b16.cont [3/8] 0, 128
  %1766 = vxpose.xlu0.c.b16.cont [4/8] 0, 128
  %1767 = vxpose.xlu0.c.b16.cont [5/8] 0, 128
  %1768 = vxpose.xlu0.c.b16.cont [6/8] 0, 128
  %1769 = vxpose.xlu0.c.b16.cont [7/8] 0, 128
  %1770 = vxpose.xlu0.c.b16.end [8/8] 0, 128
  %v1771 = vpop.trf.xlu0
  %v1772 = vpop.trf.xlu0
  %v1773 = vpop.trf.xlu0
  %v1774 = vpop.trf.xlu0
  %v1775 = vpop.trf.xlu0
  %v1776 = vpop.trf.xlu0
  %v1777 = vpop.trf.xlu0
  %v1778 = vpop.trf.xlu0
  %1779 = vxpose.xlu0.c.b16.start [1/8] %v1741, 128
  %1780 = vxpose.xlu0.c.b16.cont [2/8] %v1745, 128
  %1781 = vxpose.xlu0.c.b16.cont [3/8] 0, 128
  %1782 = vxpose.xlu0.c.b16.cont [4/8] 0, 128
  %1783 = vxpose.xlu0.c.b16.cont [5/8] 0, 128
  %1784 = vxpose.xlu0.c.b16.cont [6/8] 0, 128
  %1785 = vxpose.xlu0.c.b16.cont [7/8] 0, 128
  %1786 = vxpose.xlu0.c.b16.end [8/8] 0, 128
  %v1787 = vpop.trf.xlu0
  %v1788 = vpop.trf.xlu0
  %v1789 = vpop.trf.xlu0
  %v1790 = vpop.trf.xlu0
  %v1791 = vpop.trf.xlu0
  %v1792 = vpop.trf.xlu0
  %v1793 = vpop.trf.xlu0
  %v1794 = vpop.trf.xlu0
  %1795 = vxpose.xlu0.c.b16.start [1/8] %v1742, 128
  %1796 = vxpose.xlu0.c.b16.cont [2/8] %v1746, 128
  %1797 = vxpose.xlu0.c.b16.cont [3/8] 0, 128
  %1798 = vxpose.xlu0.c.b16.cont [4/8] 0, 128
  %1799 = vxpose.xlu0.c.b16.cont [5/8] 0, 128
  %1800 = vxpose.xlu0.c.b16.cont [6/8] 0, 128
  %1801 = vxpose.xlu0.c.b16.cont [7/8] 0, 128
  %1802 = vxpose.xlu0.c.b16.end [8/8] 0, 128
  %v1803 = vpop.trf.xlu0
  %v1804 = vpop.trf.xlu0
  %v1805 = vpop.trf.xlu0
  %v1806 = vpop.trf.xlu0
  %v1807 = vpop.trf.xlu0
  %v1808 = vpop.trf.xlu0
  %v1809 = vpop.trf.xlu0
  %v1810 = vpop.trf.xlu0
  %vm1811 = vcmask 195584
  %v1813 = vsel %vm1811, %v1755, 0
  %v1816 = vsel %vm1811, %v1756, 0
  %v1819 = vsel %vm1811, %v1757, 0
  %v1822 = vsel %vm1811, %v1758, 0
  %v1825 = vsel %vm1811, %v1759, 0
  %v1828 = vsel %vm1811, %v1760, 0
  %v1831 = vsel %vm1811, %v1761, 0
  %v1834 = vsel %vm1811, %v1762, 0
  %v1837 = vsel %vm1811, %v1771, 0
  %v1840 = vsel %vm1811, %v1772, 0
  %v1843 = vsel %vm1811, %v1773, 0
  %v1846 = vsel %vm1811, %v1774, 0
  %v1849 = vsel %vm1811, %v1775, 0
  %v1852 = vsel %vm1811, %v1776, 0
  %v1855 = vsel %vm1811, %v1777, 0
  %v1858 = vsel %vm1811, %v1778, 0
  %v1861 = vsel %vm1811, %v1787, 0
  %v1864 = vsel %vm1811, %v1788, 0
  %v1867 = vsel %vm1811, %v1789, 0
  %v1870 = vsel %vm1811, %v1790, 0
  %v1873 = vsel %vm1811, %v1791, 0
  %v1876 = vsel %vm1811, %v1792, 0
  %v1879 = vsel %vm1811, %v1793, 0
  %v1882 = vsel %vm1811, %v1794, 0
  %v1885 = vsel %vm1811, %v1803, 0
  %v1888 = vsel %vm1811, %v1804, 0
  %v1891 = vsel %vm1811, %v1805, 0
  %v1894 = vsel %vm1811, %v1806, 0
  %v1897 = vsel %vm1811, %v1807, 0
  %v1900 = vsel %vm1811, %v1808, 0
  %v1903 = vsel %vm1811, %v1809, 0
  %v1906 = vsel %vm1811, %v1810, 0
  %v1909 = vsel %vm499, %v1402, 0
  %1911 = vmatprep.subr.bf16.mxu0 0
  %1912 = vmatpush1.bf16.msra.mxu0 %v1401
  %1913 = vmatprep.subr.bf16.mxu0 0
  %1914 = vmatpush1.bf16.msra.mxu0 %v1909
  %1915 = vmatprep.subr.bf16.mxu0 0
  %1916 = vmatpush1.bf16.msra.mxu0 0
  %1917 = vmatprep.subr.bf16.mxu0 0
  %1918 = vmatpush1.bf16.msra.mxu0 0
  %1919 = vmatprep.subr.bf16.mxu0 0
  %1920 = vmatpush1.bf16.msra.mxu0 0
  %1921 = vmatprep.subr.bf16.mxu0 0
  %1922 = vmatpush1.bf16.msra.mxu0 0
  %1923 = vmatprep.subr.bf16.mxu0 0
  %1924 = vmatpush1.bf16.msra.mxu0 0
  %1925 = vmatprep.subr.bf16.mxu0 0
  %1926 = vmatpush1.bf16.msra.mxu0 0
  %1927 = vmatprep.subr.bf16.mxu0 0
  %1928 = vmatpush1.bf16.msra.mxu0 0
  %1929 = vmatprep.subr.bf16.mxu0 0
  %1930 = vmatpush1.bf16.msra.mxu0 0
  %1931 = vmatprep.subr.bf16.mxu0 0
  %1932 = vmatpush1.bf16.msra.mxu0 0
  %1933 = vmatprep.subr.bf16.mxu0 0
  %1934 = vmatpush1.bf16.msra.mxu0 0
  %1935 = vmatprep.subr.bf16.mxu0 0
  %1936 = vmatpush1.bf16.msra.mxu0 0
  %1937 = vmatprep.subr.bf16.mxu0 0
  %1938 = vmatpush1.bf16.msra.mxu0 0
  %1939 = vmatprep.subr.bf16.mxu0 0
  %1940 = vmatpush1.bf16.msra.mxu0 0
  %1941 = vmatprep.subr.bf16.mxu0 0
  %1942 = vmatpush1.bf16.msra.mxu0 0
  %1943 = vmatprep.mubr.bf16.mxu0 0
  %1944 = vmatmul.mubr.bf16.gmra.mrb[0].mxu0 %v1813
  %v1945 = vpop.f32.mrb[0].mxu0
  %v1946 = vadd.f32 0.0, %v1945
  %v1947 = vpop.f32.mrb[0].mxu0
  %v1948 = vpop.f32.mrb[0].mxu0
  %v1949 = vadd.f32 0.0, %v1948
  %v1950 = vpop.f32.mrb[0].mxu0
  %1951 = vmatprep.mubr.bf16.mxu0 0
  %1952 = vmatmul.mubr.bf16.gmra.mrb[0].mxu0 %v1816
  %v1953 = vpop.f32.mrb[0].mxu0
  %v1954 = vadd.f32 0.0, %v1953
  %v1955 = vpop.f32.mrb[0].mxu0
  %v1956 = vpop.f32.mrb[0].mxu0
  %v1957 = vadd.f32 0.0, %v1956
  %v1958 = vpop.f32.mrb[0].mxu0
  %1959 = vmatprep.mubr.bf16.mxu0 0
  %1960 = vmatmul.mubr.bf16.gmra.mrb[0].mxu0 %v1819
  %v1961 = vpop.f32.mrb[0].mxu0
  %v1962 = vadd.f32 0.0, %v1961
  %v1963 = vpop.f32.mrb[0].mxu0
  %v1964 = vpop.f32.mrb[0].mxu0
  %v1965 = vadd.f32 0.0, %v1964
  %v1966 = vpop.f32.mrb[0].mxu0
  %1967 = vmatprep.mubr.bf16.mxu0 0
  %1968 = vmatmul.mubr.bf16.gmra.mrb[0].mxu0 %v1822
  %v1969 = vpop.f32.mrb[0].mxu0
  %v1970 = vadd.f32 0.0, %v1969
  %v1971 = vpop.f32.mrb[0].mxu0
  %v1972 = vpop.f32.mrb[0].mxu0
  %v1973 = vadd.f32 0.0, %v1972
  %v1974 = vpop.f32.mrb[0].mxu0
  %1975 = vmatprep.mubr.bf16.mxu0 0
  %1976 = vmatmul.mubr.bf16.gmra.mrb[0].mxu0 %v1825
  %v1977 = vpop.f32.mrb[0].mxu0
  %v1978 = vadd.f32 0.0, %v1977
  %v1979 = vpop.f32.mrb[0].mxu0
  %v1980 = vpop.f32.mrb[0].mxu0
  %v1981 = vadd.f32 0.0, %v1980
  %v1982 = vpop.f32.mrb[0].mxu0
  %1983 = vmatprep.mubr.bf16.mxu0 0
  %1984 = vmatmul.mubr.bf16.gmra.mrb[0].mxu0 %v1828
  %v1985 = vpop.f32.mrb[0].mxu0
  %v1986 = vadd.f32 0.0, %v1985
  %v1987 = vpop.f32.mrb[0].mxu0
  %v1988 = vpop.f32.mrb[0].mxu0
  %v1989 = vadd.f32 0.0, %v1988
  %v1990 = vpop.f32.mrb[0].mxu0
  %1991 = vmatprep.mubr.bf16.mxu0 0
  %1992 = vmatmul.mubr.bf16.gmra.mrb[0].mxu0 %v1831
  %v1993 = vpop.f32.mrb[0].mxu0
  %v1994 = vadd.f32 0.0, %v1993
  %v1995 = vpop.f32.mrb[0].mxu0
  %v1996 = vpop.f32.mrb[0].mxu0
  %v1997 = vadd.f32 0.0, %v1996
  %v1998 = vpop.f32.mrb[0].mxu0
  %1999 = vmatprep.mubr.bf16.mxu0 0
  %2000 = vmatmul.mubr.bf16.gmra.mrb[0].mxu0 %v1834
  %v2001 = vpop.f32.mrb[0].mxu0
  %v2002 = vadd.f32 0.0, %v2001
  %v2003 = vpop.f32.mrb[0].mxu0
  %v2004 = vpop.f32.mrb[0].mxu0
  %v2005 = vadd.f32 0.0, %v2004
  %v2006 = vpop.f32.mrb[0].mxu0
  %2007 = vmatprep.mubr.bf16.mxu0 0
  %2008 = vmatmul.mubr.bf16.gmra.mrb[0].mxu0 %v1837
  %v2009 = vpop.f32.mrb[0].mxu0
  %v2010 = vadd.f32 0.0, %v2009
  %v2011 = vpop.f32.mrb[0].mxu0
  %v2012 = vpop.f32.mrb[0].mxu0
  %v2013 = vadd.f32 0.0, %v2012
  %v2014 = vpop.f32.mrb[0].mxu0
  %2015 = vmatprep.mubr.bf16.mxu0 0
  %2016 = vmatmul.mubr.bf16.gmra.mrb[0].mxu0 %v1840
  %v2017 = vpop.f32.mrb[0].mxu0
  %v2018 = vadd.f32 0.0, %v2017
  %v2019 = vpop.f32.mrb[0].mxu0
  %v2020 = vpop.f32.mrb[0].mxu0
  %v2021 = vadd.f32 0.0, %v2020
  %v2022 = vpop.f32.mrb[0].mxu0
  %2023 = vmatprep.mubr.bf16.mxu0 0
  %2024 = vmatmul.mubr.bf16.gmra.mrb[0].mxu0 %v1843
  %v2025 = vpop.f32.mrb[0].mxu0
  %v2026 = vadd.f32 0.0, %v2025
  %v2027 = vpop.f32.mrb[0].mxu0
  %v2028 = vpop.f32.mrb[0].mxu0
  %v2029 = vadd.f32 0.0, %v2028
  %v2030 = vpop.f32.mrb[0].mxu0
  %2031 = vmatprep.mubr.bf16.mxu0 0
  %2032 = vmatmul.mubr.bf16.gmra.mrb[0].mxu0 %v1846
  %v2033 = vpop.f32.mrb[0].mxu0
  %v2034 = vadd.f32 0.0, %v2033
  %v2035 = vpop.f32.mrb[0].mxu0
  %v2036 = vpop.f32.mrb[0].mxu0
  %v2037 = vadd.f32 0.0, %v2036
  %v2038 = vpop.f32.mrb[0].mxu0
  %2039 = vmatprep.mubr.bf16.mxu0 0
  %2040 = vmatmul.mubr.bf16.gmra.mrb[0].mxu0 %v1849
  %v2041 = vpop.f32.mrb[0].mxu0
  %v2042 = vadd.f32 0.0, %v2041
  %v2043 = vpop.f32.mrb[0].mxu0
  %v2044 = vpop.f32.mrb[0].mxu0
  %v2045 = vadd.f32 0.0, %v2044
  %v2046 = vpop.f32.mrb[0].mxu0
  %2047 = vmatprep.mubr.bf16.mxu0 0
  %2048 = vmatmul.mubr.bf16.gmra.mrb[0].mxu0 %v1852
  %v2049 = vpop.f32.mrb[0].mxu0
  %v2050 = vadd.f32 0.0, %v2049
  %v2051 = vpop.f32.mrb[0].mxu0
  %v2052 = vpop.f32.mrb[0].mxu0
  %v2053 = vadd.f32 0.0, %v2052
  %v2054 = vpop.f32.mrb[0].mxu0
  %2055 = vmatprep.mubr.bf16.mxu0 0
  %2056 = vmatmul.mubr.bf16.gmra.mrb[0].mxu0 %v1855
  %v2057 = vpop.f32.mrb[0].mxu0
  %v2058 = vadd.f32 0.0, %v2057
  %v2059 = vpop.f32.mrb[0].mxu0
  %v2060 = vpop.f32.mrb[0].mxu0
  %v2061 = vadd.f32 0.0, %v2060
  %v2062 = vpop.f32.mrb[0].mxu0
  %2063 = vmatprep.mubr.bf16.mxu0 0
  %2064 = vmatmul.mubr.bf16.gmra.mrb[0].mxu0 %v1858
  %v2065 = vpop.f32.mrb[0].mxu0
  %v2066 = vadd.f32 0.0, %v2065
  %v2067 = vpop.f32.mrb[0].mxu0
  %v2068 = vpop.f32.mrb[0].mxu0
  %v2069 = vadd.f32 0.0, %v2068
  %v2070 = vpop.f32.mrb[0].mxu0
  %2071 = vmatprep.mubr.bf16.mxu0 0
  %2072 = vmatmul.mubr.bf16.gmra.mrb[0].mxu0 %v1861
  %v2073 = vpop.f32.mrb[0].mxu0
  %v2074 = vadd.f32 0.0, %v2073
  %v2075 = vpop.f32.mrb[0].mxu0
  %v2076 = vpop.f32.mrb[0].mxu0
  %v2077 = vadd.f32 0.0, %v2076
  %v2078 = vpop.f32.mrb[0].mxu0
  %2079 = vmatprep.mubr.bf16.mxu0 0
  %2080 = vmatmul.mubr.bf16.gmra.mrb[0].mxu0 %v1864
  %v2081 = vpop.f32.mrb[0].mxu0
  %v2082 = vadd.f32 0.0, %v2081
  %v2083 = vpop.f32.mrb[0].mxu0
  %v2084 = vpop.f32.mrb[0].mxu0
  %v2085 = vadd.f32 0.0, %v2084
  %v2086 = vpop.f32.mrb[0].mxu0
  %2087 = vmatprep.mubr.bf16.mxu0 0
  %2088 = vmatmul.mubr.bf16.gmra.mrb[0].mxu0 %v1867
  %v2089 = vpop.f32.mrb[0].mxu0
  %v2090 = vadd.f32 0.0, %v2089
  %v2091 = vpop.f32.mrb[0].mxu0
  %v2092 = vpop.f32.mrb[0].mxu0
  %v2093 = vadd.f32 0.0, %v2092
  %v2094 = vpop.f32.mrb[0].mxu0
  %2095 = vmatprep.mubr.bf16.mxu0 0
  %2096 = vmatmul.mubr.bf16.gmra.mrb[0].mxu0 %v1870
  %v2097 = vpop.f32.mrb[0].mxu0
  %v2098 = vadd.f32 0.0, %v2097
  %v2099 = vpop.f32.mrb[0].mxu0
  %v2100 = vpop.f32.mrb[0].mxu0
  %v2101 = vadd.f32 0.0, %v2100
  %v2102 = vpop.f32.mrb[0].mxu0
  %2103 = vmatprep.mubr.bf16.mxu0 0
  %2104 = vmatmul.mubr.bf16.gmra.mrb[0].mxu0 %v1873
  %v2105 = vpop.f32.mrb[0].mxu0
  %v2106 = vadd.f32 0.0, %v2105
  %v2107 = vpop.f32.mrb[0].mxu0
  %v2108 = vpop.f32.mrb[0].mxu0
  %v2109 = vadd.f32 0.0, %v2108
  %v2110 = vpop.f32.mrb[0].mxu0
  %2111 = vmatprep.mubr.bf16.mxu0 0
  %2112 = vmatmul.mubr.bf16.gmra.mrb[0].mxu0 %v1876
  %v2113 = vpop.f32.mrb[0].mxu0
  %v2114 = vadd.f32 0.0, %v2113
  %v2115 = vpop.f32.mrb[0].mxu0
  %v2116 = vpop.f32.mrb[0].mxu0
  %v2117 = vadd.f32 0.0, %v2116
  %v2118 = vpop.f32.mrb[0].mxu0
  %2119 = vmatprep.mubr.bf16.mxu0 0
  %2120 = vmatmul.mubr.bf16.gmra.mrb[0].mxu0 %v1879
  %v2121 = vpop.f32.mrb[0].mxu0
  %v2122 = vadd.f32 0.0, %v2121
  %v2123 = vpop.f32.mrb[0].mxu0
  %v2124 = vpop.f32.mrb[0].mxu0
  %v2125 = vadd.f32 0.0, %v2124
  %v2126 = vpop.f32.mrb[0].mxu0
  %2127 = vmatprep.mubr.bf16.mxu0 0
  %2128 = vmatmul.mubr.bf16.gmra.mrb[0].mxu0 %v1882
  %v2129 = vpop.f32.mrb[0].mxu0
  %v2130 = vadd.f32 0.0, %v2129
  %v2131 = vpop.f32.mrb[0].mxu0
  %v2132 = vpop.f32.mrb[0].mxu0
  %v2133 = vadd.f32 0.0, %v2132
  %v2134 = vpop.f32.mrb[0].mxu0
  %2135 = vmatprep.mubr.bf16.mxu0 0
  %2136 = vmatmul.mubr.bf16.gmra.mrb[0].mxu0 %v1885
  %v2137 = vpop.f32.mrb[0].mxu0
  %v2138 = vadd.f32 0.0, %v2137
  %v2139 = vpop.f32.mrb[0].mxu0
  %v2140 = vpop.f32.mrb[0].mxu0
  %v2141 = vadd.f32 0.0, %v2140
  %v2142 = vpop.f32.mrb[0].mxu0
  %2143 = vmatprep.mubr.bf16.mxu0 0
  %2144 = vmatmul.mubr.bf16.gmra.mrb[0].mxu0 %v1888
  %v2145 = vpop.f32.mrb[0].mxu0
  %v2146 = vadd.f32 0.0, %v2145
  %v2147 = vpop.f32.mrb[0].mxu0
  %v2148 = vpop.f32.mrb[0].mxu0
  %v2149 = vadd.f32 0.0, %v2148
  %v2150 = vpop.f32.mrb[0].mxu0
  %2151 = vmatprep.mubr.bf16.mxu0 0
  %2152 = vmatmul.mubr.bf16.gmra.mrb[0].mxu0 %v1891
  %v2153 = vpop.f32.mrb[0].mxu0
  %v2154 = vadd.f32 0.0, %v2153
  %v2155 = vpop.f32.mrb[0].mxu0
  %v2156 = vpop.f32.mrb[0].mxu0
  %v2157 = vadd.f32 0.0, %v2156
  %v2158 = vpop.f32.mrb[0].mxu0
  %2159 = vmatprep.mubr.bf16.mxu0 0
  %2160 = vmatmul.mubr.bf16.gmra.mrb[0].mxu0 %v1894
  %v2161 = vpop.f32.mrb[0].mxu0
  %v2162 = vadd.f32 0.0, %v2161
  %v2163 = vpop.f32.mrb[0].mxu0
  %v2164 = vpop.f32.mrb[0].mxu0
  %v2165 = vadd.f32 0.0, %v2164
  %v2166 = vpop.f32.mrb[0].mxu0
  %2167 = vmatprep.mubr.bf16.mxu0 0
  %2168 = vmatmul.mubr.bf16.gmra.mrb[0].mxu0 %v1897
  %v2169 = vpop.f32.mrb[0].mxu0
  %v2170 = vadd.f32 0.0, %v2169
  %v2171 = vpop.f32.mrb[0].mxu0
  %v2172 = vpop.f32.mrb[0].mxu0
  %v2173 = vadd.f32 0.0, %v2172
  %v2174 = vpop.f32.mrb[0].mxu0
  %2175 = vmatprep.mubr.bf16.mxu0 0
  %2176 = vmatmul.mubr.bf16.gmra.mrb[0].mxu0 %v1900
  %v2177 = vpop.f32.mrb[0].mxu0
  %v2178 = vadd.f32 0.0, %v2177
  %v2179 = vpop.f32.mrb[0].mxu0
  %v2180 = vpop.f32.mrb[0].mxu0
  %v2181 = vadd.f32 0.0, %v2180
  %v2182 = vpop.f32.mrb[0].mxu0
  %2183 = vmatprep.mubr.bf16.mxu0 0
  %2184 = vmatmul.mubr.bf16.gmra.mrb[0].mxu0 %v1903
  %v2185 = vpop.f32.mrb[0].mxu0
  %v2186 = vadd.f32 0.0, %v2185
  %v2187 = vpop.f32.mrb[0].mxu0
  %v2188 = vpop.f32.mrb[0].mxu0
  %v2189 = vadd.f32 0.0, %v2188
  %v2190 = vpop.f32.mrb[0].mxu0
  %2191 = vmatprep.mubr.bf16.mxu0 0
  %2192 = vmatmul.mubr.bf16.gmra.mrb[0].mxu0 %v1906
  %v2193 = vpop.f32.mrb[0].mxu0
  %v2194 = vadd.f32 0.0, %v2193
  %v2195 = vpop.f32.mrb[0].mxu0
  %v2196 = vpop.f32.mrb[0].mxu0
  %v2197 = vadd.f32 0.0, %v2196
  %v2198 = vpop.f32.mrb[0].mxu0
  %2199 = vdwg.mxu0
  %v2200 = vpack.c.bf16 %v1949, %v1946
  %v2201 = vpack.c.bf16 %v1957, %v1954
  %v2202 = vpack.c.bf16 %v1965, %v1962
  %v2203 = vpack.c.bf16 %v1973, %v1970
  %v2204 = vpack.c.bf16 %v1981, %v1978
  %v2205 = vpack.c.bf16 %v1989, %v1986
  %v2206 = vpack.c.bf16 %v1997, %v1994
  %v2207 = vpack.c.bf16 %v2005, %v2002
  %v2208 = vpack.c.bf16 %v2013, %v2010
  %v2209 = vpack.c.bf16 %v2021, %v2018
  %v2210 = vpack.c.bf16 %v2029, %v2026
  %v2211 = vpack.c.bf16 %v2037, %v2034
  %v2212 = vpack.c.bf16 %v2045, %v2042
  %v2213 = vpack.c.bf16 %v2053, %v2050
  %v2214 = vpack.c.bf16 %v2061, %v2058
  %v2215 = vpack.c.bf16 %v2069, %v2066
  %v2216 = vpack.c.bf16 %v2077, %v2074
  %v2217 = vpack.c.bf16 %v2085, %v2082
  %v2218 = vpack.c.bf16 %v2093, %v2090
  %v2219 = vpack.c.bf16 %v2101, %v2098
  %v2220 = vpack.c.bf16 %v2109, %v2106
  %v2221 = vpack.c.bf16 %v2117, %v2114
  %v2222 = vpack.c.bf16 %v2125, %v2122
  %v2223 = vpack.c.bf16 %v2133, %v2130
  %v2224 = vpack.c.bf16 %v2141, %v2138
  %v2225 = vpack.c.bf16 %v2149, %v2146
  %v2226 = vpack.c.bf16 %v2157, %v2154
  %v2227 = vpack.c.bf16 %v2165, %v2162
  %v2228 = vpack.c.bf16 %v2173, %v2170
  %v2229 = vpack.c.bf16 %v2181, %v2178
  %v2230 = vpack.c.bf16 %v2189, %v2186
  %v2231 = vpack.c.bf16 %v2197, %v2194
  %v2232 = vld [vmem:[%s18] sm:$0xf]
  %v2233 = vld [vmem:[%s18 + $0x4] sm:$0xf]
  %v2234 = vld [vmem:[%s18 + $0x8] sm:$0xf]
  %v2235 = vld [vmem:[%s18 + $0xc] sm:$0xf]
  %v2236 = vld [vmem:[%s18 + $0x10] sm:$0xf]
  %v2237 = vld [vmem:[%s18 + $0x14] sm:$0xf]
  %v2238 = vld [vmem:[%s18 + $0x18] sm:$0xf]
  %v2239 = vld [vmem:[%s18 + $0x1c] sm:$0xf]
  %v2240 = vld [vmem:[%s18 + $0x20] sm:$0xf]
  %v2241 = vld [vmem:[%s18 + $0x24] sm:$0xf]
  %v2242 = vld [vmem:[%s18 + $0x28] sm:$0xf]
  %v2243 = vld [vmem:[%s18 + $0x2c] sm:$0xf]
  %v2244 = vld [vmem:[%s18 + $0x30] sm:$0xf]
  %v2245 = vld [vmem:[%s18 + $0x34] sm:$0xf]
  %v2246 = vld [vmem:[%s18 + $0x38] sm:$0xf]
  %v2247 = vld [vmem:[%s18 + $0x3c] sm:$0xf]
  %v2248 = vld [vmem:[%s19] sm:$0x1]
  %v2250 = vlaneseq
  %v2251 = vshrl.u32 %v2250, 7
  %v2252 = vsub.s32 0, %v2251
  %v2253 = vrot.slane %v2248, %v2252
  %v2271 = vunpack.c.l.b16 %v2232
  %v2272 = vunpack.c.l.b16 %v2233
  %v2273 = vunpack.c.l.b16 %v2234
  %v2274 = vunpack.c.l.b16 %v2235
  %v2275 = vunpack.c.l.b16 %v2236
  %v2276 = vunpack.c.l.b16 %v2237
  %v2277 = vunpack.c.l.b16 %v2238
  %v2278 = vunpack.c.l.b16 %v2239
  %v2279 = vunpack.c.l.b16 %v2240
  %v2280 = vunpack.c.l.b16 %v2241
  %v2281 = vunpack.c.l.b16 %v2242
  %v2282 = vunpack.c.l.b16 %v2243
  %v2283 = vunpack.c.l.b16 %v2244
  %v2284 = vunpack.c.l.b16 %v2245
  %v2285 = vunpack.c.l.b16 %v2246
  %v2286 = vunpack.c.l.b16 %v2247
  %v2287 = vpack.c.b16 %v2272, %v2271
  %v2288 = vpack.c.b16 %v2274, %v2273
  %v2289 = vpack.c.b16 %v2276, %v2275
  %v2290 = vpack.c.b16 %v2278, %v2277
  %v2291 = vpack.c.b16 %v2280, %v2279
  %v2292 = vpack.c.b16 %v2282, %v2281
  %v2293 = vpack.c.b16 %v2284, %v2283
  %v2294 = vpack.c.b16 %v2286, %v2285
  %2303 = vmatprep.subr.bf16.mxu0 0
  %2304 = vmatpush1.bf16.msra.mxu0 %v2287
  %2305 = vmatprep.subr.bf16.mxu0 0
  %2306 = vmatpush1.bf16.msra.mxu0 %v2288
  %2307 = vmatprep.subr.bf16.mxu0 0
  %2308 = vmatpush1.bf16.msra.mxu0 %v2289
  %2309 = vmatprep.subr.bf16.mxu0 0
  %2310 = vmatpush1.bf16.msra.mxu0 %v2290
  %2311 = vmatprep.subr.bf16.mxu0 0
  %2312 = vmatpush1.bf16.msra.mxu0 %v2291
  %2313 = vmatprep.subr.bf16.mxu0 0
  %2314 = vmatpush1.bf16.msra.mxu0 %v2292
  %2315 = vmatprep.subr.bf16.mxu0 0
  %2316 = vmatpush1.bf16.msra.mxu0 %v2293
  %2317 = vmatprep.subr.bf16.mxu0 0
  %2318 = vmatpush1.bf16.msra.mxu0 %v2294
  %2319 = vmatprep.subr.bf16.mxu0 0
  %2320 = vmatpush1.bf16.msra.mxu0 0
  %2321 = vmatprep.subr.bf16.mxu0 0
  %2322 = vmatpush1.bf16.msra.mxu0 0
  %2323 = vmatprep.subr.bf16.mxu0 0
  %2324 = vmatpush1.bf16.msra.mxu0 0
  %2325 = vmatprep.subr.bf16.mxu0 0
  %2326 = vmatpush1.bf16.msra.mxu0 0
  %2327 = vmatprep.subr.bf16.mxu0 0
  %2328 = vmatpush1.bf16.msra.mxu0 0
  %2329 = vmatprep.subr.bf16.mxu0 0
  %2330 = vmatpush1.bf16.msra.mxu0 0
  %2331 = vmatprep.subr.bf16.mxu0 0
  %2332 = vmatpush1.bf16.msra.mxu0 0
  %2333 = vmatprep.subr.bf16.mxu0 0
  %2334 = vmatpush1.bf16.msra.mxu0 0
  %2335 = vmatprep.mubr.bf16.mxu0 0
  %2336 = vmatmul.mubr.bf16.gmra.mrb[0].mxu0 %v2200
  %v2337 = vpop.f32.mrb[0].mxu0
  %v2338 = vadd.f32 %v2253, %v2337
  %v2339 = vpop.f32.mrb[0].mxu0
  %v2340 = vpop.f32.mrb[0].mxu0
  %v2341 = vadd.f32 %v2253, %v2340
  %v2342 = vpop.f32.mrb[0].mxu0
  %2343 = vmatprep.mubr.bf16.mxu0 0
  %2344 = vmatmul.mubr.bf16.gmra.mrb[0].mxu0 %v2201
  %v2345 = vpop.f32.mrb[0].mxu0
  %v2346 = vadd.f32 %v2253, %v2345
  %v2347 = vpop.f32.mrb[0].mxu0
  %v2348 = vpop.f32.mrb[0].mxu0
  %v2349 = vadd.f32 %v2253, %v2348
  %v2350 = vpop.f32.mrb[0].mxu0
  %2351 = vmatprep.mubr.bf16.mxu0 0
  %2352 = vmatmul.mubr.bf16.gmra.mrb[0].mxu0 %v2202
  %v2353 = vpop.f32.mrb[0].mxu0
  %v2354 = vadd.f32 %v2253, %v2353
  %v2355 = vpop.f32.mrb[0].mxu0
  %v2356 = vpop.f32.mrb[0].mxu0
  %v2357 = vadd.f32 %v2253, %v2356
  %v2358 = vpop.f32.mrb[0].mxu0
  %2359 = vmatprep.mubr.bf16.mxu0 0
  %2360 = vmatmul.mubr.bf16.gmra.mrb[0].mxu0 %v2203
  %v2361 = vpop.f32.mrb[0].mxu0
  %v2362 = vadd.f32 %v2253, %v2361
  %v2363 = vpop.f32.mrb[0].mxu0
  %v2364 = vpop.f32.mrb[0].mxu0
  %v2365 = vadd.f32 %v2253, %v2364
  %v2366 = vpop.f32.mrb[0].mxu0
  %2367 = vmatprep.mubr.bf16.mxu0 0
  %2368 = vmatmul.mubr.bf16.gmra.mrb[0].mxu0 %v2204
  %v2369 = vpop.f32.mrb[0].mxu0
  %v2370 = vadd.f32 %v2253, %v2369
  %v2371 = vpop.f32.mrb[0].mxu0
  %v2372 = vpop.f32.mrb[0].mxu0
  %v2373 = vadd.f32 %v2253, %v2372
  %v2374 = vpop.f32.mrb[0].mxu0
  %2375 = vmatprep.mubr.bf16.mxu0 0
  %2376 = vmatmul.mubr.bf16.gmra.mrb[0].mxu0 %v2205
  %v2377 = vpop.f32.mrb[0].mxu0
  %v2378 = vadd.f32 %v2253, %v2377
  %v2379 = vpop.f32.mrb[0].mxu0
  %v2380 = vpop.f32.mrb[0].mxu0
  %v2381 = vadd.f32 %v2253, %v2380
  %v2382 = vpop.f32.mrb[0].mxu0
  %2383 = vmatprep.mubr.bf16.mxu0 0
  %2384 = vmatmul.mubr.bf16.gmra.mrb[0].mxu0 %v2206
  %v2385 = vpop.f32.mrb[0].mxu0
  %v2386 = vadd.f32 %v2253, %v2385
  %v2387 = vpop.f32.mrb[0].mxu0
  %v2388 = vpop.f32.mrb[0].mxu0
  %v2389 = vadd.f32 %v2253, %v2388
  %v2390 = vpop.f32.mrb[0].mxu0
  %2391 = vmatprep.mubr.bf16.mxu0 0
  %2392 = vmatmul.mubr.bf16.gmra.mrb[0].mxu0 %v2207
  %v2393 = vpop.f32.mrb[0].mxu0
  %v2394 = vadd.f32 %v2253, %v2393
  %v2395 = vpop.f32.mrb[0].mxu0
  %v2396 = vpop.f32.mrb[0].mxu0
  %v2397 = vadd.f32 %v2253, %v2396
  %v2398 = vpop.f32.mrb[0].mxu0
  %2399 = vmatprep.mubr.bf16.mxu0 0
  %2400 = vmatmul.mubr.bf16.gmra.mrb[0].mxu0 %v2208
  %v2401 = vpop.f32.mrb[0].mxu0
  %v2402 = vadd.f32 %v2253, %v2401
  %v2403 = vpop.f32.mrb[0].mxu0
  %v2404 = vpop.f32.mrb[0].mxu0
  %v2405 = vadd.f32 %v2253, %v2404
  %v2406 = vpop.f32.mrb[0].mxu0
  %2407 = vmatprep.mubr.bf16.mxu0 0
  %2408 = vmatmul.mubr.bf16.gmra.mrb[0].mxu0 %v2209
  %v2409 = vpop.f32.mrb[0].mxu0
  %v2410 = vadd.f32 %v2253, %v2409
  %v2411 = vpop.f32.mrb[0].mxu0
  %v2412 = vpop.f32.mrb[0].mxu0
  %v2413 = vadd.f32 %v2253, %v2412
  %v2414 = vpop.f32.mrb[0].mxu0
  %2415 = vmatprep.mubr.bf16.mxu0 0
  %2416 = vmatmul.mubr.bf16.gmra.mrb[0].mxu0 %v2210
  %v2417 = vpop.f32.mrb[0].mxu0
  %v2418 = vadd.f32 %v2253, %v2417
  %v2419 = vpop.f32.mrb[0].mxu0
  %v2420 = vpop.f32.mrb[0].mxu0
  %v2421 = vadd.f32 %v2253, %v2420
  %v2422 = vpop.f32.mrb[0].mxu0
  %2423 = vmatprep.mubr.bf16.mxu0 0
  %2424 = vmatmul.mubr.bf16.gmra.mrb[0].mxu0 %v2211
  %v2425 = vpop.f32.mrb[0].mxu0
  %v2426 = vadd.f32 %v2253, %v2425
  %v2427 = vpop.f32.mrb[0].mxu0
  %v2428 = vpop.f32.mrb[0].mxu0
  %v2429 = vadd.f32 %v2253, %v2428
  %v2430 = vpop.f32.mrb[0].mxu0
  %2431 = vmatprep.mubr.bf16.mxu0 0
  %2432 = vmatmul.mubr.bf16.gmra.mrb[0].mxu0 %v2212
  %v2433 = vpop.f32.mrb[0].mxu0
  %v2434 = vadd.f32 %v2253, %v2433
  %v2435 = vpop.f32.mrb[0].mxu0
  %v2436 = vpop.f32.mrb[0].mxu0
  %v2437 = vadd.f32 %v2253, %v2436
  %v2438 = vpop.f32.mrb[0].mxu0
  %2439 = vmatprep.mubr.bf16.mxu0 0
  %2440 = vmatmul.mubr.bf16.gmra.mrb[0].mxu0 %v2213
  %v2441 = vpop.f32.mrb[0].mxu0
  %v2442 = vadd.f32 %v2253, %v2441
  %v2443 = vpop.f32.mrb[0].mxu0
  %v2444 = vpop.f32.mrb[0].mxu0
  %v2445 = vadd.f32 %v2253, %v2444
  %v2446 = vpop.f32.mrb[0].mxu0
  %2447 = vmatprep.mubr.bf16.mxu0 0
  %2448 = vmatmul.mubr.bf16.gmra.mrb[0].mxu0 %v2214
  %v2449 = vpop.f32.mrb[0].mxu0
  %v2450 = vadd.f32 %v2253, %v2449
  %v2451 = vpop.f32.mrb[0].mxu0
  %v2452 = vpop.f32.mrb[0].mxu0
  %v2453 = vadd.f32 %v2253, %v2452
  %v2454 = vpop.f32.mrb[0].mxu0
  %2455 = vmatprep.mubr.bf16.mxu0 0
  %2456 = vmatmul.mubr.bf16.gmra.mrb[0].mxu0 %v2215
  %v2457 = vpop.f32.mrb[0].mxu0
  %v2458 = vadd.f32 %v2253, %v2457
  %v2459 = vpop.f32.mrb[0].mxu0
  %v2460 = vpop.f32.mrb[0].mxu0
  %v2461 = vadd.f32 %v2253, %v2460
  %v2462 = vpop.f32.mrb[0].mxu0
  %2463 = vmatprep.mubr.bf16.mxu0 0
  %2464 = vmatmul.mubr.bf16.gmra.mrb[0].mxu0 %v2216
  %v2465 = vpop.f32.mrb[0].mxu0
  %v2466 = vadd.f32 %v2253, %v2465
  %v2467 = vpop.f32.mrb[0].mxu0
  %v2468 = vpop.f32.mrb[0].mxu0
  %v2469 = vadd.f32 %v2253, %v2468
  %v2470 = vpop.f32.mrb[0].mxu0
  %2471 = vmatprep.mubr.bf16.mxu0 0
  %2472 = vmatmul.mubr.bf16.gmra.mrb[0].mxu0 %v2217
  %v2473 = vpop.f32.mrb[0].mxu0
  %v2474 = vadd.f32 %v2253, %v2473
  %v2475 = vpop.f32.mrb[0].mxu0
  %v2476 = vpop.f32.mrb[0].mxu0
  %v2477 = vadd.f32 %v2253, %v2476
  %v2478 = vpop.f32.mrb[0].mxu0
  %2479 = vmatprep.mubr.bf16.mxu0 0
  %2480 = vmatmul.mubr.bf16.gmra.mrb[0].mxu0 %v2218
  %v2481 = vpop.f32.mrb[0].mxu0
  %v2482 = vadd.f32 %v2253, %v2481
  %v2483 = vpop.f32.mrb[0].mxu0
  %v2484 = vpop.f32.mrb[0].mxu0
  %v2485 = vadd.f32 %v2253, %v2484
  %v2486 = vpop.f32.mrb[0].mxu0
  %2487 = vmatprep.mubr.bf16.mxu0 0
  %2488 = vmatmul.mubr.bf16.gmra.mrb[0].mxu0 %v2219
  %v2489 = vpop.f32.mrb[0].mxu0
  %v2490 = vadd.f32 %v2253, %v2489
  %v2491 = vpop.f32.mrb[0].mxu0
  %v2492 = vpop.f32.mrb[0].mxu0
  %v2493 = vadd.f32 %v2253, %v2492
  %v2494 = vpop.f32.mrb[0].mxu0
  %2495 = vmatprep.mubr.bf16.mxu0 0
  %2496 = vmatmul.mubr.bf16.gmra.mrb[0].mxu0 %v2220
  %v2497 = vpop.f32.mrb[0].mxu0
  %v2498 = vadd.f32 %v2253, %v2497
  %v2499 = vpop.f32.mrb[0].mxu0
  %v2500 = vpop.f32.mrb[0].mxu0
  %v2501 = vadd.f32 %v2253, %v2500
  %v2502 = vpop.f32.mrb[0].mxu0
  %2503 = vmatprep.mubr.bf16.mxu0 0
  %2504 = vmatmul.mubr.bf16.gmra.mrb[0].mxu0 %v2221
  %v2505 = vpop.f32.mrb[0].mxu0
  %v2506 = vadd.f32 %v2253, %v2505
  %v2507 = vpop.f32.mrb[0].mxu0
  %v2508 = vpop.f32.mrb[0].mxu0
  %v2509 = vadd.f32 %v2253, %v2508
  %v2510 = vpop.f32.mrb[0].mxu0
  %2511 = vmatprep.mubr.bf16.mxu0 0
  %2512 = vmatmul.mubr.bf16.gmra.mrb[0].mxu0 %v2222
  %v2513 = vpop.f32.mrb[0].mxu0
  %v2514 = vadd.f32 %v2253, %v2513
  %v2515 = vpop.f32.mrb[0].mxu0
  %v2516 = vpop.f32.mrb[0].mxu0
  %v2517 = vadd.f32 %v2253, %v2516
  %v2518 = vpop.f32.mrb[0].mxu0
  %2519 = vmatprep.mubr.bf16.mxu0 0
  %2520 = vmatmul.mubr.bf16.gmra.mrb[0].mxu0 %v2223
  %v2521 = vpop.f32.mrb[0].mxu0
  %v2522 = vadd.f32 %v2253, %v2521
  %v2523 = vpop.f32.mrb[0].mxu0
  %v2524 = vpop.f32.mrb[0].mxu0
  %v2525 = vadd.f32 %v2253, %v2524
  %v2526 = vpop.f32.mrb[0].mxu0
  %2527 = vmatprep.mubr.bf16.mxu0 0
  %2528 = vmatmul.mubr.bf16.gmra.mrb[0].mxu0 %v2224
  %v2529 = vpop.f32.mrb[0].mxu0
  %v2530 = vadd.f32 %v2253, %v2529
  %v2531 = vpop.f32.mrb[0].mxu0
  %v2532 = vpop.f32.mrb[0].mxu0
  %v2533 = vadd.f32 %v2253, %v2532
  %v2534 = vpop.f32.mrb[0].mxu0
  %2535 = vmatprep.mubr.bf16.mxu0 0
  %2536 = vmatmul.mubr.bf16.gmra.mrb[0].mxu0 %v2225
  %v2537 = vpop.f32.mrb[0].mxu0
  %v2538 = vadd.f32 %v2253, %v2537
  %v2539 = vpop.f32.mrb[0].mxu0
  %v2540 = vpop.f32.mrb[0].mxu0
  %v2541 = vadd.f32 %v2253, %v2540
  %v2542 = vpop.f32.mrb[0].mxu0
  %2543 = vmatprep.mubr.bf16.mxu0 0
  %2544 = vmatmul.mubr.bf16.gmra.mrb[0].mxu0 %v2226
  %v2545 = vpop.f32.mrb[0].mxu0
  %v2546 = vadd.f32 %v2253, %v2545
  %v2547 = vpop.f32.mrb[0].mxu0
  %v2548 = vpop.f32.mrb[0].mxu0
  %v2549 = vadd.f32 %v2253, %v2548
  %v2550 = vpop.f32.mrb[0].mxu0
  %2551 = vmatprep.mubr.bf16.mxu0 0
  %2552 = vmatmul.mubr.bf16.gmra.mrb[0].mxu0 %v2227
  %v2553 = vpop.f32.mrb[0].mxu0
  %v2554 = vadd.f32 %v2253, %v2553
  %v2555 = vpop.f32.mrb[0].mxu0
  %v2556 = vpop.f32.mrb[0].mxu0
  %v2557 = vadd.f32 %v2253, %v2556
  %v2558 = vpop.f32.mrb[0].mxu0
  %2559 = vmatprep.mubr.bf16.mxu0 0
  %2560 = vmatmul.mubr.bf16.gmra.mrb[0].mxu0 %v2228
  %v2561 = vpop.f32.mrb[0].mxu0
  %v2562 = vadd.f32 %v2253, %v2561
  %v2563 = vpop.f32.mrb[0].mxu0
  %v2564 = vpop.f32.mrb[0].mxu0
  %v2565 = vadd.f32 %v2253, %v2564
  %v2566 = vpop.f32.mrb[0].mxu0
  %2567 = vmatprep.mubr.bf16.mxu0 0
  %2568 = vmatmul.mubr.bf16.gmra.mrb[0].mxu0 %v2229
  %v2569 = vpop.f32.mrb[0].mxu0
  %v2570 = vadd.f32 %v2253, %v2569
  %v2571 = vpop.f32.mrb[0].mxu0
  %v2572 = vpop.f32.mrb[0].mxu0
  %v2573 = vadd.f32 %v2253, %v2572
  %v2574 = vpop.f32.mrb[0].mxu0
  %2575 = vmatprep.mubr.bf16.mxu0 0
  %2576 = vmatmul.mubr.bf16.gmra.mrb[0].mxu0 %v2230
  %v2577 = vpop.f32.mrb[0].mxu0
  %v2578 = vadd.f32 %v2253, %v2577
  %v2579 = vpop.f32.mrb[0].mxu0
  %v2580 = vpop.f32.mrb[0].mxu0
  %v2581 = vadd.f32 %v2253, %v2580
  %v2582 = vpop.f32.mrb[0].mxu0
  %2583 = vmatprep.mubr.bf16.mxu0 0
  %2584 = vmatmul.mubr.bf16.gmra.mrb[0].mxu0 %v2231
  %v2585 = vpop.f32.mrb[0].mxu0
  %v2586 = vadd.f32 %v2253, %v2585
  %v2587 = vpop.f32.mrb[0].mxu0
  %v2588 = vpop.f32.mrb[0].mxu0
  %v2589 = vadd.f32 %v2253, %v2588
  %v2590 = vpop.f32.mrb[0].mxu0
  %2591 = vdwg.mxu0
  %v2592 = vadd.f32 %v538, %v2338
  %v2593 = vadd.f32 %v541, %v2341
  %v2594 = vadd.f32 %v546, %v2346
  %v2595 = vadd.f32 %v549, %v2349
  %v2596 = vadd.f32 %v554, %v2354
  %v2597 = vadd.f32 %v557, %v2357
  %v2598 = vadd.f32 %v562, %v2362
  %v2599 = vadd.f32 %v565, %v2365
  %v2600 = vadd.f32 %v570, %v2370
  %v2601 = vadd.f32 %v573, %v2373
  %v2602 = vadd.f32 %v578, %v2378
  %v2603 = vadd.f32 %v581, %v2381
  %v2604 = vadd.f32 %v586, %v2386
  %v2605 = vadd.f32 %v589, %v2389
  %v2606 = vadd.f32 %v594, %v2394
  %v2607 = vadd.f32 %v597, %v2397
  %v2608 = vadd.f32 %v602, %v2402
  %v2609 = vadd.f32 %v605, %v2405
  %v2610 = vadd.f32 %v610, %v2410
  %v2611 = vadd.f32 %v613, %v2413
  %v2612 = vadd.f32 %v618, %v2418
  %v2613 = vadd.f32 %v621, %v2421
  %v2614 = vadd.f32 %v626, %v2426
  %v2615 = vadd.f32 %v629, %v2429
  %v2616 = vadd.f32 %v634, %v2434
  %v2617 = vadd.f32 %v637, %v2437
  %v2618 = vadd.f32 %v642, %v2442
  %v2619 = vadd.f32 %v645, %v2445
  %v2620 = vadd.f32 %v650, %v2450
  %v2621 = vadd.f32 %v653, %v2453
  %v2622 = vadd.f32 %v658, %v2458
  %v2623 = vadd.f32 %v661, %v2461
  %v2624 = vadd.f32 %v788, %v2466
  %v2625 = vadd.f32 %v791, %v2469
  %v2626 = vadd.f32 %v796, %v2474
  %v2627 = vadd.f32 %v799, %v2477
  %v2628 = vadd.f32 %v804, %v2482
  %v2629 = vadd.f32 %v807, %v2485
  %v2630 = vadd.f32 %v812, %v2490
  %v2631 = vadd.f32 %v815, %v2493
  %v2632 = vadd.f32 %v820, %v2498
  %v2633 = vadd.f32 %v823, %v2501
  %v2634 = vadd.f32 %v828, %v2506
  %v2635 = vadd.f32 %v831, %v2509
  %v2636 = vadd.f32 %v836, %v2514
  %v2637 = vadd.f32 %v839, %v2517
  %v2638 = vadd.f32 %v844, %v2522
  %v2639 = vadd.f32 %v847, %v2525
  %v2640 = vadd.f32 %v852, %v2530
  %v2641 = vadd.f32 %v855, %v2533
  %v2642 = vadd.f32 %v860, %v2538
  %v2643 = vadd.f32 %v863, %v2541
  %v2644 = vadd.f32 %v868, %v2546
  %v2645 = vadd.f32 %v871, %v2549
  %v2646 = vadd.f32 %v876, %v2554
  %v2647 = vadd.f32 %v879, %v2557
  %v2648 = vadd.f32 %v884, %v2562
  %v2649 = vadd.f32 %v887, %v2565
  %v2650 = vadd.f32 %v892, %v2570
  %v2651 = vadd.f32 %v895, %v2573
  %v2652 = vadd.f32 %v900, %v2578
  %v2653 = vadd.f32 %v903, %v2581
  %v2654 = vadd.f32 %v908, %v2586
  %v2655 = vadd.f32 %v911, %v2589
  %v2656 = vld [vmem:[%s20] sm:$0xf]
  %v2657 = vpack.c.bf16 %v2593, %v2592
  %v2658 = vpack.c.bf16 %v2595, %v2594
  %v2659 = vpack.c.bf16 %v2597, %v2596
  %v2660 = vpack.c.bf16 %v2599, %v2598
  %v2661 = vpack.c.bf16 %v2601, %v2600
  %v2662 = vpack.c.bf16 %v2603, %v2602
  %v2663 = vpack.c.bf16 %v2605, %v2604
  %v2664 = vpack.c.bf16 %v2607, %v2606
  %v2665 = vpack.c.bf16 %v2609, %v2608
  %v2666 = vpack.c.bf16 %v2611, %v2610
  %v2667 = vpack.c.bf16 %v2613, %v2612
  %v2668 = vpack.c.bf16 %v2615, %v2614
  %v2669 = vpack.c.bf16 %v2617, %v2616
  %v2670 = vpack.c.bf16 %v2619, %v2618
  %v2671 = vpack.c.bf16 %v2621, %v2620
  %v2672 = vpack.c.bf16 %v2623, %v2622
  %v2673 = vpack.c.bf16 %v2625, %v2624
  %v2674 = vpack.c.bf16 %v2627, %v2626
  %v2675 = vpack.c.bf16 %v2629, %v2628
  %v2676 = vpack.c.bf16 %v2631, %v2630
  %v2677 = vpack.c.bf16 %v2633, %v2632
  %v2678 = vpack.c.bf16 %v2635, %v2634
  %v2679 = vpack.c.bf16 %v2637, %v2636
  %v2680 = vpack.c.bf16 %v2639, %v2638
  %v2681 = vpack.c.bf16 %v2641, %v2640
  %v2682 = vpack.c.bf16 %v2643, %v2642
  %v2683 = vpack.c.bf16 %v2645, %v2644
  %v2684 = vpack.c.bf16 %v2647, %v2646
  %v2685 = vpack.c.bf16 %v2649, %v2648
  %v2686 = vpack.c.bf16 %v2651, %v2650
  %v2687 = vpack.c.bf16 %v2653, %v2652
  %v2688 = vpack.c.bf16 %v2655, %v2654
  %v2689 = vld [vmem:[%s21] sm:$0xff]
  %2691 = vset.pattern.permute.xlu0 0
  %2692 = vperm.xlu0 %2691, %v2689
  %v2693 = vpop.permute.xlu0 %2692
  %2695 = vmatprep.subr.bf16.mxu0 0
  %2696 = vmatpush1.bf16.xpose.msra.mxu0 %v2657
  %2697 = vmatprep.subr.bf16.mxu0 0
  %2698 = vmatpush1.bf16.xpose.msra.mxu0 %v2658
  %2699 = vmatprep.subr.bf16.mxu0 0
  %2700 = vmatpush1.bf16.xpose.msra.mxu0 %v2659
  %2701 = vmatprep.subr.bf16.mxu0 0
  %2702 = vmatpush1.bf16.xpose.msra.mxu0 %v2660
  %2703 = vmatprep.subr.bf16.mxu0 0
  %2704 = vmatpush1.bf16.xpose.msra.mxu0 %v2661
  %2705 = vmatprep.subr.bf16.mxu0 0
  %2706 = vmatpush1.bf16.xpose.msra.mxu0 %v2662
  %2707 = vmatprep.subr.bf16.mxu0 0
  %2708 = vmatpush1.bf16.xpose.msra.mxu0 %v2663
  %2709 = vmatprep.subr.bf16.mxu0 0
  %2710 = vmatpush1.bf16.xpose.msra.mxu0 %v2664
  %2711 = vmatprep.subr.bf16.mxu0 0
  %2712 = vmatpush1.bf16.xpose.msra.mxu0 %v2665
  %2713 = vmatprep.subr.bf16.mxu0 0
  %2714 = vmatpush1.bf16.xpose.msra.mxu0 %v2666
  %2715 = vmatprep.subr.bf16.mxu0 0
  %2716 = vmatpush1.bf16.xpose.msra.mxu0 %v2667
  %2717 = vmatprep.subr.bf16.mxu0 0
  %2718 = vmatpush1.bf16.xpose.msra.mxu0 %v2668
  %2719 = vmatprep.subr.bf16.mxu0 0
  %2720 = vmatpush1.bf16.xpose.msra.mxu0 %v2669
  %2721 = vmatprep.subr.bf16.mxu0 0
  %2722 = vmatpush1.bf16.xpose.msra.mxu0 %v2670
  %2723 = vmatprep.subr.bf16.mxu0 0
  %2724 = vmatpush1.bf16.xpose.msra.mxu0 %v2671
  %2725 = vmatprep.subr.bf16.mxu0 0
  %2726 = vmatpush1.bf16.xpose.msra.mxu0 %v2672
  %2727 = vmatprep.mubr.bf16.mxu0 0
  %2728 = vmatmul.mubr.bf16.gmra.mrb[0].mxu0 %v2656
  %v2729 = vpop.f32.mrb[0].mxu0
  %v2730 = vadd.f32 %v2693, %v2729
  %v2731 = vpop.f32.mrb[0].mxu0
  %v2732 = vadd.f32 %v2693, %v2731
  %v2733 = vpop.f32.mrb[0].mxu0
  %v2734 = vpop.f32.mrb[0].mxu0
  %2735 = vdwg.mxu0
  %2736 = vmatprep.subr.bf16.mxu0 0
  %2737 = vmatpush1.bf16.xpose.msra.mxu0 %v2673
  %2738 = vmatprep.subr.bf16.mxu0 0
  %2739 = vmatpush1.bf16.xpose.msra.mxu0 %v2674
  %2740 = vmatprep.subr.bf16.mxu0 0
  %2741 = vmatpush1.bf16.xpose.msra.mxu0 %v2675
  %2742 = vmatprep.subr.bf16.mxu0 0
  %2743 = vmatpush1.bf16.xpose.msra.mxu0 %v2676
  %2744 = vmatprep.subr.bf16.mxu0 0
  %2745 = vmatpush1.bf16.xpose.msra.mxu0 %v2677
  %2746 = vmatprep.subr.bf16.mxu0 0
  %2747 = vmatpush1.bf16.xpose.msra.mxu0 %v2678
  %2748 = vmatprep.subr.bf16.mxu0 0
  %2749 = vmatpush1.bf16.xpose.msra.mxu0 %v2679
  %2750 = vmatprep.subr.bf16.mxu0 0
  %2751 = vmatpush1.bf16.xpose.msra.mxu0 %v2680
  %2752 = vmatprep.subr.bf16.mxu0 0
  %2753 = vmatpush1.bf16.xpose.msra.mxu0 %v2681
  %2754 = vmatprep.subr.bf16.mxu0 0
  %2755 = vmatpush1.bf16.xpose.msra.mxu0 %v2682
  %2756 = vmatprep.subr.bf16.mxu0 0
  %2757 = vmatpush1.bf16.xpose.msra.mxu0 %v2683
  %2758 = vmatprep.subr.bf16.mxu0 0
  %2759 = vmatpush1.bf16.xpose.msra.mxu0 %v2684
  %2760 = vmatprep.subr.bf16.mxu0 0
  %2761 = vmatpush1.bf16.xpose.msra.mxu0 %v2685
  %2762 = vmatprep.subr.bf16.mxu0 0
  %2763 = vmatpush1.bf16.xpose.msra.mxu0 %v2686
  %2764 = vmatprep.subr.bf16.mxu0 0
  %2765 = vmatpush1.bf16.xpose.msra.mxu0 %v2687
  %2766 = vmatprep.subr.bf16.mxu0 0
  %2767 = vmatpush1.bf16.xpose.msra.mxu0 %v2688
  %2768 = vmatprep.mubr.bf16.mxu0 0
  %2769 = vmatmul.mubr.bf16.gmra.mrb[0].mxu0 %v2656
  %v2770 = vpop.f32.mrb[0].mxu0
  %v2771 = vadd.f32 %v2693, %v2770
  %v2772 = vpop.f32.mrb[0].mxu0
  %v2773 = vadd.f32 %v2693, %v2772
  %v2774 = vpop.f32.mrb[0].mxu0
  %v2775 = vpop.f32.mrb[0].mxu0
  %2776 = vdwg.mxu0
  %2777 = vst [vmem:[%s22] sm:$0xff] %v2730
  %2778 = vst [vmem:[%s22 + $0x8] sm:$0xff] %v2732
  %s2779 = scalar_lea.vmem %s22, 16
  %2780 = vst [vmem:[%s2779] sm:$0xff] %v2771
  %2781 = vst [vmem:[%s2779 + $0x8] sm:$0xff] %v2773
  // Predicated region
  $region90: #{wplus_adapter_forward.1} parent=0 // pred_check
    _
  $region91: #{wplus_adapter_forward.1} parent=0 // pred_check_branch
    %2783 = sbr.rel (0) target = $region93
  $region92: #{wplus_adapter_forward.1} parent=0 // pred_region
    _
  $region93: #{wplus_adapter_forward.1} parent=0 // pred_fallthru
    _
  // Predicated region
  $region94: #{wplus_adapter_forward.1} parent=0 // pred_check
    _
  $region95: #{wplus_adapter_forward.1} parent=0 // pred_check_branch
    %2785 = sbr.rel (0) target = $region97
  $region96: #{wplus_adapter_forward.1} parent=0 // pred_region
    _
  $region97: #{wplus_adapter_forward.1} parent=0 // pred_fallthru
    _

</llo_original>
